<compile_context>
chip_gen: v6e
topology: v6e:2x2x1
jax: 0.10.0
libtpu: 0.0.40
codegen_flags: <defaults>
</compile_context>

<pallas_src>
import jax
import jax.numpy as jnp
import numpy as np
from jax import lax
from jax.experimental import pallas as pl
from jax.experimental.pallas import tpu as pltpu

C_IN, C_OUT, K = 3, 3, 3
D_IN, H_IN, W_IN = 10, 10, 10
D1, H1, W1 = D_IN - K + 1, H_IN - K + 1, W_IN - K + 1      # 8, 8, 8
D2, H2, W2 = D1 - K + 1, H1 - K + 1, W1 - K + 1            # 6, 6, 6

LANES = 128
ROW_STRIDE = W_IN            # flattened-lane row stride: lane p = h*W_IN + w
HW = H_IN * W_IN             # 100 valid lanes


def _lane_shift(t, s):
    """result[..., p] = t[..., (p + s) % 128]  (s static, 0 <= s < 128)."""
    if s == 0:
        return t
    return pltpu.roll(t, LANES - s, axis=t.ndim - 1)


def _conv_layer(src_ch, n_rows_out, w_ref, b_ref, apply_relu):
    """One VALID 3x3x3 conv in the flattened (rows=D, lanes=h*10+w) layout.

    src_ch: list of C_IN float32 arrays, each (n_rows_in, 128).
    Returns list of C_OUT float32 arrays, each (n_rows_out, 128).
    """
    n_w = C_OUT * C_IN * K * K * K
    # Hoist all scalar weight reads (SMEM) ahead of the vector chain.
    wv = [w_ref[i] for i in range(n_w)]
    # kd windows, sliced once per (c, kd): the only sublane-dim shift.
    win = [[src_ch[c][kd:kd + n_rows_out, :] for kd in range(K)]
           for c in range(C_IN)]
    # Independent partial accumulators per (o, c) -> 9 parallel add chains.
    acc = [[None] * C_IN for _ in range(C_OUT)]
    for kh in range(K):
        for kw in range(K):
            s = kh * ROW_STRIDE + kw                  # lane shift for this tap
            for c in range(C_IN):
                for kd in range(K):
                    ts = _lane_shift(win[c][kd], s)   # reused by all 3 outputs
                    for o in range(C_OUT):
                        widx = (((o * C_IN + c) * K + kd) * K + kh) * K + kw
                        term = wv[widx] * ts
                        acc[o][c] = term if acc[o][c] is None else acc[o][c] + term
    outs = []
    for o in range(C_OUT):
        a = (acc[o][0] + acc[o][1]) + acc[o][2] + b_ref[o]
        if apply_relu:
            a = jnp.maximum(a, 0.0)
        outs.append(a)
    return outs


def fused_kernel(x_ref, w1_ref, b1_ref, w2_ref, b2_ref, out_ref):
    # x_ref: (3, 10, 128) VMEM, lane p = h*10 + w (valid for p < 100).
    x_ch = [x_ref[c] for c in range(C_IN)]                           # (10,128)*3
    # conv1 + dropout(eval: identity) + relu  (intermediate stays in vregs)
    mid = _conv_layer(x_ch, D1, w1_ref, b1_ref, apply_relu=True)     # (8,128)*3
    # conv2
    out = _conv_layer(mid, D2, w2_ref, b2_ref, apply_relu=False)     # (6,128)*3
    for o in range(C_OUT):
        out_ref[o] = out[o]


def model_forward(x, w1, b1, w2, b2):
    """x: (1, 3, 10, 10, 10) f32, weights in PyTorch OIDHW layout."""
    xs = x[0].reshape(C_IN, D_IN, HW)                        # (3, 10, 100)
    x_pad = jnp.pad(xs, ((0, 0), (0, 0), (0, LANES - HW)))   # (3, 10, 128)
    out_wide = pl.pallas_call(
        fused_kernel,
        out_shape=jax.ShapeDtypeStruct((C_OUT, D2, LANES), jnp.float32),
        in_specs=[
            pl.BlockSpec(memory_space=pltpu.MemorySpace.VMEM),   # x (lane-dense)
            pl.BlockSpec(memory_space=pltpu.MemorySpace.SMEM),   # w1 (flat)
            pl.BlockSpec(memory_space=pltpu.MemorySpace.SMEM),   # b1
            pl.BlockSpec(memory_space=pltpu.MemorySpace.SMEM),   # w2 (flat)
            pl.BlockSpec(memory_space=pltpu.MemorySpace.SMEM),   # b2
        ],
        out_specs=pl.BlockSpec(memory_space=pltpu.MemorySpace.VMEM),
    )(x_pad, w1.reshape(-1), b1, w2.reshape(-1), b2)
    # Valid output lanes: p = h*10 + w for h, w in [0, 6); compact in wrapper.
    out = out_wide[:, :, :H2 * W_IN].reshape(C_OUT, D2, H2, W_IN)[:, :, :, :W2]
    return out[None]                                         # (1, 3, 6, 6, 6)


def reference_forward(x, w1, b1, w2, b2):
    """Pure-JAX reference (NCDHW / OIDHW, VALID conv)."""
    dn = ("NCDHW", "OIDHW", "NCDHW")
    y = lax.conv_general_dilated(x, w1, window_strides=(1, 1, 1),
                                 padding="VALID", dimension_numbers=dn)
    y = y + b1[None, :, None, None, None]
    y = jnp.maximum(y, 0.0)                      # dropout (eval) is identity
    y = lax.conv_general_dilated(y, w2, window_strides=(1, 1, 1),
                                 padding="VALID", dimension_numbers=dn)
    y = y + b2[None, :, None, None, None]
    return y


def init_params(key):
    """Deterministic Conv3d-style init: U(-1/sqrt(fan_in), 1/sqrt(fan_in))."""
    fan_in = C_IN * K * K * K
    bound = 1.0 / np.sqrt(fan_in)
    k1, k2, k3, k4 = jax.random.split(key, 4)
    w1 = jax.random.uniform(k1, (C_OUT, C_IN, K, K, K), jnp.float32, -bound, bound)
    b1 = jax.random.uniform(k2, (C_OUT,), jnp.float32, -bound, bound)
    w2 = jax.random.uniform(k3, (C_OUT, C_IN, K, K, K), jnp.float32, -bound, bound)
    b2 = jax.random.uniform(k4, (C_OUT,), jnp.float32, -bound, bound)
    return w1, b1, w2, b2


if __name__ == "__main__":
    key = jax.random.PRNGKey(0)
    kx, kp = jax.random.split(key)
    x = jax.random.normal(kx, (1, C_IN, D_IN, H_IN, W_IN), dtype=jnp.float32)
    w1, b1, w2, b2 = init_params(kp)

    out = model_forward(x, w1, b1, w2, b2)
    out = jax.block_until_ready(out)

    ref = reference_forward(x, w1, b1, w2, b2)
    np.testing.assert_allclose(np.asarray(out), np.asarray(ref),
                               rtol=1e-4, atol=1e-4)
    assert out.shape == (1, 3, 6, 6, 6)
    print("KERNEL_OK")
</pallas_src>

<mosaic_0001>
module attributes {stable_mosaic.version = 11 : i64} {
  func.func @fused_kernel(%arg0: memref<3x10x128xf32, #tpu.memory_space<vmem>>, %arg1: memref<243xf32, #tpu.memory_space<smem>>, %arg2: memref<3xf32, #tpu.memory_space<smem>>, %arg3: memref<243xf32, #tpu.memory_space<smem>>, %arg4: memref<3xf32, #tpu.memory_space<smem>>, %arg5: memref<3x6x128xf32, #tpu.memory_space<vmem>>) attributes {dimension_semantics = [], scalar_prefetch = 0 : i64, scratch_operands = 0 : i64, tpu.core_type = #tpu.core_type<tc>} {
    %c0 = arith.constant 0 : index
    %c0_0 = arith.constant 0 : index
    %c0_1 = arith.constant 0 : index
    %0 = vector.load %arg0[%c0, %c0_0, %c0_1] : memref<3x10x128xf32, #tpu.memory_space<vmem>>, vector<1x10x128xf32>
    %1 = vector.shape_cast %0 : vector<1x10x128xf32> to vector<10x128xf32>
    %c1 = arith.constant 1 : index
    %c0_2 = arith.constant 0 : index
    %c0_3 = arith.constant 0 : index
    %2 = vector.load %arg0[%c1, %c0_2, %c0_3] : memref<3x10x128xf32, #tpu.memory_space<vmem>>, vector<1x10x128xf32>
    %3 = vector.shape_cast %2 : vector<1x10x128xf32> to vector<10x128xf32>
    %c2 = arith.constant 2 : index
    %c0_4 = arith.constant 0 : index
    %c0_5 = arith.constant 0 : index
    %4 = vector.load %arg0[%c2, %c0_4, %c0_5] : memref<3x10x128xf32, #tpu.memory_space<vmem>>, vector<1x10x128xf32>
    %5 = vector.shape_cast %4 : vector<1x10x128xf32> to vector<10x128xf32>
    %c0_6 = arith.constant 0 : index
    %6 = memref.load %arg1[%c0_6] : memref<243xf32, #tpu.memory_space<smem>>
    %c1_7 = arith.constant 1 : index
    %7 = memref.load %arg1[%c1_7] : memref<243xf32, #tpu.memory_space<smem>>
    %c2_8 = arith.constant 2 : index
    %8 = memref.load %arg1[%c2_8] : memref<243xf32, #tpu.memory_space<smem>>
    %c3 = arith.constant 3 : index
    %9 = memref.load %arg1[%c3] : memref<243xf32, #tpu.memory_space<smem>>
    %c4 = arith.constant 4 : index
    %10 = memref.load %arg1[%c4] : memref<243xf32, #tpu.memory_space<smem>>
    %c5 = arith.constant 5 : index
    %11 = memref.load %arg1[%c5] : memref<243xf32, #tpu.memory_space<smem>>
    %c6 = arith.constant 6 : index
    %12 = memref.load %arg1[%c6] : memref<243xf32, #tpu.memory_space<smem>>
    %c7 = arith.constant 7 : index
    %13 = memref.load %arg1[%c7] : memref<243xf32, #tpu.memory_space<smem>>
    %c8 = arith.constant 8 : index
    %14 = memref.load %arg1[%c8] : memref<243xf32, #tpu.memory_space<smem>>
    %c9 = arith.constant 9 : index
    %15 = memref.load %arg1[%c9] : memref<243xf32, #tpu.memory_space<smem>>
    %c10 = arith.constant 10 : index
    %16 = memref.load %arg1[%c10] : memref<243xf32, #tpu.memory_space<smem>>
    %c11 = arith.constant 11 : index
    %17 = memref.load %arg1[%c11] : memref<243xf32, #tpu.memory_space<smem>>
    %c12 = arith.constant 12 : index
    %18 = memref.load %arg1[%c12] : memref<243xf32, #tpu.memory_space<smem>>
    %c13 = arith.constant 13 : index
    %19 = memref.load %arg1[%c13] : memref<243xf32, #tpu.memory_space<smem>>
    %c14 = arith.constant 14 : index
    %20 = memref.load %arg1[%c14] : memref<243xf32, #tpu.memory_space<smem>>
    %c15 = arith.constant 15 : index
    %21 = memref.load %arg1[%c15] : memref<243xf32, #tpu.memory_space<smem>>
    %c16 = arith.constant 16 : index
    %22 = memref.load %arg1[%c16] : memref<243xf32, #tpu.memory_space<smem>>
    %c17 = arith.constant 17 : index
    %23 = memref.load %arg1[%c17] : memref<243xf32, #tpu.memory_space<smem>>
    %c18 = arith.constant 18 : index
    %24 = memref.load %arg1[%c18] : memref<243xf32, #tpu.memory_space<smem>>
    %c19 = arith.constant 19 : index
    %25 = memref.load %arg1[%c19] : memref<243xf32, #tpu.memory_space<smem>>
    %c20 = arith.constant 20 : index
    %26 = memref.load %arg1[%c20] : memref<243xf32, #tpu.memory_space<smem>>
    %c21 = arith.constant 21 : index
    %27 = memref.load %arg1[%c21] : memref<243xf32, #tpu.memory_space<smem>>
    %c22 = arith.constant 22 : index
    %28 = memref.load %arg1[%c22] : memref<243xf32, #tpu.memory_space<smem>>
    %c23 = arith.constant 23 : index
    %29 = memref.load %arg1[%c23] : memref<243xf32, #tpu.memory_space<smem>>
    %c24 = arith.constant 24 : index
    %30 = memref.load %arg1[%c24] : memref<243xf32, #tpu.memory_space<smem>>
    %c25 = arith.constant 25 : index
    %31 = memref.load %arg1[%c25] : memref<243xf32, #tpu.memory_space<smem>>
    %c26 = arith.constant 26 : index
    %32 = memref.load %arg1[%c26] : memref<243xf32, #tpu.memory_space<smem>>
    %c27 = arith.constant 27 : index
    %33 = memref.load %arg1[%c27] : memref<243xf32, #tpu.memory_space<smem>>
    %c28 = arith.constant 28 : index
    %34 = memref.load %arg1[%c28] : memref<243xf32, #tpu.memory_space<smem>>
    %c29 = arith.constant 29 : index
    %35 = memref.load %arg1[%c29] : memref<243xf32, #tpu.memory_space<smem>>
    %c30 = arith.constant 30 : index
    %36 = memref.load %arg1[%c30] : memref<243xf32, #tpu.memory_space<smem>>
    %c31 = arith.constant 31 : index
    %37 = memref.load %arg1[%c31] : memref<243xf32, #tpu.memory_space<smem>>
    %c32 = arith.constant 32 : index
    %38 = memref.load %arg1[%c32] : memref<243xf32, #tpu.memory_space<smem>>
    %c33 = arith.constant 33 : index
    %39 = memref.load %arg1[%c33] : memref<243xf32, #tpu.memory_space<smem>>
    %c34 = arith.constant 34 : index
    %40 = memref.load %arg1[%c34] : memref<243xf32, #tpu.memory_space<smem>>
    %c35 = arith.constant 35 : index
    %41 = memref.load %arg1[%c35] : memref<243xf32, #tpu.memory_space<smem>>
    %c36 = arith.constant 36 : index
    %42 = memref.load %arg1[%c36] : memref<243xf32, #tpu.memory_space<smem>>
    %c37 = arith.constant 37 : index
    %43 = memref.load %arg1[%c37] : memref<243xf32, #tpu.memory_space<smem>>
    %c38 = arith.constant 38 : index
    %44 = memref.load %arg1[%c38] : memref<243xf32, #tpu.memory_space<smem>>
    %c39 = arith.constant 39 : index
    %45 = memref.load %arg1[%c39] : memref<243xf32, #tpu.memory_space<smem>>
    %c40 = arith.constant 40 : index
    %46 = memref.load %arg1[%c40] : memref<243xf32, #tpu.memory_space<smem>>
    %c41 = arith.constant 41 : index
    %47 = memref.load %arg1[%c41] : memref<243xf32, #tpu.memory_space<smem>>
    %c42 = arith.constant 42 : index
    %48 = memref.load %arg1[%c42] : memref<243xf32, #tpu.memory_space<smem>>
    %c43 = arith.constant 43 : index
    %49 = memref.load %arg1[%c43] : memref<243xf32, #tpu.memory_space<smem>>
    %c44 = arith.constant 44 : index
    %50 = memref.load %arg1[%c44] : memref<243xf32, #tpu.memory_space<smem>>
    %c45 = arith.constant 45 : index
    %51 = memref.load %arg1[%c45] : memref<243xf32, #tpu.memory_space<smem>>
    %c46 = arith.constant 46 : index
    %52 = memref.load %arg1[%c46] : memref<243xf32, #tpu.memory_space<smem>>
    %c47 = arith.constant 47 : index
    %53 = memref.load %arg1[%c47] : memref<243xf32, #tpu.memory_space<smem>>
    %c48 = arith.constant 48 : index
    %54 = memref.load %arg1[%c48] : memref<243xf32, #tpu.memory_space<smem>>
    %c49 = arith.constant 49 : index
    %55 = memref.load %arg1[%c49] : memref<243xf32, #tpu.memory_space<smem>>
    %c50 = arith.constant 50 : index
    %56 = memref.load %arg1[%c50] : memref<243xf32, #tpu.memory_space<smem>>
    %c51 = arith.constant 51 : index
    %57 = memref.load %arg1[%c51] : memref<243xf32, #tpu.memory_space<smem>>
    %c52 = arith.constant 52 : index
    %58 = memref.load %arg1[%c52] : memref<243xf32, #tpu.memory_space<smem>>
    %c53 = arith.constant 53 : index
    %59 = memref.load %arg1[%c53] : memref<243xf32, #tpu.memory_space<smem>>
    %c54 = arith.constant 54 : index
    %60 = memref.load %arg1[%c54] : memref<243xf32, #tpu.memory_space<smem>>
    %c55 = arith.constant 55 : index
    %61 = memref.load %arg1[%c55] : memref<243xf32, #tpu.memory_space<smem>>
    %c56 = arith.constant 56 : index
    %62 = memref.load %arg1[%c56] : memref<243xf32, #tpu.memory_space<smem>>
    %c57 = arith.constant 57 : index
    %63 = memref.load %arg1[%c57] : memref<243xf32, #tpu.memory_space<smem>>
    %c58 = arith.constant 58 : index
    %64 = memref.load %arg1[%c58] : memref<243xf32, #tpu.memory_space<smem>>
    %c59 = arith.constant 59 : index
    %65 = memref.load %arg1[%c59] : memref<243xf32, #tpu.memory_space<smem>>
    %c60 = arith.constant 60 : index
    %66 = memref.load %arg1[%c60] : memref<243xf32, #tpu.memory_space<smem>>
    %c61 = arith.constant 61 : index
    %67 = memref.load %arg1[%c61] : memref<243xf32, #tpu.memory_space<smem>>
    %c62 = arith.constant 62 : index
    %68 = memref.load %arg1[%c62] : memref<243xf32, #tpu.memory_space<smem>>
    %c63 = arith.constant 63 : index
    %69 = memref.load %arg1[%c63] : memref<243xf32, #tpu.memory_space<smem>>
    %c64 = arith.constant 64 : index
    %70 = memref.load %arg1[%c64] : memref<243xf32, #tpu.memory_space<smem>>
    %c65 = arith.constant 65 : index
    %71 = memref.load %arg1[%c65] : memref<243xf32, #tpu.memory_space<smem>>
    %c66 = arith.constant 66 : index
    %72 = memref.load %arg1[%c66] : memref<243xf32, #tpu.memory_space<smem>>
    %c67 = arith.constant 67 : index
    %73 = memref.load %arg1[%c67] : memref<243xf32, #tpu.memory_space<smem>>
    %c68 = arith.constant 68 : index
    %74 = memref.load %arg1[%c68] : memref<243xf32, #tpu.memory_space<smem>>
    %c69 = arith.constant 69 : index
    %75 = memref.load %arg1[%c69] : memref<243xf32, #tpu.memory_space<smem>>
    %c70 = arith.constant 70 : index
    %76 = memref.load %arg1[%c70] : memref<243xf32, #tpu.memory_space<smem>>
    %c71 = arith.constant 71 : index
    %77 = memref.load %arg1[%c71] : memref<243xf32, #tpu.memory_space<smem>>
    %c72 = arith.constant 72 : index
    %78 = memref.load %arg1[%c72] : memref<243xf32, #tpu.memory_space<smem>>
    %c73 = arith.constant 73 : index
    %79 = memref.load %arg1[%c73] : memref<243xf32, #tpu.memory_space<smem>>
    %c74 = arith.constant 74 : index
    %80 = memref.load %arg1[%c74] : memref<243xf32, #tpu.memory_space<smem>>
    %c75 = arith.constant 75 : index
    %81 = memref.load %arg1[%c75] : memref<243xf32, #tpu.memory_space<smem>>
    %c76 = arith.constant 76 : index
    %82 = memref.load %arg1[%c76] : memref<243xf32, #tpu.memory_space<smem>>
    %c77 = arith.constant 77 : index
    %83 = memref.load %arg1[%c77] : memref<243xf32, #tpu.memory_space<smem>>
    %c78 = arith.constant 78 : index
    %84 = memref.load %arg1[%c78] : memref<243xf32, #tpu.memory_space<smem>>
    %c79 = arith.constant 79 : index
    %85 = memref.load %arg1[%c79] : memref<243xf32, #tpu.memory_space<smem>>
    %c80 = arith.constant 80 : index
    %86 = memref.load %arg1[%c80] : memref<243xf32, #tpu.memory_space<smem>>
    %c81 = arith.constant 81 : index
    %87 = memref.load %arg1[%c81] : memref<243xf32, #tpu.memory_space<smem>>
    %c82 = arith.constant 82 : index
    %88 = memref.load %arg1[%c82] : memref<243xf32, #tpu.memory_space<smem>>
    %c83 = arith.constant 83 : index
    %89 = memref.load %arg1[%c83] : memref<243xf32, #tpu.memory_space<smem>>
    %c84 = arith.constant 84 : index
    %90 = memref.load %arg1[%c84] : memref<243xf32, #tpu.memory_space<smem>>
    %c85 = arith.constant 85 : index
    %91 = memref.load %arg1[%c85] : memref<243xf32, #tpu.memory_space<smem>>
    %c86 = arith.constant 86 : index
    %92 = memref.load %arg1[%c86] : memref<243xf32, #tpu.memory_space<smem>>
    %c87 = arith.constant 87 : index
    %93 = memref.load %arg1[%c87] : memref<243xf32, #tpu.memory_space<smem>>
    %c88 = arith.constant 88 : index
    %94 = memref.load %arg1[%c88] : memref<243xf32, #tpu.memory_space<smem>>
    %c89 = arith.constant 89 : index
    %95 = memref.load %arg1[%c89] : memref<243xf32, #tpu.memory_space<smem>>
    %c90 = arith.constant 90 : index
    %96 = memref.load %arg1[%c90] : memref<243xf32, #tpu.memory_space<smem>>
    %c91 = arith.constant 91 : index
    %97 = memref.load %arg1[%c91] : memref<243xf32, #tpu.memory_space<smem>>
    %c92 = arith.constant 92 : index
    %98 = memref.load %arg1[%c92] : memref<243xf32, #tpu.memory_space<smem>>
    %c93 = arith.constant 93 : index
    %99 = memref.load %arg1[%c93] : memref<243xf32, #tpu.memory_space<smem>>
    %c94 = arith.constant 94 : index
    %100 = memref.load %arg1[%c94] : memref<243xf32, #tpu.memory_space<smem>>
    %c95 = arith.constant 95 : index
    %101 = memref.load %arg1[%c95] : memref<243xf32, #tpu.memory_space<smem>>
    %c96 = arith.constant 96 : index
    %102 = memref.load %arg1[%c96] : memref<243xf32, #tpu.memory_space<smem>>
    %c97 = arith.constant 97 : index
    %103 = memref.load %arg1[%c97] : memref<243xf32, #tpu.memory_space<smem>>
    %c98 = arith.constant 98 : index
    %104 = memref.load %arg1[%c98] : memref<243xf32, #tpu.memory_space<smem>>
    %c99 = arith.constant 99 : index
    %105 = memref.load %arg1[%c99] : memref<243xf32, #tpu.memory_space<smem>>
    %c100 = arith.constant 100 : index
    %106 = memref.load %arg1[%c100] : memref<243xf32, #tpu.memory_space<smem>>
    %c101 = arith.constant 101 : index
    %107 = memref.load %arg1[%c101] : memref<243xf32, #tpu.memory_space<smem>>
    %c102 = arith.constant 102 : index
    %108 = memref.load %arg1[%c102] : memref<243xf32, #tpu.memory_space<smem>>
    %c103 = arith.constant 103 : index
    %109 = memref.load %arg1[%c103] : memref<243xf32, #tpu.memory_space<smem>>
    %c104 = arith.constant 104 : index
    %110 = memref.load %arg1[%c104] : memref<243xf32, #tpu.memory_space<smem>>
    %c105 = arith.constant 105 : index
    %111 = memref.load %arg1[%c105] : memref<243xf32, #tpu.memory_space<smem>>
    %c106 = arith.constant 106 : index
    %112 = memref.load %arg1[%c106] : memref<243xf32, #tpu.memory_space<smem>>
    %c107 = arith.constant 107 : index
    %113 = memref.load %arg1[%c107] : memref<243xf32, #tpu.memory_space<smem>>
    %c108 = arith.constant 108 : index
    %114 = memref.load %arg1[%c108] : memref<243xf32, #tpu.memory_space<smem>>
    %c109 = arith.constant 109 : index
    %115 = memref.load %arg1[%c109] : memref<243xf32, #tpu.memory_space<smem>>
    %c110 = arith.constant 110 : index
    %116 = memref.load %arg1[%c110] : memref<243xf32, #tpu.memory_space<smem>>
    %c111 = arith.constant 111 : index
    %117 = memref.load %arg1[%c111] : memref<243xf32, #tpu.memory_space<smem>>
    %c112 = arith.constant 112 : index
    %118 = memref.load %arg1[%c112] : memref<243xf32, #tpu.memory_space<smem>>
    %c113 = arith.constant 113 : index
    %119 = memref.load %arg1[%c113] : memref<243xf32, #tpu.memory_space<smem>>
    %c114 = arith.constant 114 : index
    %120 = memref.load %arg1[%c114] : memref<243xf32, #tpu.memory_space<smem>>
    %c115 = arith.constant 115 : index
    %121 = memref.load %arg1[%c115] : memref<243xf32, #tpu.memory_space<smem>>
    %c116 = arith.constant 116 : index
    %122 = memref.load %arg1[%c116] : memref<243xf32, #tpu.memory_space<smem>>
    %c117 = arith.constant 117 : index
    %123 = memref.load %arg1[%c117] : memref<243xf32, #tpu.memory_space<smem>>
    %c118 = arith.constant 118 : index
    %124 = memref.load %arg1[%c118] : memref<243xf32, #tpu.memory_space<smem>>
    %c119 = arith.constant 119 : index
    %125 = memref.load %arg1[%c119] : memref<243xf32, #tpu.memory_space<smem>>
    %c120 = arith.constant 120 : index
    %126 = memref.load %arg1[%c120] : memref<243xf32, #tpu.memory_space<smem>>
    %c121 = arith.constant 121 : index
    %127 = memref.load %arg1[%c121] : memref<243xf32, #tpu.memory_space<smem>>
    %c122 = arith.constant 122 : index
    %128 = memref.load %arg1[%c122] : memref<243xf32, #tpu.memory_space<smem>>
    %c123 = arith.constant 123 : index
    %129 = memref.load %arg1[%c123] : memref<243xf32, #tpu.memory_space<smem>>
    %c124 = arith.constant 124 : index
    %130 = memref.load %arg1[%c124] : memref<243xf32, #tpu.memory_space<smem>>
    %c125 = arith.constant 125 : index
    %131 = memref.load %arg1[%c125] : memref<243xf32, #tpu.memory_space<smem>>
    %c126 = arith.constant 126 : index
    %132 = memref.load %arg1[%c126] : memref<243xf32, #tpu.memory_space<smem>>
    %c127 = arith.constant 127 : index
    %133 = memref.load %arg1[%c127] : memref<243xf32, #tpu.memory_space<smem>>
    %c128 = arith.constant 128 : index
    %134 = memref.load %arg1[%c128] : memref<243xf32, #tpu.memory_space<smem>>
    %c129 = arith.constant 129 : index
    %135 = memref.load %arg1[%c129] : memref<243xf32, #tpu.memory_space<smem>>
    %c130 = arith.constant 130 : index
    %136 = memref.load %arg1[%c130] : memref<243xf32, #tpu.memory_space<smem>>
    %c131 = arith.constant 131 : index
    %137 = memref.load %arg1[%c131] : memref<243xf32, #tpu.memory_space<smem>>
    %c132 = arith.constant 132 : index
    %138 = memref.load %arg1[%c132] : memref<243xf32, #tpu.memory_space<smem>>
    %c133 = arith.constant 133 : index
    %139 = memref.load %arg1[%c133] : memref<243xf32, #tpu.memory_space<smem>>
    %c134 = arith.constant 134 : index
    %140 = memref.load %arg1[%c134] : memref<243xf32, #tpu.memory_space<smem>>
    %c135 = arith.constant 135 : index
    %141 = memref.load %arg1[%c135] : memref<243xf32, #tpu.memory_space<smem>>
    %c136 = arith.constant 136 : index
    %142 = memref.load %arg1[%c136] : memref<243xf32, #tpu.memory_space<smem>>
    %c137 = arith.constant 137 : index
    %143 = memref.load %arg1[%c137] : memref<243xf32, #tpu.memory_space<smem>>
    %c138 = arith.constant 138 : index
    %144 = memref.load %arg1[%c138] : memref<243xf32, #tpu.memory_space<smem>>
    %c139 = arith.constant 139 : index
    %145 = memref.load %arg1[%c139] : memref<243xf32, #tpu.memory_space<smem>>
    %c140 = arith.constant 140 : index
    %146 = memref.load %arg1[%c140] : memref<243xf32, #tpu.memory_space<smem>>
    %c141 = arith.constant 141 : index
    %147 = memref.load %arg1[%c141] : memref<243xf32, #tpu.memory_space<smem>>
    %c142 = arith.constant 142 : index
    %148 = memref.load %arg1[%c142] : memref<243xf32, #tpu.memory_space<smem>>
    %c143 = arith.constant 143 : index
    %149 = memref.load %arg1[%c143] : memref<243xf32, #tpu.memory_space<smem>>
    %c144 = arith.constant 144 : index
    %150 = memref.load %arg1[%c144] : memref<243xf32, #tpu.memory_space<smem>>
    %c145 = arith.constant 145 : index
    %151 = memref.load %arg1[%c145] : memref<243xf32, #tpu.memory_space<smem>>
    %c146 = arith.constant 146 : index
    %152 = memref.load %arg1[%c146] : memref<243xf32, #tpu.memory_space<smem>>
    %c147 = arith.constant 147 : index
    %153 = memref.load %arg1[%c147] : memref<243xf32, #tpu.memory_space<smem>>
    %c148 = arith.constant 148 : index
    %154 = memref.load %arg1[%c148] : memref<243xf32, #tpu.memory_space<smem>>
    %c149 = arith.constant 149 : index
    %155 = memref.load %arg1[%c149] : memref<243xf32, #tpu.memory_space<smem>>
    %c150 = arith.constant 150 : index
    %156 = memref.load %arg1[%c150] : memref<243xf32, #tpu.memory_space<smem>>
    %c151 = arith.constant 151 : index
    %157 = memref.load %arg1[%c151] : memref<243xf32, #tpu.memory_space<smem>>
    %c152 = arith.constant 152 : index
    %158 = memref.load %arg1[%c152] : memref<243xf32, #tpu.memory_space<smem>>
    %c153 = arith.constant 153 : index
    %159 = memref.load %arg1[%c153] : memref<243xf32, #tpu.memory_space<smem>>
    %c154 = arith.constant 154 : index
    %160 = memref.load %arg1[%c154] : memref<243xf32, #tpu.memory_space<smem>>
    %c155 = arith.constant 155 : index
    %161 = memref.load %arg1[%c155] : memref<243xf32, #tpu.memory_space<smem>>
    %c156 = arith.constant 156 : index
    %162 = memref.load %arg1[%c156] : memref<243xf32, #tpu.memory_space<smem>>
    %c157 = arith.constant 157 : index
    %163 = memref.load %arg1[%c157] : memref<243xf32, #tpu.memory_space<smem>>
    %c158 = arith.constant 158 : index
    %164 = memref.load %arg1[%c158] : memref<243xf32, #tpu.memory_space<smem>>
    %c159 = arith.constant 159 : index
    %165 = memref.load %arg1[%c159] : memref<243xf32, #tpu.memory_space<smem>>
    %c160 = arith.constant 160 : index
    %166 = memref.load %arg1[%c160] : memref<243xf32, #tpu.memory_space<smem>>
    %c161 = arith.constant 161 : index
    %167 = memref.load %arg1[%c161] : memref<243xf32, #tpu.memory_space<smem>>
    %c162 = arith.constant 162 : index
    %168 = memref.load %arg1[%c162] : memref<243xf32, #tpu.memory_space<smem>>
    %c163 = arith.constant 163 : index
    %169 = memref.load %arg1[%c163] : memref<243xf32, #tpu.memory_space<smem>>
    %c164 = arith.constant 164 : index
    %170 = memref.load %arg1[%c164] : memref<243xf32, #tpu.memory_space<smem>>
    %c165 = arith.constant 165 : index
    %171 = memref.load %arg1[%c165] : memref<243xf32, #tpu.memory_space<smem>>
    %c166 = arith.constant 166 : index
    %172 = memref.load %arg1[%c166] : memref<243xf32, #tpu.memory_space<smem>>
    %c167 = arith.constant 167 : index
    %173 = memref.load %arg1[%c167] : memref<243xf32, #tpu.memory_space<smem>>
    %c168 = arith.constant 168 : index
    %174 = memref.load %arg1[%c168] : memref<243xf32, #tpu.memory_space<smem>>
    %c169 = arith.constant 169 : index
    %175 = memref.load %arg1[%c169] : memref<243xf32, #tpu.memory_space<smem>>
    %c170 = arith.constant 170 : index
    %176 = memref.load %arg1[%c170] : memref<243xf32, #tpu.memory_space<smem>>
    %c171 = arith.constant 171 : index
    %177 = memref.load %arg1[%c171] : memref<243xf32, #tpu.memory_space<smem>>
    %c172 = arith.constant 172 : index
    %178 = memref.load %arg1[%c172] : memref<243xf32, #tpu.memory_space<smem>>
    %c173 = arith.constant 173 : index
    %179 = memref.load %arg1[%c173] : memref<243xf32, #tpu.memory_space<smem>>
    %c174 = arith.constant 174 : index
    %180 = memref.load %arg1[%c174] : memref<243xf32, #tpu.memory_space<smem>>
    %c175 = arith.constant 175 : index
    %181 = memref.load %arg1[%c175] : memref<243xf32, #tpu.memory_space<smem>>
    %c176 = arith.constant 176 : index
    %182 = memref.load %arg1[%c176] : memref<243xf32, #tpu.memory_space<smem>>
    %c177 = arith.constant 177 : index
    %183 = memref.load %arg1[%c177] : memref<243xf32, #tpu.memory_space<smem>>
    %c178 = arith.constant 178 : index
    %184 = memref.load %arg1[%c178] : memref<243xf32, #tpu.memory_space<smem>>
    %c179 = arith.constant 179 : index
    %185 = memref.load %arg1[%c179] : memref<243xf32, #tpu.memory_space<smem>>
    %c180 = arith.constant 180 : index
    %186 = memref.load %arg1[%c180] : memref<243xf32, #tpu.memory_space<smem>>
    %c181 = arith.constant 181 : index
    %187 = memref.load %arg1[%c181] : memref<243xf32, #tpu.memory_space<smem>>
    %c182 = arith.constant 182 : index
    %188 = memref.load %arg1[%c182] : memref<243xf32, #tpu.memory_space<smem>>
    %c183 = arith.constant 183 : index
    %189 = memref.load %arg1[%c183] : memref<243xf32, #tpu.memory_space<smem>>
    %c184 = arith.constant 184 : index
    %190 = memref.load %arg1[%c184] : memref<243xf32, #tpu.memory_space<smem>>
    %c185 = arith.constant 185 : index
    %191 = memref.load %arg1[%c185] : memref<243xf32, #tpu.memory_space<smem>>
    %c186 = arith.constant 186 : index
    %192 = memref.load %arg1[%c186] : memref<243xf32, #tpu.memory_space<smem>>
    %c187 = arith.constant 187 : index
    %193 = memref.load %arg1[%c187] : memref<243xf32, #tpu.memory_space<smem>>
    %c188 = arith.constant 188 : index
    %194 = memref.load %arg1[%c188] : memref<243xf32, #tpu.memory_space<smem>>
    %c189 = arith.constant 189 : index
    %195 = memref.load %arg1[%c189] : memref<243xf32, #tpu.memory_space<smem>>
    %c190 = arith.constant 190 : index
    %196 = memref.load %arg1[%c190] : memref<243xf32, #tpu.memory_space<smem>>
    %c191 = arith.constant 191 : index
    %197 = memref.load %arg1[%c191] : memref<243xf32, #tpu.memory_space<smem>>
    %c192 = arith.constant 192 : index
    %198 = memref.load %arg1[%c192] : memref<243xf32, #tpu.memory_space<smem>>
    %c193 = arith.constant 193 : index
    %199 = memref.load %arg1[%c193] : memref<243xf32, #tpu.memory_space<smem>>
    %c194 = arith.constant 194 : index
    %200 = memref.load %arg1[%c194] : memref<243xf32, #tpu.memory_space<smem>>
    %c195 = arith.constant 195 : index
    %201 = memref.load %arg1[%c195] : memref<243xf32, #tpu.memory_space<smem>>
    %c196 = arith.constant 196 : index
    %202 = memref.load %arg1[%c196] : memref<243xf32, #tpu.memory_space<smem>>
    %c197 = arith.constant 197 : index
    %203 = memref.load %arg1[%c197] : memref<243xf32, #tpu.memory_space<smem>>
    %c198 = arith.constant 198 : index
    %204 = memref.load %arg1[%c198] : memref<243xf32, #tpu.memory_space<smem>>
    %c199 = arith.constant 199 : index
    %205 = memref.load %arg1[%c199] : memref<243xf32, #tpu.memory_space<smem>>
    %c200 = arith.constant 200 : index
    %206 = memref.load %arg1[%c200] : memref<243xf32, #tpu.memory_space<smem>>
    %c201 = arith.constant 201 : index
    %207 = memref.load %arg1[%c201] : memref<243xf32, #tpu.memory_space<smem>>
    %c202 = arith.constant 202 : index
    %208 = memref.load %arg1[%c202] : memref<243xf32, #tpu.memory_space<smem>>
    %c203 = arith.constant 203 : index
    %209 = memref.load %arg1[%c203] : memref<243xf32, #tpu.memory_space<smem>>
    %c204 = arith.constant 204 : index
    %210 = memref.load %arg1[%c204] : memref<243xf32, #tpu.memory_space<smem>>
    %c205 = arith.constant 205 : index
    %211 = memref.load %arg1[%c205] : memref<243xf32, #tpu.memory_space<smem>>
    %c206 = arith.constant 206 : index
    %212 = memref.load %arg1[%c206] : memref<243xf32, #tpu.memory_space<smem>>
    %c207 = arith.constant 207 : index
    %213 = memref.load %arg1[%c207] : memref<243xf32, #tpu.memory_space<smem>>
    %c208 = arith.constant 208 : index
    %214 = memref.load %arg1[%c208] : memref<243xf32, #tpu.memory_space<smem>>
    %c209 = arith.constant 209 : index
    %215 = memref.load %arg1[%c209] : memref<243xf32, #tpu.memory_space<smem>>
    %c210 = arith.constant 210 : index
    %216 = memref.load %arg1[%c210] : memref<243xf32, #tpu.memory_space<smem>>
    %c211 = arith.constant 211 : index
    %217 = memref.load %arg1[%c211] : memref<243xf32, #tpu.memory_space<smem>>
    %c212 = arith.constant 212 : index
    %218 = memref.load %arg1[%c212] : memref<243xf32, #tpu.memory_space<smem>>
    %c213 = arith.constant 213 : index
    %219 = memref.load %arg1[%c213] : memref<243xf32, #tpu.memory_space<smem>>
    %c214 = arith.constant 214 : index
    %220 = memref.load %arg1[%c214] : memref<243xf32, #tpu.memory_space<smem>>
    %c215 = arith.constant 215 : index
    %221 = memref.load %arg1[%c215] : memref<243xf32, #tpu.memory_space<smem>>
    %c216 = arith.constant 216 : index
    %222 = memref.load %arg1[%c216] : memref<243xf32, #tpu.memory_space<smem>>
    %c217 = arith.constant 217 : index
    %223 = memref.load %arg1[%c217] : memref<243xf32, #tpu.memory_space<smem>>
    %c218 = arith.constant 218 : index
    %224 = memref.load %arg1[%c218] : memref<243xf32, #tpu.memory_space<smem>>
    %c219 = arith.constant 219 : index
    %225 = memref.load %arg1[%c219] : memref<243xf32, #tpu.memory_space<smem>>
    %c220 = arith.constant 220 : index
    %226 = memref.load %arg1[%c220] : memref<243xf32, #tpu.memory_space<smem>>
    %c221 = arith.constant 221 : index
    %227 = memref.load %arg1[%c221] : memref<243xf32, #tpu.memory_space<smem>>
    %c222 = arith.constant 222 : index
    %228 = memref.load %arg1[%c222] : memref<243xf32, #tpu.memory_space<smem>>
    %c223 = arith.constant 223 : index
    %229 = memref.load %arg1[%c223] : memref<243xf32, #tpu.memory_space<smem>>
    %c224 = arith.constant 224 : index
    %230 = memref.load %arg1[%c224] : memref<243xf32, #tpu.memory_space<smem>>
    %c225 = arith.constant 225 : index
    %231 = memref.load %arg1[%c225] : memref<243xf32, #tpu.memory_space<smem>>
    %c226 = arith.constant 226 : index
    %232 = memref.load %arg1[%c226] : memref<243xf32, #tpu.memory_space<smem>>
    %c227 = arith.constant 227 : index
    %233 = memref.load %arg1[%c227] : memref<243xf32, #tpu.memory_space<smem>>
    %c228 = arith.constant 228 : index
    %234 = memref.load %arg1[%c228] : memref<243xf32, #tpu.memory_space<smem>>
    %c229 = arith.constant 229 : index
    %235 = memref.load %arg1[%c229] : memref<243xf32, #tpu.memory_space<smem>>
    %c230 = arith.constant 230 : index
    %236 = memref.load %arg1[%c230] : memref<243xf32, #tpu.memory_space<smem>>
    %c231 = arith.constant 231 : index
    %237 = memref.load %arg1[%c231] : memref<243xf32, #tpu.memory_space<smem>>
    %c232 = arith.constant 232 : index
    %238 = memref.load %arg1[%c232] : memref<243xf32, #tpu.memory_space<smem>>
    %c233 = arith.constant 233 : index
    %239 = memref.load %arg1[%c233] : memref<243xf32, #tpu.memory_space<smem>>
    %c234 = arith.constant 234 : index
    %240 = memref.load %arg1[%c234] : memref<243xf32, #tpu.memory_space<smem>>
    %c235 = arith.constant 235 : index
    %241 = memref.load %arg1[%c235] : memref<243xf32, #tpu.memory_space<smem>>
    %c236 = arith.constant 236 : index
    %242 = memref.load %arg1[%c236] : memref<243xf32, #tpu.memory_space<smem>>
    %c237 = arith.constant 237 : index
    %243 = memref.load %arg1[%c237] : memref<243xf32, #tpu.memory_space<smem>>
    %c238 = arith.constant 238 : index
    %244 = memref.load %arg1[%c238] : memref<243xf32, #tpu.memory_space<smem>>
    %c239 = arith.constant 239 : index
    %245 = memref.load %arg1[%c239] : memref<243xf32, #tpu.memory_space<smem>>
    %c240 = arith.constant 240 : index
    %246 = memref.load %arg1[%c240] : memref<243xf32, #tpu.memory_space<smem>>
    %c241 = arith.constant 241 : index
    %247 = memref.load %arg1[%c241] : memref<243xf32, #tpu.memory_space<smem>>
    %c242 = arith.constant 242 : index
    %248 = memref.load %arg1[%c242] : memref<243xf32, #tpu.memory_space<smem>>
    %249 = vector.extract_strided_slice %1 {offsets = [0, 0], sizes = [8, 128], strides = [1, 1]} : vector<10x128xf32> to vector<8x128xf32>
    %250 = vector.extract_strided_slice %1 {offsets = [1, 0], sizes = [8, 128], strides = [1, 1]} : vector<10x128xf32> to vector<8x128xf32>
    %251 = vector.extract_strided_slice %1 {offsets = [2, 0], sizes = [8, 128], strides = [1, 1]} : vector<10x128xf32> to vector<8x128xf32>
    %252 = vector.extract_strided_slice %3 {offsets = [0, 0], sizes = [8, 128], strides = [1, 1]} : vector<10x128xf32> to vector<8x128xf32>
    %253 = vector.extract_strided_slice %3 {offsets = [1, 0], sizes = [8, 128], strides = [1, 1]} : vector<10x128xf32> to vector<8x128xf32>
    %254 = vector.extract_strided_slice %3 {offsets = [2, 0], sizes = [8, 128], strides = [1, 1]} : vector<10x128xf32> to vector<8x128xf32>
    %255 = vector.extract_strided_slice %5 {offsets = [0, 0], sizes = [8, 128], strides = [1, 1]} : vector<10x128xf32> to vector<8x128xf32>
    %256 = vector.extract_strided_slice %5 {offsets = [1, 0], sizes = [8, 128], strides = [1, 1]} : vector<10x128xf32> to vector<8x128xf32>
    %257 = vector.extract_strided_slice %5 {offsets = [2, 0], sizes = [8, 128], strides = [1, 1]} : vector<10x128xf32> to vector<8x128xf32>
    %258 = vector.broadcast %6 : f32 to vector<8x128xf32>
    %259 = arith.mulf %258, %249 : vector<8x128xf32>
    %260 = vector.broadcast %87 : f32 to vector<8x128xf32>
    %261 = arith.mulf %260, %249 : vector<8x128xf32>
    %262 = vector.broadcast %168 : f32 to vector<8x128xf32>
    %263 = arith.mulf %262, %249 : vector<8x128xf32>
    %264 = vector.broadcast %15 : f32 to vector<8x128xf32>
    %265 = arith.mulf %264, %250 : vector<8x128xf32>
    %266 = arith.addf %259, %265 : vector<8x128xf32>
    %267 = vector.broadcast %96 : f32 to vector<8x128xf32>
    %268 = arith.mulf %267, %250 : vector<8x128xf32>
    %269 = arith.addf %261, %268 : vector<8x128xf32>
    %270 = vector.broadcast %177 : f32 to vector<8x128xf32>
    %271 = arith.mulf %270, %250 : vector<8x128xf32>
    %272 = arith.addf %263, %271 : vector<8x128xf32>
    %273 = vector.broadcast %24 : f32 to vector<8x128xf32>
    %274 = arith.mulf %273, %251 : vector<8x128xf32>
    %275 = arith.addf %266, %274 : vector<8x128xf32>
    %276 = vector.broadcast %105 : f32 to vector<8x128xf32>
    %277 = arith.mulf %276, %251 : vector<8x128xf32>
    %278 = arith.addf %269, %277 : vector<8x128xf32>
    %279 = vector.broadcast %186 : f32 to vector<8x128xf32>
    %280 = arith.mulf %279, %251 : vector<8x128xf32>
    %281 = arith.addf %272, %280 : vector<8x128xf32>
    %282 = vector.broadcast %33 : f32 to vector<8x128xf32>
    %283 = arith.mulf %282, %252 : vector<8x128xf32>
    %284 = vector.broadcast %114 : f32 to vector<8x128xf32>
    %285 = arith.mulf %284, %252 : vector<8x128xf32>
    %286 = vector.broadcast %195 : f32 to vector<8x128xf32>
    %287 = arith.mulf %286, %252 : vector<8x128xf32>
    %288 = vector.broadcast %42 : f32 to vector<8x128xf32>
    %289 = arith.mulf %288, %253 : vector<8x128xf32>
    %290 = arith.addf %283, %289 : vector<8x128xf32>
    %291 = vector.broadcast %123 : f32 to vector<8x128xf32>
    %292 = arith.mulf %291, %253 : vector<8x128xf32>
    %293 = arith.addf %285, %292 : vector<8x128xf32>
    %294 = vector.broadcast %204 : f32 to vector<8x128xf32>
    %295 = arith.mulf %294, %253 : vector<8x128xf32>
    %296 = arith.addf %287, %295 : vector<8x128xf32>
    %297 = vector.broadcast %51 : f32 to vector<8x128xf32>
    %298 = arith.mulf %297, %254 : vector<8x128xf32>
    %299 = arith.addf %290, %298 : vector<8x128xf32>
    %300 = vector.broadcast %132 : f32 to vector<8x128xf32>
    %301 = arith.mulf %300, %254 : vector<8x128xf32>
    %302 = arith.addf %293, %301 : vector<8x128xf32>
    %303 = vector.broadcast %213 : f32 to vector<8x128xf32>
    %304 = arith.mulf %303, %254 : vector<8x128xf32>
    %305 = arith.addf %296, %304 : vector<8x128xf32>
    %306 = vector.broadcast %60 : f32 to vector<8x128xf32>
    %307 = arith.mulf %306, %255 : vector<8x128xf32>
    %308 = vector.broadcast %141 : f32 to vector<8x128xf32>
    %309 = arith.mulf %308, %255 : vector<8x128xf32>
    %310 = vector.broadcast %222 : f32 to vector<8x128xf32>
    %311 = arith.mulf %310, %255 : vector<8x128xf32>
    %312 = vector.broadcast %69 : f32 to vector<8x128xf32>
    %313 = arith.mulf %312, %256 : vector<8x128xf32>
    %314 = arith.addf %307, %313 : vector<8x128xf32>
    %315 = vector.broadcast %150 : f32 to vector<8x128xf32>
    %316 = arith.mulf %315, %256 : vector<8x128xf32>
    %317 = arith.addf %309, %316 : vector<8x128xf32>
    %318 = vector.broadcast %231 : f32 to vector<8x128xf32>
    %319 = arith.mulf %318, %256 : vector<8x128xf32>
    %320 = arith.addf %311, %319 : vector<8x128xf32>
    %321 = vector.broadcast %78 : f32 to vector<8x128xf32>
    %322 = arith.mulf %321, %257 : vector<8x128xf32>
    %323 = arith.addf %314, %322 : vector<8x128xf32>
    %324 = vector.broadcast %159 : f32 to vector<8x128xf32>
    %325 = arith.mulf %324, %257 : vector<8x128xf32>
    %326 = arith.addf %317, %325 : vector<8x128xf32>
    %327 = vector.broadcast %240 : f32 to vector<8x128xf32>
    %328 = arith.mulf %327, %257 : vector<8x128xf32>
    %329 = arith.addf %320, %328 : vector<8x128xf32>
    %c127_i32 = arith.constant 127 : i32
    %330 = tpu.dynamic_rotate %249 by %c127_i32 dim 1 : vector<8x128xf32>, i32 -> vector<8x128xf32>
    %331 = vector.broadcast %7 : f32 to vector<8x128xf32>
    %332 = arith.mulf %331, %330 : vector<8x128xf32>
    %333 = arith.addf %275, %332 : vector<8x128xf32>
    %334 = vector.broadcast %88 : f32 to vector<8x128xf32>
    %335 = arith.mulf %334, %330 : vector<8x128xf32>
    %336 = arith.addf %278, %335 : vector<8x128xf32>
    %337 = vector.broadcast %169 : f32 to vector<8x128xf32>
    %338 = arith.mulf %337, %330 : vector<8x128xf32>
    %339 = arith.addf %281, %338 : vector<8x128xf32>
    %c127_i32_9 = arith.constant 127 : i32
    %340 = tpu.dynamic_rotate %250 by %c127_i32_9 dim 1 : vector<8x128xf32>, i32 -> vector<8x128xf32>
    %341 = vector.broadcast %16 : f32 to vector<8x128xf32>
    %342 = arith.mulf %341, %340 : vector<8x128xf32>
    %343 = arith.addf %333, %342 : vector<8x128xf32>
    %344 = vector.broadcast %97 : f32 to vector<8x128xf32>
    %345 = arith.mulf %344, %340 : vector<8x128xf32>
    %346 = arith.addf %336, %345 : vector<8x128xf32>
    %347 = vector.broadcast %178 : f32 to vector<8x128xf32>
    %348 = arith.mulf %347, %340 : vector<8x128xf32>
    %349 = arith.addf %339, %348 : vector<8x128xf32>
    %c127_i32_10 = arith.constant 127 : i32
    %350 = tpu.dynamic_rotate %251 by %c127_i32_10 dim 1 : vector<8x128xf32>, i32 -> vector<8x128xf32>
    %351 = vector.broadcast %25 : f32 to vector<8x128xf32>
    %352 = arith.mulf %351, %350 : vector<8x128xf32>
    %353 = arith.addf %343, %352 : vector<8x128xf32>
    %354 = vector.broadcast %106 : f32 to vector<8x128xf32>
    %355 = arith.mulf %354, %350 : vector<8x128xf32>
    %356 = arith.addf %346, %355 : vector<8x128xf32>
    %357 = vector.broadcast %187 : f32 to vector<8x128xf32>
    %358 = arith.mulf %357, %350 : vector<8x128xf32>
    %359 = arith.addf %349, %358 : vector<8x128xf32>
    %c127_i32_11 = arith.constant 127 : i32
    %360 = tpu.dynamic_rotate %252 by %c127_i32_11 dim 1 : vector<8x128xf32>, i32 -> vector<8x128xf32>
    %361 = vector.broadcast %34 : f32 to vector<8x128xf32>
    %362 = arith.mulf %361, %360 : vector<8x128xf32>
    %363 = arith.addf %299, %362 : vector<8x128xf32>
    %364 = vector.broadcast %115 : f32 to vector<8x128xf32>
    %365 = arith.mulf %364, %360 : vector<8x128xf32>
    %366 = arith.addf %302, %365 : vector<8x128xf32>
    %367 = vector.broadcast %196 : f32 to vector<8x128xf32>
    %368 = arith.mulf %367, %360 : vector<8x128xf32>
    %369 = arith.addf %305, %368 : vector<8x128xf32>
    %c127_i32_12 = arith.constant 127 : i32
    %370 = tpu.dynamic_rotate %253 by %c127_i32_12 dim 1 : vector<8x128xf32>, i32 -> vector<8x128xf32>
    %371 = vector.broadcast %43 : f32 to vector<8x128xf32>
    %372 = arith.mulf %371, %370 : vector<8x128xf32>
    %373 = arith.addf %363, %372 : vector<8x128xf32>
    %374 = vector.broadcast %124 : f32 to vector<8x128xf32>
    %375 = arith.mulf %374, %370 : vector<8x128xf32>
    %376 = arith.addf %366, %375 : vector<8x128xf32>
    %377 = vector.broadcast %205 : f32 to vector<8x128xf32>
    %378 = arith.mulf %377, %370 : vector<8x128xf32>
    %379 = arith.addf %369, %378 : vector<8x128xf32>
    %c127_i32_13 = arith.constant 127 : i32
    %380 = tpu.dynamic_rotate %254 by %c127_i32_13 dim 1 : vector<8x128xf32>, i32 -> vector<8x128xf32>
    %381 = vector.broadcast %52 : f32 to vector<8x128xf32>
    %382 = arith.mulf %381, %380 : vector<8x128xf32>
    %383 = arith.addf %373, %382 : vector<8x128xf32>
    %384 = vector.broadcast %133 : f32 to vector<8x128xf32>
    %385 = arith.mulf %384, %380 : vector<8x128xf32>
    %386 = arith.addf %376, %385 : vector<8x128xf32>
    %387 = vector.broadcast %214 : f32 to vector<8x128xf32>
    %388 = arith.mulf %387, %380 : vector<8x128xf32>
    %389 = arith.addf %379, %388 : vector<8x128xf32>
    %c127_i32_14 = arith.constant 127 : i32
    %390 = tpu.dynamic_rotate %255 by %c127_i32_14 dim 1 : vector<8x128xf32>, i32 -> vector<8x128xf32>
    %391 = vector.broadcast %61 : f32 to vector<8x128xf32>
    %392 = arith.mulf %391, %390 : vector<8x128xf32>
    %393 = arith.addf %323, %392 : vector<8x128xf32>
    %394 = vector.broadcast %142 : f32 to vector<8x128xf32>
    %395 = arith.mulf %394, %390 : vector<8x128xf32>
    %396 = arith.addf %326, %395 : vector<8x128xf32>
    %397 = vector.broadcast %223 : f32 to vector<8x128xf32>
    %398 = arith.mulf %397, %390 : vector<8x128xf32>
    %399 = arith.addf %329, %398 : vector<8x128xf32>
    %c127_i32_15 = arith.constant 127 : i32
    %400 = tpu.dynamic_rotate %256 by %c127_i32_15 dim 1 : vector<8x128xf32>, i32 -> vector<8x128xf32>
    %401 = vector.broadcast %70 : f32 to vector<8x128xf32>
    %402 = arith.mulf %401, %400 : vector<8x128xf32>
    %403 = arith.addf %393, %402 : vector<8x128xf32>
    %404 = vector.broadcast %151 : f32 to vector<8x128xf32>
    %405 = arith.mulf %404, %400 : vector<8x128xf32>
    %406 = arith.addf %396, %405 : vector<8x128xf32>
    %407 = vector.broadcast %232 : f32 to vector<8x128xf32>
    %408 = arith.mulf %407, %400 : vector<8x128xf32>
    %409 = arith.addf %399, %408 : vector<8x128xf32>
    %c127_i32_16 = arith.constant 127 : i32
    %410 = tpu.dynamic_rotate %257 by %c127_i32_16 dim 1 : vector<8x128xf32>, i32 -> vector<8x128xf32>
    %411 = vector.broadcast %79 : f32 to vector<8x128xf32>
    %412 = arith.mulf %411, %410 : vector<8x128xf32>
    %413 = arith.addf %403, %412 : vector<8x128xf32>
    %414 = vector.broadcast %160 : f32 to vector<8x128xf32>
    %415 = arith.mulf %414, %410 : vector<8x128xf32>
    %416 = arith.addf %406, %415 : vector<8x128xf32>
    %417 = vector.broadcast %241 : f32 to vector<8x128xf32>
    %418 = arith.mulf %417, %410 : vector<8x128xf32>
    %419 = arith.addf %409, %418 : vector<8x128xf32>
    %c126_i32 = arith.constant 126 : i32
    %420 = tpu.dynamic_rotate %249 by %c126_i32 dim 1 : vector<8x128xf32>, i32 -> vector<8x128xf32>
    %421 = vector.broadcast %8 : f32 to vector<8x128xf32>
    %422 = arith.mulf %421, %420 : vector<8x128xf32>
    %423 = arith.addf %353, %422 : vector<8x128xf32>
    %424 = vector.broadcast %89 : f32 to vector<8x128xf32>
    %425 = arith.mulf %424, %420 : vector<8x128xf32>
    %426 = arith.addf %356, %425 : vector<8x128xf32>
    %427 = vector.broadcast %170 : f32 to vector<8x128xf32>
    %428 = arith.mulf %427, %420 : vector<8x128xf32>
    %429 = arith.addf %359, %428 : vector<8x128xf32>
    %c126_i32_17 = arith.constant 126 : i32
    %430 = tpu.dynamic_rotate %250 by %c126_i32_17 dim 1 : vector<8x128xf32>, i32 -> vector<8x128xf32>
    %431 = vector.broadcast %17 : f32 to vector<8x128xf32>
    %432 = arith.mulf %431, %430 : vector<8x128xf32>
    %433 = arith.addf %423, %432 : vector<8x128xf32>
    %434 = vector.broadcast %98 : f32 to vector<8x128xf32>
    %435 = arith.mulf %434, %430 : vector<8x128xf32>
    %436 = arith.addf %426, %435 : vector<8x128xf32>
    %437 = vector.broadcast %179 : f32 to vector<8x128xf32>
    %438 = arith.mulf %437, %430 : vector<8x128xf32>
    %439 = arith.addf %429, %438 : vector<8x128xf32>
    %c126_i32_18 = arith.constant 126 : i32
    %440 = tpu.dynamic_rotate %251 by %c126_i32_18 dim 1 : vector<8x128xf32>, i32 -> vector<8x128xf32>
    %441 = vector.broadcast %26 : f32 to vector<8x128xf32>
    %442 = arith.mulf %441, %440 : vector<8x128xf32>
    %443 = arith.addf %433, %442 : vector<8x128xf32>
    %444 = vector.broadcast %107 : f32 to vector<8x128xf32>
    %445 = arith.mulf %444, %440 : vector<8x128xf32>
    %446 = arith.addf %436, %445 : vector<8x128xf32>
    %447 = vector.broadcast %188 : f32 to vector<8x128xf32>
    %448 = arith.mulf %447, %440 : vector<8x128xf32>
    %449 = arith.addf %439, %448 : vector<8x128xf32>
    %c126_i32_19 = arith.constant 126 : i32
    %450 = tpu.dynamic_rotate %252 by %c126_i32_19 dim 1 : vector<8x128xf32>, i32 -> vector<8x128xf32>
    %451 = vector.broadcast %35 : f32 to vector<8x128xf32>
    %452 = arith.mulf %451, %450 : vector<8x128xf32>
    %453 = arith.addf %383, %452 : vector<8x128xf32>
    %454 = vector.broadcast %116 : f32 to vector<8x128xf32>
    %455 = arith.mulf %454, %450 : vector<8x128xf32>
    %456 = arith.addf %386, %455 : vector<8x128xf32>
    %457 = vector.broadcast %197 : f32 to vector<8x128xf32>
    %458 = arith.mulf %457, %450 : vector<8x128xf32>
    %459 = arith.addf %389, %458 : vector<8x128xf32>
    %c126_i32_20 = arith.constant 126 : i32
    %460 = tpu.dynamic_rotate %253 by %c126_i32_20 dim 1 : vector<8x128xf32>, i32 -> vector<8x128xf32>
    %461 = vector.broadcast %44 : f32 to vector<8x128xf32>
    %462 = arith.mulf %461, %460 : vector<8x128xf32>
    %463 = arith.addf %453, %462 : vector<8x128xf32>
    %464 = vector.broadcast %125 : f32 to vector<8x128xf32>
    %465 = arith.mulf %464, %460 : vector<8x128xf32>
    %466 = arith.addf %456, %465 : vector<8x128xf32>
    %467 = vector.broadcast %206 : f32 to vector<8x128xf32>
    %468 = arith.mulf %467, %460 : vector<8x128xf32>
    %469 = arith.addf %459, %468 : vector<8x128xf32>
    %c126_i32_21 = arith.constant 126 : i32
    %470 = tpu.dynamic_rotate %254 by %c126_i32_21 dim 1 : vector<8x128xf32>, i32 -> vector<8x128xf32>
    %471 = vector.broadcast %53 : f32 to vector<8x128xf32>
    %472 = arith.mulf %471, %470 : vector<8x128xf32>
    %473 = arith.addf %463, %472 : vector<8x128xf32>
    %474 = vector.broadcast %134 : f32 to vector<8x128xf32>
    %475 = arith.mulf %474, %470 : vector<8x128xf32>
    %476 = arith.addf %466, %475 : vector<8x128xf32>
    %477 = vector.broadcast %215 : f32 to vector<8x128xf32>
    %478 = arith.mulf %477, %470 : vector<8x128xf32>
    %479 = arith.addf %469, %478 : vector<8x128xf32>
    %c126_i32_22 = arith.constant 126 : i32
    %480 = tpu.dynamic_rotate %255 by %c126_i32_22 dim 1 : vector<8x128xf32>, i32 -> vector<8x128xf32>
    %481 = vector.broadcast %62 : f32 to vector<8x128xf32>
    %482 = arith.mulf %481, %480 : vector<8x128xf32>
    %483 = arith.addf %413, %482 : vector<8x128xf32>
    %484 = vector.broadcast %143 : f32 to vector<8x128xf32>
    %485 = arith.mulf %484, %480 : vector<8x128xf32>
    %486 = arith.addf %416, %485 : vector<8x128xf32>
    %487 = vector.broadcast %224 : f32 to vector<8x128xf32>
    %488 = arith.mulf %487, %480 : vector<8x128xf32>
    %489 = arith.addf %419, %488 : vector<8x128xf32>
    %c126_i32_23 = arith.constant 126 : i32
    %490 = tpu.dynamic_rotate %256 by %c126_i32_23 dim 1 : vector<8x128xf32>, i32 -> vector<8x128xf32>
    %491 = vector.broadcast %71 : f32 to vector<8x128xf32>
    %492 = arith.mulf %491, %490 : vector<8x128xf32>
    %493 = arith.addf %483, %492 : vector<8x128xf32>
    %494 = vector.broadcast %152 : f32 to vector<8x128xf32>
    %495 = arith.mulf %494, %490 : vector<8x128xf32>
    %496 = arith.addf %486, %495 : vector<8x128xf32>
    %497 = vector.broadcast %233 : f32 to vector<8x128xf32>
    %498 = arith.mulf %497, %490 : vector<8x128xf32>
    %499 = arith.addf %489, %498 : vector<8x128xf32>
    %c126_i32_24 = arith.constant 126 : i32
    %500 = tpu.dynamic_rotate %257 by %c126_i32_24 dim 1 : vector<8x128xf32>, i32 -> vector<8x128xf32>
    %501 = vector.broadcast %80 : f32 to vector<8x128xf32>
    %502 = arith.mulf %501, %500 : vector<8x128xf32>
    %503 = arith.addf %493, %502 : vector<8x128xf32>
    %504 = vector.broadcast %161 : f32 to vector<8x128xf32>
    %505 = arith.mulf %504, %500 : vector<8x128xf32>
    %506 = arith.addf %496, %505 : vector<8x128xf32>
    %507 = vector.broadcast %242 : f32 to vector<8x128xf32>
    %508 = arith.mulf %507, %500 : vector<8x128xf32>
    %509 = arith.addf %499, %508 : vector<8x128xf32>
    %c118_i32 = arith.constant 118 : i32
    %510 = tpu.dynamic_rotate %249 by %c118_i32 dim 1 : vector<8x128xf32>, i32 -> vector<8x128xf32>
    %511 = vector.broadcast %9 : f32 to vector<8x128xf32>
    %512 = arith.mulf %511, %510 : vector<8x128xf32>
    %513 = arith.addf %443, %512 : vector<8x128xf32>
    %514 = vector.broadcast %90 : f32 to vector<8x128xf32>
    %515 = arith.mulf %514, %510 : vector<8x128xf32>
    %516 = arith.addf %446, %515 : vector<8x128xf32>
    %517 = vector.broadcast %171 : f32 to vector<8x128xf32>
    %518 = arith.mulf %517, %510 : vector<8x128xf32>
    %519 = arith.addf %449, %518 : vector<8x128xf32>
    %c118_i32_25 = arith.constant 118 : i32
    %520 = tpu.dynamic_rotate %250 by %c118_i32_25 dim 1 : vector<8x128xf32>, i32 -> vector<8x128xf32>
    %521 = vector.broadcast %18 : f32 to vector<8x128xf32>
    %522 = arith.mulf %521, %520 : vector<8x128xf32>
    %523 = arith.addf %513, %522 : vector<8x128xf32>
    %524 = vector.broadcast %99 : f32 to vector<8x128xf32>
    %525 = arith.mulf %524, %520 : vector<8x128xf32>
    %526 = arith.addf %516, %525 : vector<8x128xf32>
    %527 = vector.broadcast %180 : f32 to vector<8x128xf32>
    %528 = arith.mulf %527, %520 : vector<8x128xf32>
    %529 = arith.addf %519, %528 : vector<8x128xf32>
    %c118_i32_26 = arith.constant 118 : i32
    %530 = tpu.dynamic_rotate %251 by %c118_i32_26 dim 1 : vector<8x128xf32>, i32 -> vector<8x128xf32>
    %531 = vector.broadcast %27 : f32 to vector<8x128xf32>
    %532 = arith.mulf %531, %530 : vector<8x128xf32>
    %533 = arith.addf %523, %532 : vector<8x128xf32>
    %534 = vector.broadcast %108 : f32 to vector<8x128xf32>
    %535 = arith.mulf %534, %530 : vector<8x128xf32>
    %536 = arith.addf %526, %535 : vector<8x128xf32>
    %537 = vector.broadcast %189 : f32 to vector<8x128xf32>
    %538 = arith.mulf %537, %530 : vector<8x128xf32>
    %539 = arith.addf %529, %538 : vector<8x128xf32>
    %c118_i32_27 = arith.constant 118 : i32
    %540 = tpu.dynamic_rotate %252 by %c118_i32_27 dim 1 : vector<8x128xf32>, i32 -> vector<8x128xf32>
    %541 = vector.broadcast %36 : f32 to vector<8x128xf32>
    %542 = arith.mulf %541, %540 : vector<8x128xf32>
    %543 = arith.addf %473, %542 : vector<8x128xf32>
    %544 = vector.broadcast %117 : f32 to vector<8x128xf32>
    %545 = arith.mulf %544, %540 : vector<8x128xf32>
    %546 = arith.addf %476, %545 : vector<8x128xf32>
    %547 = vector.broadcast %198 : f32 to vector<8x128xf32>
    %548 = arith.mulf %547, %540 : vector<8x128xf32>
    %549 = arith.addf %479, %548 : vector<8x128xf32>
    %c118_i32_28 = arith.constant 118 : i32
    %550 = tpu.dynamic_rotate %253 by %c118_i32_28 dim 1 : vector<8x128xf32>, i32 -> vector<8x128xf32>
    %551 = vector.broadcast %45 : f32 to vector<8x128xf32>
    %552 = arith.mulf %551, %550 : vector<8x128xf32>
    %553 = arith.addf %543, %552 : vector<8x128xf32>
    %554 = vector.broadcast %126 : f32 to vector<8x128xf32>
    %555 = arith.mulf %554, %550 : vector<8x128xf32>
    %556 = arith.addf %546, %555 : vector<8x128xf32>
    %557 = vector.broadcast %207 : f32 to vector<8x128xf32>
    %558 = arith.mulf %557, %550 : vector<8x128xf32>
    %559 = arith.addf %549, %558 : vector<8x128xf32>
    %c118_i32_29 = arith.constant 118 : i32
    %560 = tpu.dynamic_rotate %254 by %c118_i32_29 dim 1 : vector<8x128xf32>, i32 -> vector<8x128xf32>
    %561 = vector.broadcast %54 : f32 to vector<8x128xf32>
    %562 = arith.mulf %561, %560 : vector<8x128xf32>
    %563 = arith.addf %553, %562 : vector<8x128xf32>
    %564 = vector.broadcast %135 : f32 to vector<8x128xf32>
    %565 = arith.mulf %564, %560 : vector<8x128xf32>
    %566 = arith.addf %556, %565 : vector<8x128xf32>
    %567 = vector.broadcast %216 : f32 to vector<8x128xf32>
    %568 = arith.mulf %567, %560 : vector<8x128xf32>
    %569 = arith.addf %559, %568 : vector<8x128xf32>
    %c118_i32_30 = arith.constant 118 : i32
    %570 = tpu.dynamic_rotate %255 by %c118_i32_30 dim 1 : vector<8x128xf32>, i32 -> vector<8x128xf32>
    %571 = vector.broadcast %63 : f32 to vector<8x128xf32>
    %572 = arith.mulf %571, %570 : vector<8x128xf32>
    %573 = arith.addf %503, %572 : vector<8x128xf32>
    %574 = vector.broadcast %144 : f32 to vector<8x128xf32>
    %575 = arith.mulf %574, %570 : vector<8x128xf32>
    %576 = arith.addf %506, %575 : vector<8x128xf32>
    %577 = vector.broadcast %225 : f32 to vector<8x128xf32>
    %578 = arith.mulf %577, %570 : vector<8x128xf32>
    %579 = arith.addf %509, %578 : vector<8x128xf32>
    %c118_i32_31 = arith.constant 118 : i32
    %580 = tpu.dynamic_rotate %256 by %c118_i32_31 dim 1 : vector<8x128xf32>, i32 -> vector<8x128xf32>
    %581 = vector.broadcast %72 : f32 to vector<8x128xf32>
    %582 = arith.mulf %581, %580 : vector<8x128xf32>
    %583 = arith.addf %573, %582 : vector<8x128xf32>
    %584 = vector.broadcast %153 : f32 to vector<8x128xf32>
    %585 = arith.mulf %584, %580 : vector<8x128xf32>
    %586 = arith.addf %576, %585 : vector<8x128xf32>
    %587 = vector.broadcast %234 : f32 to vector<8x128xf32>
    %588 = arith.mulf %587, %580 : vector<8x128xf32>
    %589 = arith.addf %579, %588 : vector<8x128xf32>
    %c118_i32_32 = arith.constant 118 : i32
    %590 = tpu.dynamic_rotate %257 by %c118_i32_32 dim 1 : vector<8x128xf32>, i32 -> vector<8x128xf32>
    %591 = vector.broadcast %81 : f32 to vector<8x128xf32>
    %592 = arith.mulf %591, %590 : vector<8x128xf32>
    %593 = arith.addf %583, %592 : vector<8x128xf32>
    %594 = vector.broadcast %162 : f32 to vector<8x128xf32>
    %595 = arith.mulf %594, %590 : vector<8x128xf32>
    %596 = arith.addf %586, %595 : vector<8x128xf32>
    %597 = vector.broadcast %243 : f32 to vector<8x128xf32>
    %598 = arith.mulf %597, %590 : vector<8x128xf32>
    %599 = arith.addf %589, %598 : vector<8x128xf32>
    %c117_i32 = arith.constant 117 : i32
    %600 = tpu.dynamic_rotate %249 by %c117_i32 dim 1 : vector<8x128xf32>, i32 -> vector<8x128xf32>
    %601 = vector.broadcast %10 : f32 to vector<8x128xf32>
    %602 = arith.mulf %601, %600 : vector<8x128xf32>
    %603 = arith.addf %533, %602 : vector<8x128xf32>
    %604 = vector.broadcast %91 : f32 to vector<8x128xf32>
    %605 = arith.mulf %604, %600 : vector<8x128xf32>
    %606 = arith.addf %536, %605 : vector<8x128xf32>
    %607 = vector.broadcast %172 : f32 to vector<8x128xf32>
    %608 = arith.mulf %607, %600 : vector<8x128xf32>
    %609 = arith.addf %539, %608 : vector<8x128xf32>
    %c117_i32_33 = arith.constant 117 : i32
    %610 = tpu.dynamic_rotate %250 by %c117_i32_33 dim 1 : vector<8x128xf32>, i32 -> vector<8x128xf32>
    %611 = vector.broadcast %19 : f32 to vector<8x128xf32>
    %612 = arith.mulf %611, %610 : vector<8x128xf32>
    %613 = arith.addf %603, %612 : vector<8x128xf32>
    %614 = vector.broadcast %100 : f32 to vector<8x128xf32>
    %615 = arith.mulf %614, %610 : vector<8x128xf32>
    %616 = arith.addf %606, %615 : vector<8x128xf32>
    %617 = vector.broadcast %181 : f32 to vector<8x128xf32>
    %618 = arith.mulf %617, %610 : vector<8x128xf32>
    %619 = arith.addf %609, %618 : vector<8x128xf32>
    %c117_i32_34 = arith.constant 117 : i32
    %620 = tpu.dynamic_rotate %251 by %c117_i32_34 dim 1 : vector<8x128xf32>, i32 -> vector<8x128xf32>
    %621 = vector.broadcast %28 : f32 to vector<8x128xf32>
    %622 = arith.mulf %621, %620 : vector<8x128xf32>
    %623 = arith.addf %613, %622 : vector<8x128xf32>
    %624 = vector.broadcast %109 : f32 to vector<8x128xf32>
    %625 = arith.mulf %624, %620 : vector<8x128xf32>
    %626 = arith.addf %616, %625 : vector<8x128xf32>
    %627 = vector.broadcast %190 : f32 to vector<8x128xf32>
    %628 = arith.mulf %627, %620 : vector<8x128xf32>
    %629 = arith.addf %619, %628 : vector<8x128xf32>
    %c117_i32_35 = arith.constant 117 : i32
    %630 = tpu.dynamic_rotate %252 by %c117_i32_35 dim 1 : vector<8x128xf32>, i32 -> vector<8x128xf32>
    %631 = vector.broadcast %37 : f32 to vector<8x128xf32>
    %632 = arith.mulf %631, %630 : vector<8x128xf32>
    %633 = arith.addf %563, %632 : vector<8x128xf32>
    %634 = vector.broadcast %118 : f32 to vector<8x128xf32>
    %635 = arith.mulf %634, %630 : vector<8x128xf32>
    %636 = arith.addf %566, %635 : vector<8x128xf32>
    %637 = vector.broadcast %199 : f32 to vector<8x128xf32>
    %638 = arith.mulf %637, %630 : vector<8x128xf32>
    %639 = arith.addf %569, %638 : vector<8x128xf32>
    %c117_i32_36 = arith.constant 117 : i32
    %640 = tpu.dynamic_rotate %253 by %c117_i32_36 dim 1 : vector<8x128xf32>, i32 -> vector<8x128xf32>
    %641 = vector.broadcast %46 : f32 to vector<8x128xf32>
    %642 = arith.mulf %641, %640 : vector<8x128xf32>
    %643 = arith.addf %633, %642 : vector<8x128xf32>
    %644 = vector.broadcast %127 : f32 to vector<8x128xf32>
    %645 = arith.mulf %644, %640 : vector<8x128xf32>
    %646 = arith.addf %636, %645 : vector<8x128xf32>
    %647 = vector.broadcast %208 : f32 to vector<8x128xf32>
    %648 = arith.mulf %647, %640 : vector<8x128xf32>
    %649 = arith.addf %639, %648 : vector<8x128xf32>
    %c117_i32_37 = arith.constant 117 : i32
    %650 = tpu.dynamic_rotate %254 by %c117_i32_37 dim 1 : vector<8x128xf32>, i32 -> vector<8x128xf32>
    %651 = vector.broadcast %55 : f32 to vector<8x128xf32>
    %652 = arith.mulf %651, %650 : vector<8x128xf32>
    %653 = arith.addf %643, %652 : vector<8x128xf32>
    %654 = vector.broadcast %136 : f32 to vector<8x128xf32>
    %655 = arith.mulf %654, %650 : vector<8x128xf32>
    %656 = arith.addf %646, %655 : vector<8x128xf32>
    %657 = vector.broadcast %217 : f32 to vector<8x128xf32>
    %658 = arith.mulf %657, %650 : vector<8x128xf32>
    %659 = arith.addf %649, %658 : vector<8x128xf32>
    %c117_i32_38 = arith.constant 117 : i32
    %660 = tpu.dynamic_rotate %255 by %c117_i32_38 dim 1 : vector<8x128xf32>, i32 -> vector<8x128xf32>
    %661 = vector.broadcast %64 : f32 to vector<8x128xf32>
    %662 = arith.mulf %661, %660 : vector<8x128xf32>
    %663 = arith.addf %593, %662 : vector<8x128xf32>
    %664 = vector.broadcast %145 : f32 to vector<8x128xf32>
    %665 = arith.mulf %664, %660 : vector<8x128xf32>
    %666 = arith.addf %596, %665 : vector<8x128xf32>
    %667 = vector.broadcast %226 : f32 to vector<8x128xf32>
    %668 = arith.mulf %667, %660 : vector<8x128xf32>
    %669 = arith.addf %599, %668 : vector<8x128xf32>
    %c117_i32_39 = arith.constant 117 : i32
    %670 = tpu.dynamic_rotate %256 by %c117_i32_39 dim 1 : vector<8x128xf32>, i32 -> vector<8x128xf32>
    %671 = vector.broadcast %73 : f32 to vector<8x128xf32>
    %672 = arith.mulf %671, %670 : vector<8x128xf32>
    %673 = arith.addf %663, %672 : vector<8x128xf32>
    %674 = vector.broadcast %154 : f32 to vector<8x128xf32>
    %675 = arith.mulf %674, %670 : vector<8x128xf32>
    %676 = arith.addf %666, %675 : vector<8x128xf32>
    %677 = vector.broadcast %235 : f32 to vector<8x128xf32>
    %678 = arith.mulf %677, %670 : vector<8x128xf32>
    %679 = arith.addf %669, %678 : vector<8x128xf32>
    %c117_i32_40 = arith.constant 117 : i32
    %680 = tpu.dynamic_rotate %257 by %c117_i32_40 dim 1 : vector<8x128xf32>, i32 -> vector<8x128xf32>
    %681 = vector.broadcast %82 : f32 to vector<8x128xf32>
    %682 = arith.mulf %681, %680 : vector<8x128xf32>
    %683 = arith.addf %673, %682 : vector<8x128xf32>
    %684 = vector.broadcast %163 : f32 to vector<8x128xf32>
    %685 = arith.mulf %684, %680 : vector<8x128xf32>
    %686 = arith.addf %676, %685 : vector<8x128xf32>
    %687 = vector.broadcast %244 : f32 to vector<8x128xf32>
    %688 = arith.mulf %687, %680 : vector<8x128xf32>
    %689 = arith.addf %679, %688 : vector<8x128xf32>
    %c116_i32 = arith.constant 116 : i32
    %690 = tpu.dynamic_rotate %249 by %c116_i32 dim 1 : vector<8x128xf32>, i32 -> vector<8x128xf32>
    %691 = vector.broadcast %11 : f32 to vector<8x128xf32>
    %692 = arith.mulf %691, %690 : vector<8x128xf32>
    %693 = arith.addf %623, %692 : vector<8x128xf32>
    %694 = vector.broadcast %92 : f32 to vector<8x128xf32>
    %695 = arith.mulf %694, %690 : vector<8x128xf32>
    %696 = arith.addf %626, %695 : vector<8x128xf32>
    %697 = vector.broadcast %173 : f32 to vector<8x128xf32>
    %698 = arith.mulf %697, %690 : vector<8x128xf32>
    %699 = arith.addf %629, %698 : vector<8x128xf32>
    %c116_i32_41 = arith.constant 116 : i32
    %700 = tpu.dynamic_rotate %250 by %c116_i32_41 dim 1 : vector<8x128xf32>, i32 -> vector<8x128xf32>
    %701 = vector.broadcast %20 : f32 to vector<8x128xf32>
    %702 = arith.mulf %701, %700 : vector<8x128xf32>
    %703 = arith.addf %693, %702 : vector<8x128xf32>
    %704 = vector.broadcast %101 : f32 to vector<8x128xf32>
    %705 = arith.mulf %704, %700 : vector<8x128xf32>
    %706 = arith.addf %696, %705 : vector<8x128xf32>
    %707 = vector.broadcast %182 : f32 to vector<8x128xf32>
    %708 = arith.mulf %707, %700 : vector<8x128xf32>
    %709 = arith.addf %699, %708 : vector<8x128xf32>
    %c116_i32_42 = arith.constant 116 : i32
    %710 = tpu.dynamic_rotate %251 by %c116_i32_42 dim 1 : vector<8x128xf32>, i32 -> vector<8x128xf32>
    %711 = vector.broadcast %29 : f32 to vector<8x128xf32>
    %712 = arith.mulf %711, %710 : vector<8x128xf32>
    %713 = arith.addf %703, %712 : vector<8x128xf32>
    %714 = vector.broadcast %110 : f32 to vector<8x128xf32>
    %715 = arith.mulf %714, %710 : vector<8x128xf32>
    %716 = arith.addf %706, %715 : vector<8x128xf32>
    %717 = vector.broadcast %191 : f32 to vector<8x128xf32>
    %718 = arith.mulf %717, %710 : vector<8x128xf32>
    %719 = arith.addf %709, %718 : vector<8x128xf32>
    %c116_i32_43 = arith.constant 116 : i32
    %720 = tpu.dynamic_rotate %252 by %c116_i32_43 dim 1 : vector<8x128xf32>, i32 -> vector<8x128xf32>
    %721 = vector.broadcast %38 : f32 to vector<8x128xf32>
    %722 = arith.mulf %721, %720 : vector<8x128xf32>
    %723 = arith.addf %653, %722 : vector<8x128xf32>
    %724 = vector.broadcast %119 : f32 to vector<8x128xf32>
    %725 = arith.mulf %724, %720 : vector<8x128xf32>
    %726 = arith.addf %656, %725 : vector<8x128xf32>
    %727 = vector.broadcast %200 : f32 to vector<8x128xf32>
    %728 = arith.mulf %727, %720 : vector<8x128xf32>
    %729 = arith.addf %659, %728 : vector<8x128xf32>
    %c116_i32_44 = arith.constant 116 : i32
    %730 = tpu.dynamic_rotate %253 by %c116_i32_44 dim 1 : vector<8x128xf32>, i32 -> vector<8x128xf32>
    %731 = vector.broadcast %47 : f32 to vector<8x128xf32>
    %732 = arith.mulf %731, %730 : vector<8x128xf32>
    %733 = arith.addf %723, %732 : vector<8x128xf32>
    %734 = vector.broadcast %128 : f32 to vector<8x128xf32>
    %735 = arith.mulf %734, %730 : vector<8x128xf32>
    %736 = arith.addf %726, %735 : vector<8x128xf32>
    %737 = vector.broadcast %209 : f32 to vector<8x128xf32>
    %738 = arith.mulf %737, %730 : vector<8x128xf32>
    %739 = arith.addf %729, %738 : vector<8x128xf32>
    %c116_i32_45 = arith.constant 116 : i32
    %740 = tpu.dynamic_rotate %254 by %c116_i32_45 dim 1 : vector<8x128xf32>, i32 -> vector<8x128xf32>
    %741 = vector.broadcast %56 : f32 to vector<8x128xf32>
    %742 = arith.mulf %741, %740 : vector<8x128xf32>
    %743 = arith.addf %733, %742 : vector<8x128xf32>
    %744 = vector.broadcast %137 : f32 to vector<8x128xf32>
    %745 = arith.mulf %744, %740 : vector<8x128xf32>
    %746 = arith.addf %736, %745 : vector<8x128xf32>
    %747 = vector.broadcast %218 : f32 to vector<8x128xf32>
    %748 = arith.mulf %747, %740 : vector<8x128xf32>
    %749 = arith.addf %739, %748 : vector<8x128xf32>
    %c116_i32_46 = arith.constant 116 : i32
    %750 = tpu.dynamic_rotate %255 by %c116_i32_46 dim 1 : vector<8x128xf32>, i32 -> vector<8x128xf32>
    %751 = vector.broadcast %65 : f32 to vector<8x128xf32>
    %752 = arith.mulf %751, %750 : vector<8x128xf32>
    %753 = arith.addf %683, %752 : vector<8x128xf32>
    %754 = vector.broadcast %146 : f32 to vector<8x128xf32>
    %755 = arith.mulf %754, %750 : vector<8x128xf32>
    %756 = arith.addf %686, %755 : vector<8x128xf32>
    %757 = vector.broadcast %227 : f32 to vector<8x128xf32>
    %758 = arith.mulf %757, %750 : vector<8x128xf32>
    %759 = arith.addf %689, %758 : vector<8x128xf32>
    %c116_i32_47 = arith.constant 116 : i32
    %760 = tpu.dynamic_rotate %256 by %c116_i32_47 dim 1 : vector<8x128xf32>, i32 -> vector<8x128xf32>
    %761 = vector.broadcast %74 : f32 to vector<8x128xf32>
    %762 = arith.mulf %761, %760 : vector<8x128xf32>
    %763 = arith.addf %753, %762 : vector<8x128xf32>
    %764 = vector.broadcast %155 : f32 to vector<8x128xf32>
    %765 = arith.mulf %764, %760 : vector<8x128xf32>
    %766 = arith.addf %756, %765 : vector<8x128xf32>
    %767 = vector.broadcast %236 : f32 to vector<8x128xf32>
    %768 = arith.mulf %767, %760 : vector<8x128xf32>
    %769 = arith.addf %759, %768 : vector<8x128xf32>
    %c116_i32_48 = arith.constant 116 : i32
    %770 = tpu.dynamic_rotate %257 by %c116_i32_48 dim 1 : vector<8x128xf32>, i32 -> vector<8x128xf32>
    %771 = vector.broadcast %83 : f32 to vector<8x128xf32>
    %772 = arith.mulf %771, %770 : vector<8x128xf32>
    %773 = arith.addf %763, %772 : vector<8x128xf32>
    %774 = vector.broadcast %164 : f32 to vector<8x128xf32>
    %775 = arith.mulf %774, %770 : vector<8x128xf32>
    %776 = arith.addf %766, %775 : vector<8x128xf32>
    %777 = vector.broadcast %245 : f32 to vector<8x128xf32>
    %778 = arith.mulf %777, %770 : vector<8x128xf32>
    %779 = arith.addf %769, %778 : vector<8x128xf32>
    %c108_i32 = arith.constant 108 : i32
    %780 = tpu.dynamic_rotate %249 by %c108_i32 dim 1 : vector<8x128xf32>, i32 -> vector<8x128xf32>
    %781 = vector.broadcast %12 : f32 to vector<8x128xf32>
    %782 = arith.mulf %781, %780 : vector<8x128xf32>
    %783 = arith.addf %713, %782 : vector<8x128xf32>
    %784 = vector.broadcast %93 : f32 to vector<8x128xf32>
    %785 = arith.mulf %784, %780 : vector<8x128xf32>
    %786 = arith.addf %716, %785 : vector<8x128xf32>
    %787 = vector.broadcast %174 : f32 to vector<8x128xf32>
    %788 = arith.mulf %787, %780 : vector<8x128xf32>
    %789 = arith.addf %719, %788 : vector<8x128xf32>
    %c108_i32_49 = arith.constant 108 : i32
    %790 = tpu.dynamic_rotate %250 by %c108_i32_49 dim 1 : vector<8x128xf32>, i32 -> vector<8x128xf32>
    %791 = vector.broadcast %21 : f32 to vector<8x128xf32>
    %792 = arith.mulf %791, %790 : vector<8x128xf32>
    %793 = arith.addf %783, %792 : vector<8x128xf32>
    %794 = vector.broadcast %102 : f32 to vector<8x128xf32>
    %795 = arith.mulf %794, %790 : vector<8x128xf32>
    %796 = arith.addf %786, %795 : vector<8x128xf32>
    %797 = vector.broadcast %183 : f32 to vector<8x128xf32>
    %798 = arith.mulf %797, %790 : vector<8x128xf32>
    %799 = arith.addf %789, %798 : vector<8x128xf32>
    %c108_i32_50 = arith.constant 108 : i32
    %800 = tpu.dynamic_rotate %251 by %c108_i32_50 dim 1 : vector<8x128xf32>, i32 -> vector<8x128xf32>
    %801 = vector.broadcast %30 : f32 to vector<8x128xf32>
    %802 = arith.mulf %801, %800 : vector<8x128xf32>
    %803 = arith.addf %793, %802 : vector<8x128xf32>
    %804 = vector.broadcast %111 : f32 to vector<8x128xf32>
    %805 = arith.mulf %804, %800 : vector<8x128xf32>
    %806 = arith.addf %796, %805 : vector<8x128xf32>
    %807 = vector.broadcast %192 : f32 to vector<8x128xf32>
    %808 = arith.mulf %807, %800 : vector<8x128xf32>
    %809 = arith.addf %799, %808 : vector<8x128xf32>
    %c108_i32_51 = arith.constant 108 : i32
    %810 = tpu.dynamic_rotate %252 by %c108_i32_51 dim 1 : vector<8x128xf32>, i32 -> vector<8x128xf32>
    %811 = vector.broadcast %39 : f32 to vector<8x128xf32>
    %812 = arith.mulf %811, %810 : vector<8x128xf32>
    %813 = arith.addf %743, %812 : vector<8x128xf32>
    %814 = vector.broadcast %120 : f32 to vector<8x128xf32>
    %815 = arith.mulf %814, %810 : vector<8x128xf32>
    %816 = arith.addf %746, %815 : vector<8x128xf32>
    %817 = vector.broadcast %201 : f32 to vector<8x128xf32>
    %818 = arith.mulf %817, %810 : vector<8x128xf32>
    %819 = arith.addf %749, %818 : vector<8x128xf32>
    %c108_i32_52 = arith.constant 108 : i32
    %820 = tpu.dynamic_rotate %253 by %c108_i32_52 dim 1 : vector<8x128xf32>, i32 -> vector<8x128xf32>
    %821 = vector.broadcast %48 : f32 to vector<8x128xf32>
    %822 = arith.mulf %821, %820 : vector<8x128xf32>
    %823 = arith.addf %813, %822 : vector<8x128xf32>
    %824 = vector.broadcast %129 : f32 to vector<8x128xf32>
    %825 = arith.mulf %824, %820 : vector<8x128xf32>
    %826 = arith.addf %816, %825 : vector<8x128xf32>
    %827 = vector.broadcast %210 : f32 to vector<8x128xf32>
    %828 = arith.mulf %827, %820 : vector<8x128xf32>
    %829 = arith.addf %819, %828 : vector<8x128xf32>
    %c108_i32_53 = arith.constant 108 : i32
    %830 = tpu.dynamic_rotate %254 by %c108_i32_53 dim 1 : vector<8x128xf32>, i32 -> vector<8x128xf32>
    %831 = vector.broadcast %57 : f32 to vector<8x128xf32>
    %832 = arith.mulf %831, %830 : vector<8x128xf32>
    %833 = arith.addf %823, %832 : vector<8x128xf32>
    %834 = vector.broadcast %138 : f32 to vector<8x128xf32>
    %835 = arith.mulf %834, %830 : vector<8x128xf32>
    %836 = arith.addf %826, %835 : vector<8x128xf32>
    %837 = vector.broadcast %219 : f32 to vector<8x128xf32>
    %838 = arith.mulf %837, %830 : vector<8x128xf32>
    %839 = arith.addf %829, %838 : vector<8x128xf32>
    %c108_i32_54 = arith.constant 108 : i32
    %840 = tpu.dynamic_rotate %255 by %c108_i32_54 dim 1 : vector<8x128xf32>, i32 -> vector<8x128xf32>
    %841 = vector.broadcast %66 : f32 to vector<8x128xf32>
    %842 = arith.mulf %841, %840 : vector<8x128xf32>
    %843 = arith.addf %773, %842 : vector<8x128xf32>
    %844 = vector.broadcast %147 : f32 to vector<8x128xf32>
    %845 = arith.mulf %844, %840 : vector<8x128xf32>
    %846 = arith.addf %776, %845 : vector<8x128xf32>
    %847 = vector.broadcast %228 : f32 to vector<8x128xf32>
    %848 = arith.mulf %847, %840 : vector<8x128xf32>
    %849 = arith.addf %779, %848 : vector<8x128xf32>
    %c108_i32_55 = arith.constant 108 : i32
    %850 = tpu.dynamic_rotate %256 by %c108_i32_55 dim 1 : vector<8x128xf32>, i32 -> vector<8x128xf32>
    %851 = vector.broadcast %75 : f32 to vector<8x128xf32>
    %852 = arith.mulf %851, %850 : vector<8x128xf32>
    %853 = arith.addf %843, %852 : vector<8x128xf32>
    %854 = vector.broadcast %156 : f32 to vector<8x128xf32>
    %855 = arith.mulf %854, %850 : vector<8x128xf32>
    %856 = arith.addf %846, %855 : vector<8x128xf32>
    %857 = vector.broadcast %237 : f32 to vector<8x128xf32>
    %858 = arith.mulf %857, %850 : vector<8x128xf32>
    %859 = arith.addf %849, %858 : vector<8x128xf32>
    %c108_i32_56 = arith.constant 108 : i32
    %860 = tpu.dynamic_rotate %257 by %c108_i32_56 dim 1 : vector<8x128xf32>, i32 -> vector<8x128xf32>
    %861 = vector.broadcast %84 : f32 to vector<8x128xf32>
    %862 = arith.mulf %861, %860 : vector<8x128xf32>
    %863 = arith.addf %853, %862 : vector<8x128xf32>
    %864 = vector.broadcast %165 : f32 to vector<8x128xf32>
    %865 = arith.mulf %864, %860 : vector<8x128xf32>
    %866 = arith.addf %856, %865 : vector<8x128xf32>
    %867 = vector.broadcast %246 : f32 to vector<8x128xf32>
    %868 = arith.mulf %867, %860 : vector<8x128xf32>
    %869 = arith.addf %859, %868 : vector<8x128xf32>
    %c107_i32 = arith.constant 107 : i32
    %870 = tpu.dynamic_rotate %249 by %c107_i32 dim 1 : vector<8x128xf32>, i32 -> vector<8x128xf32>
    %871 = vector.broadcast %13 : f32 to vector<8x128xf32>
    %872 = arith.mulf %871, %870 : vector<8x128xf32>
    %873 = arith.addf %803, %872 : vector<8x128xf32>
    %874 = vector.broadcast %94 : f32 to vector<8x128xf32>
    %875 = arith.mulf %874, %870 : vector<8x128xf32>
    %876 = arith.addf %806, %875 : vector<8x128xf32>
    %877 = vector.broadcast %175 : f32 to vector<8x128xf32>
    %878 = arith.mulf %877, %870 : vector<8x128xf32>
    %879 = arith.addf %809, %878 : vector<8x128xf32>
    %c107_i32_57 = arith.constant 107 : i32
    %880 = tpu.dynamic_rotate %250 by %c107_i32_57 dim 1 : vector<8x128xf32>, i32 -> vector<8x128xf32>
    %881 = vector.broadcast %22 : f32 to vector<8x128xf32>
    %882 = arith.mulf %881, %880 : vector<8x128xf32>
    %883 = arith.addf %873, %882 : vector<8x128xf32>
    %884 = vector.broadcast %103 : f32 to vector<8x128xf32>
    %885 = arith.mulf %884, %880 : vector<8x128xf32>
    %886 = arith.addf %876, %885 : vector<8x128xf32>
    %887 = vector.broadcast %184 : f32 to vector<8x128xf32>
    %888 = arith.mulf %887, %880 : vector<8x128xf32>
    %889 = arith.addf %879, %888 : vector<8x128xf32>
    %c107_i32_58 = arith.constant 107 : i32
    %890 = tpu.dynamic_rotate %251 by %c107_i32_58 dim 1 : vector<8x128xf32>, i32 -> vector<8x128xf32>
    %891 = vector.broadcast %31 : f32 to vector<8x128xf32>
    %892 = arith.mulf %891, %890 : vector<8x128xf32>
    %893 = arith.addf %883, %892 : vector<8x128xf32>
    %894 = vector.broadcast %112 : f32 to vector<8x128xf32>
    %895 = arith.mulf %894, %890 : vector<8x128xf32>
    %896 = arith.addf %886, %895 : vector<8x128xf32>
    %897 = vector.broadcast %193 : f32 to vector<8x128xf32>
    %898 = arith.mulf %897, %890 : vector<8x128xf32>
    %899 = arith.addf %889, %898 : vector<8x128xf32>
    %c107_i32_59 = arith.constant 107 : i32
    %900 = tpu.dynamic_rotate %252 by %c107_i32_59 dim 1 : vector<8x128xf32>, i32 -> vector<8x128xf32>
    %901 = vector.broadcast %40 : f32 to vector<8x128xf32>
    %902 = arith.mulf %901, %900 : vector<8x128xf32>
    %903 = arith.addf %833, %902 : vector<8x128xf32>
    %904 = vector.broadcast %121 : f32 to vector<8x128xf32>
    %905 = arith.mulf %904, %900 : vector<8x128xf32>
    %906 = arith.addf %836, %905 : vector<8x128xf32>
    %907 = vector.broadcast %202 : f32 to vector<8x128xf32>
    %908 = arith.mulf %907, %900 : vector<8x128xf32>
    %909 = arith.addf %839, %908 : vector<8x128xf32>
    %c107_i32_60 = arith.constant 107 : i32
    %910 = tpu.dynamic_rotate %253 by %c107_i32_60 dim 1 : vector<8x128xf32>, i32 -> vector<8x128xf32>
    %911 = vector.broadcast %49 : f32 to vector<8x128xf32>
    %912 = arith.mulf %911, %910 : vector<8x128xf32>
    %913 = arith.addf %903, %912 : vector<8x128xf32>
    %914 = vector.broadcast %130 : f32 to vector<8x128xf32>
    %915 = arith.mulf %914, %910 : vector<8x128xf32>
    %916 = arith.addf %906, %915 : vector<8x128xf32>
    %917 = vector.broadcast %211 : f32 to vector<8x128xf32>
    %918 = arith.mulf %917, %910 : vector<8x128xf32>
    %919 = arith.addf %909, %918 : vector<8x128xf32>
    %c107_i32_61 = arith.constant 107 : i32
    %920 = tpu.dynamic_rotate %254 by %c107_i32_61 dim 1 : vector<8x128xf32>, i32 -> vector<8x128xf32>
    %921 = vector.broadcast %58 : f32 to vector<8x128xf32>
    %922 = arith.mulf %921, %920 : vector<8x128xf32>
    %923 = arith.addf %913, %922 : vector<8x128xf32>
    %924 = vector.broadcast %139 : f32 to vector<8x128xf32>
    %925 = arith.mulf %924, %920 : vector<8x128xf32>
    %926 = arith.addf %916, %925 : vector<8x128xf32>
    %927 = vector.broadcast %220 : f32 to vector<8x128xf32>
    %928 = arith.mulf %927, %920 : vector<8x128xf32>
    %929 = arith.addf %919, %928 : vector<8x128xf32>
    %c107_i32_62 = arith.constant 107 : i32
    %930 = tpu.dynamic_rotate %255 by %c107_i32_62 dim 1 : vector<8x128xf32>, i32 -> vector<8x128xf32>
    %931 = vector.broadcast %67 : f32 to vector<8x128xf32>
    %932 = arith.mulf %931, %930 : vector<8x128xf32>
    %933 = arith.addf %863, %932 : vector<8x128xf32>
    %934 = vector.broadcast %148 : f32 to vector<8x128xf32>
    %935 = arith.mulf %934, %930 : vector<8x128xf32>
    %936 = arith.addf %866, %935 : vector<8x128xf32>
    %937 = vector.broadcast %229 : f32 to vector<8x128xf32>
    %938 = arith.mulf %937, %930 : vector<8x128xf32>
    %939 = arith.addf %869, %938 : vector<8x128xf32>
    %c107_i32_63 = arith.constant 107 : i32
    %940 = tpu.dynamic_rotate %256 by %c107_i32_63 dim 1 : vector<8x128xf32>, i32 -> vector<8x128xf32>
    %941 = vector.broadcast %76 : f32 to vector<8x128xf32>
    %942 = arith.mulf %941, %940 : vector<8x128xf32>
    %943 = arith.addf %933, %942 : vector<8x128xf32>
    %944 = vector.broadcast %157 : f32 to vector<8x128xf32>
    %945 = arith.mulf %944, %940 : vector<8x128xf32>
    %946 = arith.addf %936, %945 : vector<8x128xf32>
    %947 = vector.broadcast %238 : f32 to vector<8x128xf32>
    %948 = arith.mulf %947, %940 : vector<8x128xf32>
    %949 = arith.addf %939, %948 : vector<8x128xf32>
    %c107_i32_64 = arith.constant 107 : i32
    %950 = tpu.dynamic_rotate %257 by %c107_i32_64 dim 1 : vector<8x128xf32>, i32 -> vector<8x128xf32>
    %951 = vector.broadcast %85 : f32 to vector<8x128xf32>
    %952 = arith.mulf %951, %950 : vector<8x128xf32>
    %953 = arith.addf %943, %952 : vector<8x128xf32>
    %954 = vector.broadcast %166 : f32 to vector<8x128xf32>
    %955 = arith.mulf %954, %950 : vector<8x128xf32>
    %956 = arith.addf %946, %955 : vector<8x128xf32>
    %957 = vector.broadcast %247 : f32 to vector<8x128xf32>
    %958 = arith.mulf %957, %950 : vector<8x128xf32>
    %959 = arith.addf %949, %958 : vector<8x128xf32>
    %c106_i32 = arith.constant 106 : i32
    %960 = tpu.dynamic_rotate %249 by %c106_i32 dim 1 : vector<8x128xf32>, i32 -> vector<8x128xf32>
    %961 = vector.broadcast %14 : f32 to vector<8x128xf32>
    %962 = arith.mulf %961, %960 : vector<8x128xf32>
    %963 = arith.addf %893, %962 : vector<8x128xf32>
    %964 = vector.broadcast %95 : f32 to vector<8x128xf32>
    %965 = arith.mulf %964, %960 : vector<8x128xf32>
    %966 = arith.addf %896, %965 : vector<8x128xf32>
    %967 = vector.broadcast %176 : f32 to vector<8x128xf32>
    %968 = arith.mulf %967, %960 : vector<8x128xf32>
    %969 = arith.addf %899, %968 : vector<8x128xf32>
    %c106_i32_65 = arith.constant 106 : i32
    %970 = tpu.dynamic_rotate %250 by %c106_i32_65 dim 1 : vector<8x128xf32>, i32 -> vector<8x128xf32>
    %971 = vector.broadcast %23 : f32 to vector<8x128xf32>
    %972 = arith.mulf %971, %970 : vector<8x128xf32>
    %973 = arith.addf %963, %972 : vector<8x128xf32>
    %974 = vector.broadcast %104 : f32 to vector<8x128xf32>
    %975 = arith.mulf %974, %970 : vector<8x128xf32>
    %976 = arith.addf %966, %975 : vector<8x128xf32>
    %977 = vector.broadcast %185 : f32 to vector<8x128xf32>
    %978 = arith.mulf %977, %970 : vector<8x128xf32>
    %979 = arith.addf %969, %978 : vector<8x128xf32>
    %c106_i32_66 = arith.constant 106 : i32
    %980 = tpu.dynamic_rotate %251 by %c106_i32_66 dim 1 : vector<8x128xf32>, i32 -> vector<8x128xf32>
    %981 = vector.broadcast %32 : f32 to vector<8x128xf32>
    %982 = arith.mulf %981, %980 : vector<8x128xf32>
    %983 = arith.addf %973, %982 : vector<8x128xf32>
    %984 = vector.broadcast %113 : f32 to vector<8x128xf32>
    %985 = arith.mulf %984, %980 : vector<8x128xf32>
    %986 = arith.addf %976, %985 : vector<8x128xf32>
    %987 = vector.broadcast %194 : f32 to vector<8x128xf32>
    %988 = arith.mulf %987, %980 : vector<8x128xf32>
    %989 = arith.addf %979, %988 : vector<8x128xf32>
    %c106_i32_67 = arith.constant 106 : i32
    %990 = tpu.dynamic_rotate %252 by %c106_i32_67 dim 1 : vector<8x128xf32>, i32 -> vector<8x128xf32>
    %991 = vector.broadcast %41 : f32 to vector<8x128xf32>
    %992 = arith.mulf %991, %990 : vector<8x128xf32>
    %993 = arith.addf %923, %992 : vector<8x128xf32>
    %994 = vector.broadcast %122 : f32 to vector<8x128xf32>
    %995 = arith.mulf %994, %990 : vector<8x128xf32>
    %996 = arith.addf %926, %995 : vector<8x128xf32>
    %997 = vector.broadcast %203 : f32 to vector<8x128xf32>
    %998 = arith.mulf %997, %990 : vector<8x128xf32>
    %999 = arith.addf %929, %998 : vector<8x128xf32>
    %c106_i32_68 = arith.constant 106 : i32
    %1000 = tpu.dynamic_rotate %253 by %c106_i32_68 dim 1 : vector<8x128xf32>, i32 -> vector<8x128xf32>
    %1001 = vector.broadcast %50 : f32 to vector<8x128xf32>
    %1002 = arith.mulf %1001, %1000 : vector<8x128xf32>
    %1003 = arith.addf %993, %1002 : vector<8x128xf32>
    %1004 = vector.broadcast %131 : f32 to vector<8x128xf32>
    %1005 = arith.mulf %1004, %1000 : vector<8x128xf32>
    %1006 = arith.addf %996, %1005 : vector<8x128xf32>
    %1007 = vector.broadcast %212 : f32 to vector<8x128xf32>
    %1008 = arith.mulf %1007, %1000 : vector<8x128xf32>
    %1009 = arith.addf %999, %1008 : vector<8x128xf32>
    %c106_i32_69 = arith.constant 106 : i32
    %1010 = tpu.dynamic_rotate %254 by %c106_i32_69 dim 1 : vector<8x128xf32>, i32 -> vector<8x128xf32>
    %1011 = vector.broadcast %59 : f32 to vector<8x128xf32>
    %1012 = arith.mulf %1011, %1010 : vector<8x128xf32>
    %1013 = arith.addf %1003, %1012 : vector<8x128xf32>
    %1014 = vector.broadcast %140 : f32 to vector<8x128xf32>
    %1015 = arith.mulf %1014, %1010 : vector<8x128xf32>
    %1016 = arith.addf %1006, %1015 : vector<8x128xf32>
    %1017 = vector.broadcast %221 : f32 to vector<8x128xf32>
    %1018 = arith.mulf %1017, %1010 : vector<8x128xf32>
    %1019 = arith.addf %1009, %1018 : vector<8x128xf32>
    %c106_i32_70 = arith.constant 106 : i32
    %1020 = tpu.dynamic_rotate %255 by %c106_i32_70 dim 1 : vector<8x128xf32>, i32 -> vector<8x128xf32>
    %1021 = vector.broadcast %68 : f32 to vector<8x128xf32>
    %1022 = arith.mulf %1021, %1020 : vector<8x128xf32>
    %1023 = arith.addf %953, %1022 : vector<8x128xf32>
    %1024 = vector.broadcast %149 : f32 to vector<8x128xf32>
    %1025 = arith.mulf %1024, %1020 : vector<8x128xf32>
    %1026 = arith.addf %956, %1025 : vector<8x128xf32>
    %1027 = vector.broadcast %230 : f32 to vector<8x128xf32>
    %1028 = arith.mulf %1027, %1020 : vector<8x128xf32>
    %1029 = arith.addf %959, %1028 : vector<8x128xf32>
    %c106_i32_71 = arith.constant 106 : i32
    %1030 = tpu.dynamic_rotate %256 by %c106_i32_71 dim 1 : vector<8x128xf32>, i32 -> vector<8x128xf32>
    %1031 = vector.broadcast %77 : f32 to vector<8x128xf32>
    %1032 = arith.mulf %1031, %1030 : vector<8x128xf32>
    %1033 = arith.addf %1023, %1032 : vector<8x128xf32>
    %1034 = vector.broadcast %158 : f32 to vector<8x128xf32>
    %1035 = arith.mulf %1034, %1030 : vector<8x128xf32>
    %1036 = arith.addf %1026, %1035 : vector<8x128xf32>
    %1037 = vector.broadcast %239 : f32 to vector<8x128xf32>
    %1038 = arith.mulf %1037, %1030 : vector<8x128xf32>
    %1039 = arith.addf %1029, %1038 : vector<8x128xf32>
    %c106_i32_72 = arith.constant 106 : i32
    %1040 = tpu.dynamic_rotate %257 by %c106_i32_72 dim 1 : vector<8x128xf32>, i32 -> vector<8x128xf32>
    %1041 = vector.broadcast %86 : f32 to vector<8x128xf32>
    %1042 = arith.mulf %1041, %1040 : vector<8x128xf32>
    %1043 = arith.addf %1033, %1042 : vector<8x128xf32>
    %1044 = vector.broadcast %167 : f32 to vector<8x128xf32>
    %1045 = arith.mulf %1044, %1040 : vector<8x128xf32>
    %1046 = arith.addf %1036, %1045 : vector<8x128xf32>
    %1047 = vector.broadcast %248 : f32 to vector<8x128xf32>
    %1048 = arith.mulf %1047, %1040 : vector<8x128xf32>
    %1049 = arith.addf %1039, %1048 : vector<8x128xf32>
    %1050 = arith.addf %983, %1013 : vector<8x128xf32>
    %1051 = arith.addf %1050, %1043 : vector<8x128xf32>
    %c0_73 = arith.constant 0 : index
    %1052 = memref.load %arg2[%c0_73] : memref<3xf32, #tpu.memory_space<smem>>
    %1053 = vector.broadcast %1052 : f32 to vector<8x128xf32>
    %1054 = arith.addf %1051, %1053 : vector<8x128xf32>
    %cst = arith.constant 0.000000e+00 : f32
    %1055 = vector.broadcast %cst : f32 to vector<8x128xf32>
    %1056 = arith.maximumf %1054, %1055 : vector<8x128xf32>
    %1057 = arith.addf %986, %1016 : vector<8x128xf32>
    %1058 = arith.addf %1057, %1046 : vector<8x128xf32>
    %c1_74 = arith.constant 1 : index
    %1059 = memref.load %arg2[%c1_74] : memref<3xf32, #tpu.memory_space<smem>>
    %1060 = vector.broadcast %1059 : f32 to vector<8x128xf32>
    %1061 = arith.addf %1058, %1060 : vector<8x128xf32>
    %cst_75 = arith.constant 0.000000e+00 : f32
    %1062 = vector.broadcast %cst_75 : f32 to vector<8x128xf32>
    %1063 = arith.maximumf %1061, %1062 : vector<8x128xf32>
    %1064 = arith.addf %989, %1019 : vector<8x128xf32>
    %1065 = arith.addf %1064, %1049 : vector<8x128xf32>
    %c2_76 = arith.constant 2 : index
    %1066 = memref.load %arg2[%c2_76] : memref<3xf32, #tpu.memory_space<smem>>
    %1067 = vector.broadcast %1066 : f32 to vector<8x128xf32>
    %1068 = arith.addf %1065, %1067 : vector<8x128xf32>
    %cst_77 = arith.constant 0.000000e+00 : f32
    %1069 = vector.broadcast %cst_77 : f32 to vector<8x128xf32>
    %1070 = arith.maximumf %1068, %1069 : vector<8x128xf32>
    %c0_78 = arith.constant 0 : index
    %1071 = memref.load %arg3[%c0_78] : memref<243xf32, #tpu.memory_space<smem>>
    %c1_79 = arith.constant 1 : index
    %1072 = memref.load %arg3[%c1_79] : memref<243xf32, #tpu.memory_space<smem>>
    %c2_80 = arith.constant 2 : index
    %1073 = memref.load %arg3[%c2_80] : memref<243xf32, #tpu.memory_space<smem>>
    %c3_81 = arith.constant 3 : index
    %1074 = memref.load %arg3[%c3_81] : memref<243xf32, #tpu.memory_space<smem>>
    %c4_82 = arith.constant 4 : index
    %1075 = memref.load %arg3[%c4_82] : memref<243xf32, #tpu.memory_space<smem>>
    %c5_83 = arith.constant 5 : index
    %1076 = memref.load %arg3[%c5_83] : memref<243xf32, #tpu.memory_space<smem>>
    %c6_84 = arith.constant 6 : index
    %1077 = memref.load %arg3[%c6_84] : memref<243xf32, #tpu.memory_space<smem>>
    %c7_85 = arith.constant 7 : index
    %1078 = memref.load %arg3[%c7_85] : memref<243xf32, #tpu.memory_space<smem>>
    %c8_86 = arith.constant 8 : index
    %1079 = memref.load %arg3[%c8_86] : memref<243xf32, #tpu.memory_space<smem>>
    %c9_87 = arith.constant 9 : index
    %1080 = memref.load %arg3[%c9_87] : memref<243xf32, #tpu.memory_space<smem>>
    %c10_88 = arith.constant 10 : index
    %1081 = memref.load %arg3[%c10_88] : memref<243xf32, #tpu.memory_space<smem>>
    %c11_89 = arith.constant 11 : index
    %1082 = memref.load %arg3[%c11_89] : memref<243xf32, #tpu.memory_space<smem>>
    %c12_90 = arith.constant 12 : index
    %1083 = memref.load %arg3[%c12_90] : memref<243xf32, #tpu.memory_space<smem>>
    %c13_91 = arith.constant 13 : index
    %1084 = memref.load %arg3[%c13_91] : memref<243xf32, #tpu.memory_space<smem>>
    %c14_92 = arith.constant 14 : index
    %1085 = memref.load %arg3[%c14_92] : memref<243xf32, #tpu.memory_space<smem>>
    %c15_93 = arith.constant 15 : index
    %1086 = memref.load %arg3[%c15_93] : memref<243xf32, #tpu.memory_space<smem>>
    %c16_94 = arith.constant 16 : index
    %1087 = memref.load %arg3[%c16_94] : memref<243xf32, #tpu.memory_space<smem>>
    %c17_95 = arith.constant 17 : index
    %1088 = memref.load %arg3[%c17_95] : memref<243xf32, #tpu.memory_space<smem>>
    %c18_96 = arith.constant 18 : index
    %1089 = memref.load %arg3[%c18_96] : memref<243xf32, #tpu.memory_space<smem>>
    %c19_97 = arith.constant 19 : index
    %1090 = memref.load %arg3[%c19_97] : memref<243xf32, #tpu.memory_space<smem>>
    %c20_98 = arith.constant 20 : index
    %1091 = memref.load %arg3[%c20_98] : memref<243xf32, #tpu.memory_space<smem>>
    %c21_99 = arith.constant 21 : index
    %1092 = memref.load %arg3[%c21_99] : memref<243xf32, #tpu.memory_space<smem>>
    %c22_100 = arith.constant 22 : index
    %1093 = memref.load %arg3[%c22_100] : memref<243xf32, #tpu.memory_space<smem>>
    %c23_101 = arith.constant 23 : index
    %1094 = memref.load %arg3[%c23_101] : memref<243xf32, #tpu.memory_space<smem>>
    %c24_102 = arith.constant 24 : index
    %1095 = memref.load %arg3[%c24_102] : memref<243xf32, #tpu.memory_space<smem>>
    %c25_103 = arith.constant 25 : index
    %1096 = memref.load %arg3[%c25_103] : memref<243xf32, #tpu.memory_space<smem>>
    %c26_104 = arith.constant 26 : index
    %1097 = memref.load %arg3[%c26_104] : memref<243xf32, #tpu.memory_space<smem>>
    %c27_105 = arith.constant 27 : index
    %1098 = memref.load %arg3[%c27_105] : memref<243xf32, #tpu.memory_space<smem>>
    %c28_106 = arith.constant 28 : index
    %1099 = memref.load %arg3[%c28_106] : memref<243xf32, #tpu.memory_space<smem>>
    %c29_107 = arith.constant 29 : index
    %1100 = memref.load %arg3[%c29_107] : memref<243xf32, #tpu.memory_space<smem>>
    %c30_108 = arith.constant 30 : index
    %1101 = memref.load %arg3[%c30_108] : memref<243xf32, #tpu.memory_space<smem>>
    %c31_109 = arith.constant 31 : index
    %1102 = memref.load %arg3[%c31_109] : memref<243xf32, #tpu.memory_space<smem>>
    %c32_110 = arith.constant 32 : index
    %1103 = memref.load %arg3[%c32_110] : memref<243xf32, #tpu.memory_space<smem>>
    %c33_111 = arith.constant 33 : index
    %1104 = memref.load %arg3[%c33_111] : memref<243xf32, #tpu.memory_space<smem>>
    %c34_112 = arith.constant 34 : index
    %1105 = memref.load %arg3[%c34_112] : memref<243xf32, #tpu.memory_space<smem>>
    %c35_113 = arith.constant 35 : index
    %1106 = memref.load %arg3[%c35_113] : memref<243xf32, #tpu.memory_space<smem>>
    %c36_114 = arith.constant 36 : index
    %1107 = memref.load %arg3[%c36_114] : memref<243xf32, #tpu.memory_space<smem>>
    %c37_115 = arith.constant 37 : index
    %1108 = memref.load %arg3[%c37_115] : memref<243xf32, #tpu.memory_space<smem>>
    %c38_116 = arith.constant 38 : index
    %1109 = memref.load %arg3[%c38_116] : memref<243xf32, #tpu.memory_space<smem>>
    %c39_117 = arith.constant 39 : index
    %1110 = memref.load %arg3[%c39_117] : memref<243xf32, #tpu.memory_space<smem>>
    %c40_118 = arith.constant 40 : index
    %1111 = memref.load %arg3[%c40_118] : memref<243xf32, #tpu.memory_space<smem>>
    %c41_119 = arith.constant 41 : index
    %1112 = memref.load %arg3[%c41_119] : memref<243xf32, #tpu.memory_space<smem>>
    %c42_120 = arith.constant 42 : index
    %1113 = memref.load %arg3[%c42_120] : memref<243xf32, #tpu.memory_space<smem>>
    %c43_121 = arith.constant 43 : index
    %1114 = memref.load %arg3[%c43_121] : memref<243xf32, #tpu.memory_space<smem>>
    %c44_122 = arith.constant 44 : index
    %1115 = memref.load %arg3[%c44_122] : memref<243xf32, #tpu.memory_space<smem>>
    %c45_123 = arith.constant 45 : index
    %1116 = memref.load %arg3[%c45_123] : memref<243xf32, #tpu.memory_space<smem>>
    %c46_124 = arith.constant 46 : index
    %1117 = memref.load %arg3[%c46_124] : memref<243xf32, #tpu.memory_space<smem>>
    %c47_125 = arith.constant 47 : index
    %1118 = memref.load %arg3[%c47_125] : memref<243xf32, #tpu.memory_space<smem>>
    %c48_126 = arith.constant 48 : index
    %1119 = memref.load %arg3[%c48_126] : memref<243xf32, #tpu.memory_space<smem>>
    %c49_127 = arith.constant 49 : index
    %1120 = memref.load %arg3[%c49_127] : memref<243xf32, #tpu.memory_space<smem>>
    %c50_128 = arith.constant 50 : index
    %1121 = memref.load %arg3[%c50_128] : memref<243xf32, #tpu.memory_space<smem>>
    %c51_129 = arith.constant 51 : index
    %1122 = memref.load %arg3[%c51_129] : memref<243xf32, #tpu.memory_space<smem>>
    %c52_130 = arith.constant 52 : index
    %1123 = memref.load %arg3[%c52_130] : memref<243xf32, #tpu.memory_space<smem>>
    %c53_131 = arith.constant 53 : index
    %1124 = memref.load %arg3[%c53_131] : memref<243xf32, #tpu.memory_space<smem>>
    %c54_132 = arith.constant 54 : index
    %1125 = memref.load %arg3[%c54_132] : memref<243xf32, #tpu.memory_space<smem>>
    %c55_133 = arith.constant 55 : index
    %1126 = memref.load %arg3[%c55_133] : memref<243xf32, #tpu.memory_space<smem>>
    %c56_134 = arith.constant 56 : index
    %1127 = memref.load %arg3[%c56_134] : memref<243xf32, #tpu.memory_space<smem>>
    %c57_135 = arith.constant 57 : index
    %1128 = memref.load %arg3[%c57_135] : memref<243xf32, #tpu.memory_space<smem>>
    %c58_136 = arith.constant 58 : index
    %1129 = memref.load %arg3[%c58_136] : memref<243xf32, #tpu.memory_space<smem>>
    %c59_137 = arith.constant 59 : index
    %1130 = memref.load %arg3[%c59_137] : memref<243xf32, #tpu.memory_space<smem>>
    %c60_138 = arith.constant 60 : index
    %1131 = memref.load %arg3[%c60_138] : memref<243xf32, #tpu.memory_space<smem>>
    %c61_139 = arith.constant 61 : index
    %1132 = memref.load %arg3[%c61_139] : memref<243xf32, #tpu.memory_space<smem>>
    %c62_140 = arith.constant 62 : index
    %1133 = memref.load %arg3[%c62_140] : memref<243xf32, #tpu.memory_space<smem>>
    %c63_141 = arith.constant 63 : index
    %1134 = memref.load %arg3[%c63_141] : memref<243xf32, #tpu.memory_space<smem>>
    %c64_142 = arith.constant 64 : index
    %1135 = memref.load %arg3[%c64_142] : memref<243xf32, #tpu.memory_space<smem>>
    %c65_143 = arith.constant 65 : index
    %1136 = memref.load %arg3[%c65_143] : memref<243xf32, #tpu.memory_space<smem>>
    %c66_144 = arith.constant 66 : index
    %1137 = memref.load %arg3[%c66_144] : memref<243xf32, #tpu.memory_space<smem>>
    %c67_145 = arith.constant 67 : index
    %1138 = memref.load %arg3[%c67_145] : memref<243xf32, #tpu.memory_space<smem>>
    %c68_146 = arith.constant 68 : index
    %1139 = memref.load %arg3[%c68_146] : memref<243xf32, #tpu.memory_space<smem>>
    %c69_147 = arith.constant 69 : index
    %1140 = memref.load %arg3[%c69_147] : memref<243xf32, #tpu.memory_space<smem>>
    %c70_148 = arith.constant 70 : index
    %1141 = memref.load %arg3[%c70_148] : memref<243xf32, #tpu.memory_space<smem>>
    %c71_149 = arith.constant 71 : index
    %1142 = memref.load %arg3[%c71_149] : memref<243xf32, #tpu.memory_space<smem>>
    %c72_150 = arith.constant 72 : index
    %1143 = memref.load %arg3[%c72_150] : memref<243xf32, #tpu.memory_space<smem>>
    %c73_151 = arith.constant 73 : index
    %1144 = memref.load %arg3[%c73_151] : memref<243xf32, #tpu.memory_space<smem>>
    %c74_152 = arith.constant 74 : index
    %1145 = memref.load %arg3[%c74_152] : memref<243xf32, #tpu.memory_space<smem>>
    %c75_153 = arith.constant 75 : index
    %1146 = memref.load %arg3[%c75_153] : memref<243xf32, #tpu.memory_space<smem>>
    %c76_154 = arith.constant 76 : index
    %1147 = memref.load %arg3[%c76_154] : memref<243xf32, #tpu.memory_space<smem>>
    %c77_155 = arith.constant 77 : index
    %1148 = memref.load %arg3[%c77_155] : memref<243xf32, #tpu.memory_space<smem>>
    %c78_156 = arith.constant 78 : index
    %1149 = memref.load %arg3[%c78_156] : memref<243xf32, #tpu.memory_space<smem>>
    %c79_157 = arith.constant 79 : index
    %1150 = memref.load %arg3[%c79_157] : memref<243xf32, #tpu.memory_space<smem>>
    %c80_158 = arith.constant 80 : index
    %1151 = memref.load %arg3[%c80_158] : memref<243xf32, #tpu.memory_space<smem>>
    %c81_159 = arith.constant 81 : index
    %1152 = memref.load %arg3[%c81_159] : memref<243xf32, #tpu.memory_space<smem>>
    %c82_160 = arith.constant 82 : index
    %1153 = memref.load %arg3[%c82_160] : memref<243xf32, #tpu.memory_space<smem>>
    %c83_161 = arith.constant 83 : index
    %1154 = memref.load %arg3[%c83_161] : memref<243xf32, #tpu.memory_space<smem>>
    %c84_162 = arith.constant 84 : index
    %1155 = memref.load %arg3[%c84_162] : memref<243xf32, #tpu.memory_space<smem>>
    %c85_163 = arith.constant 85 : index
    %1156 = memref.load %arg3[%c85_163] : memref<243xf32, #tpu.memory_space<smem>>
    %c86_164 = arith.constant 86 : index
    %1157 = memref.load %arg3[%c86_164] : memref<243xf32, #tpu.memory_space<smem>>
    %c87_165 = arith.constant 87 : index
    %1158 = memref.load %arg3[%c87_165] : memref<243xf32, #tpu.memory_space<smem>>
    %c88_166 = arith.constant 88 : index
    %1159 = memref.load %arg3[%c88_166] : memref<243xf32, #tpu.memory_space<smem>>
    %c89_167 = arith.constant 89 : index
    %1160 = memref.load %arg3[%c89_167] : memref<243xf32, #tpu.memory_space<smem>>
    %c90_168 = arith.constant 90 : index
    %1161 = memref.load %arg3[%c90_168] : memref<243xf32, #tpu.memory_space<smem>>
    %c91_169 = arith.constant 91 : index
    %1162 = memref.load %arg3[%c91_169] : memref<243xf32, #tpu.memory_space<smem>>
    %c92_170 = arith.constant 92 : index
    %1163 = memref.load %arg3[%c92_170] : memref<243xf32, #tpu.memory_space<smem>>
    %c93_171 = arith.constant 93 : index
    %1164 = memref.load %arg3[%c93_171] : memref<243xf32, #tpu.memory_space<smem>>
    %c94_172 = arith.constant 94 : index
    %1165 = memref.load %arg3[%c94_172] : memref<243xf32, #tpu.memory_space<smem>>
    %c95_173 = arith.constant 95 : index
    %1166 = memref.load %arg3[%c95_173] : memref<243xf32, #tpu.memory_space<smem>>
    %c96_174 = arith.constant 96 : index
    %1167 = memref.load %arg3[%c96_174] : memref<243xf32, #tpu.memory_space<smem>>
    %c97_175 = arith.constant 97 : index
    %1168 = memref.load %arg3[%c97_175] : memref<243xf32, #tpu.memory_space<smem>>
    %c98_176 = arith.constant 98 : index
    %1169 = memref.load %arg3[%c98_176] : memref<243xf32, #tpu.memory_space<smem>>
    %c99_177 = arith.constant 99 : index
    %1170 = memref.load %arg3[%c99_177] : memref<243xf32, #tpu.memory_space<smem>>
    %c100_178 = arith.constant 100 : index
    %1171 = memref.load %arg3[%c100_178] : memref<243xf32, #tpu.memory_space<smem>>
    %c101_179 = arith.constant 101 : index
    %1172 = memref.load %arg3[%c101_179] : memref<243xf32, #tpu.memory_space<smem>>
    %c102_180 = arith.constant 102 : index
    %1173 = memref.load %arg3[%c102_180] : memref<243xf32, #tpu.memory_space<smem>>
    %c103_181 = arith.constant 103 : index
    %1174 = memref.load %arg3[%c103_181] : memref<243xf32, #tpu.memory_space<smem>>
    %c104_182 = arith.constant 104 : index
    %1175 = memref.load %arg3[%c104_182] : memref<243xf32, #tpu.memory_space<smem>>
    %c105_183 = arith.constant 105 : index
    %1176 = memref.load %arg3[%c105_183] : memref<243xf32, #tpu.memory_space<smem>>
    %c106_184 = arith.constant 106 : index
    %1177 = memref.load %arg3[%c106_184] : memref<243xf32, #tpu.memory_space<smem>>
    %c107_185 = arith.constant 107 : index
    %1178 = memref.load %arg3[%c107_185] : memref<243xf32, #tpu.memory_space<smem>>
    %c108_186 = arith.constant 108 : index
    %1179 = memref.load %arg3[%c108_186] : memref<243xf32, #tpu.memory_space<smem>>
    %c109_187 = arith.constant 109 : index
    %1180 = memref.load %arg3[%c109_187] : memref<243xf32, #tpu.memory_space<smem>>
    %c110_188 = arith.constant 110 : index
    %1181 = memref.load %arg3[%c110_188] : memref<243xf32, #tpu.memory_space<smem>>
    %c111_189 = arith.constant 111 : index
    %1182 = memref.load %arg3[%c111_189] : memref<243xf32, #tpu.memory_space<smem>>
    %c112_190 = arith.constant 112 : index
    %1183 = memref.load %arg3[%c112_190] : memref<243xf32, #tpu.memory_space<smem>>
    %c113_191 = arith.constant 113 : index
    %1184 = memref.load %arg3[%c113_191] : memref<243xf32, #tpu.memory_space<smem>>
    %c114_192 = arith.constant 114 : index
    %1185 = memref.load %arg3[%c114_192] : memref<243xf32, #tpu.memory_space<smem>>
    %c115_193 = arith.constant 115 : index
    %1186 = memref.load %arg3[%c115_193] : memref<243xf32, #tpu.memory_space<smem>>
    %c116_194 = arith.constant 116 : index
    %1187 = memref.load %arg3[%c116_194] : memref<243xf32, #tpu.memory_space<smem>>
    %c117_195 = arith.constant 117 : index
    %1188 = memref.load %arg3[%c117_195] : memref<243xf32, #tpu.memory_space<smem>>
    %c118_196 = arith.constant 118 : index
    %1189 = memref.load %arg3[%c118_196] : memref<243xf32, #tpu.memory_space<smem>>
    %c119_197 = arith.constant 119 : index
    %1190 = memref.load %arg3[%c119_197] : memref<243xf32, #tpu.memory_space<smem>>
    %c120_198 = arith.constant 120 : index
    %1191 = memref.load %arg3[%c120_198] : memref<243xf32, #tpu.memory_space<smem>>
    %c121_199 = arith.constant 121 : index
    %1192 = memref.load %arg3[%c121_199] : memref<243xf32, #tpu.memory_space<smem>>
    %c122_200 = arith.constant 122 : index
    %1193 = memref.load %arg3[%c122_200] : memref<243xf32, #tpu.memory_space<smem>>
    %c123_201 = arith.constant 123 : index
    %1194 = memref.load %arg3[%c123_201] : memref<243xf32, #tpu.memory_space<smem>>
    %c124_202 = arith.constant 124 : index
    %1195 = memref.load %arg3[%c124_202] : memref<243xf32, #tpu.memory_space<smem>>
    %c125_203 = arith.constant 125 : index
    %1196 = memref.load %arg3[%c125_203] : memref<243xf32, #tpu.memory_space<smem>>
    %c126_204 = arith.constant 126 : index
    %1197 = memref.load %arg3[%c126_204] : memref<243xf32, #tpu.memory_space<smem>>
    %c127_205 = arith.constant 127 : index
    %1198 = memref.load %arg3[%c127_205] : memref<243xf32, #tpu.memory_space<smem>>
    %c128_206 = arith.constant 128 : index
    %1199 = memref.load %arg3[%c128_206] : memref<243xf32, #tpu.memory_space<smem>>
    %c129_207 = arith.constant 129 : index
    %1200 = memref.load %arg3[%c129_207] : memref<243xf32, #tpu.memory_space<smem>>
    %c130_208 = arith.constant 130 : index
    %1201 = memref.load %arg3[%c130_208] : memref<243xf32, #tpu.memory_space<smem>>
    %c131_209 = arith.constant 131 : index
    %1202 = memref.load %arg3[%c131_209] : memref<243xf32, #tpu.memory_space<smem>>
    %c132_210 = arith.constant 132 : index
    %1203 = memref.load %arg3[%c132_210] : memref<243xf32, #tpu.memory_space<smem>>
    %c133_211 = arith.constant 133 : index
    %1204 = memref.load %arg3[%c133_211] : memref<243xf32, #tpu.memory_space<smem>>
    %c134_212 = arith.constant 134 : index
    %1205 = memref.load %arg3[%c134_212] : memref<243xf32, #tpu.memory_space<smem>>
    %c135_213 = arith.constant 135 : index
    %1206 = memref.load %arg3[%c135_213] : memref<243xf32, #tpu.memory_space<smem>>
    %c136_214 = arith.constant 136 : index
    %1207 = memref.load %arg3[%c136_214] : memref<243xf32, #tpu.memory_space<smem>>
    %c137_215 = arith.constant 137 : index
    %1208 = memref.load %arg3[%c137_215] : memref<243xf32, #tpu.memory_space<smem>>
    %c138_216 = arith.constant 138 : index
    %1209 = memref.load %arg3[%c138_216] : memref<243xf32, #tpu.memory_space<smem>>
    %c139_217 = arith.constant 139 : index
    %1210 = memref.load %arg3[%c139_217] : memref<243xf32, #tpu.memory_space<smem>>
    %c140_218 = arith.constant 140 : index
    %1211 = memref.load %arg3[%c140_218] : memref<243xf32, #tpu.memory_space<smem>>
    %c141_219 = arith.constant 141 : index
    %1212 = memref.load %arg3[%c141_219] : memref<243xf32, #tpu.memory_space<smem>>
    %c142_220 = arith.constant 142 : index
    %1213 = memref.load %arg3[%c142_220] : memref<243xf32, #tpu.memory_space<smem>>
    %c143_221 = arith.constant 143 : index
    %1214 = memref.load %arg3[%c143_221] : memref<243xf32, #tpu.memory_space<smem>>
    %c144_222 = arith.constant 144 : index
    %1215 = memref.load %arg3[%c144_222] : memref<243xf32, #tpu.memory_space<smem>>
    %c145_223 = arith.constant 145 : index
    %1216 = memref.load %arg3[%c145_223] : memref<243xf32, #tpu.memory_space<smem>>
    %c146_224 = arith.constant 146 : index
    %1217 = memref.load %arg3[%c146_224] : memref<243xf32, #tpu.memory_space<smem>>
    %c147_225 = arith.constant 147 : index
    %1218 = memref.load %arg3[%c147_225] : memref<243xf32, #tpu.memory_space<smem>>
    %c148_226 = arith.constant 148 : index
    %1219 = memref.load %arg3[%c148_226] : memref<243xf32, #tpu.memory_space<smem>>
    %c149_227 = arith.constant 149 : index
    %1220 = memref.load %arg3[%c149_227] : memref<243xf32, #tpu.memory_space<smem>>
    %c150_228 = arith.constant 150 : index
    %1221 = memref.load %arg3[%c150_228] : memref<243xf32, #tpu.memory_space<smem>>
    %c151_229 = arith.constant 151 : index
    %1222 = memref.load %arg3[%c151_229] : memref<243xf32, #tpu.memory_space<smem>>
    %c152_230 = arith.constant 152 : index
    %1223 = memref.load %arg3[%c152_230] : memref<243xf32, #tpu.memory_space<smem>>
    %c153_231 = arith.constant 153 : index
    %1224 = memref.load %arg3[%c153_231] : memref<243xf32, #tpu.memory_space<smem>>
    %c154_232 = arith.constant 154 : index
    %1225 = memref.load %arg3[%c154_232] : memref<243xf32, #tpu.memory_space<smem>>
    %c155_233 = arith.constant 155 : index
    %1226 = memref.load %arg3[%c155_233] : memref<243xf32, #tpu.memory_space<smem>>
    %c156_234 = arith.constant 156 : index
    %1227 = memref.load %arg3[%c156_234] : memref<243xf32, #tpu.memory_space<smem>>
    %c157_235 = arith.constant 157 : index
    %1228 = memref.load %arg3[%c157_235] : memref<243xf32, #tpu.memory_space<smem>>
    %c158_236 = arith.constant 158 : index
    %1229 = memref.load %arg3[%c158_236] : memref<243xf32, #tpu.memory_space<smem>>
    %c159_237 = arith.constant 159 : index
    %1230 = memref.load %arg3[%c159_237] : memref<243xf32, #tpu.memory_space<smem>>
    %c160_238 = arith.constant 160 : index
    %1231 = memref.load %arg3[%c160_238] : memref<243xf32, #tpu.memory_space<smem>>
    %c161_239 = arith.constant 161 : index
    %1232 = memref.load %arg3[%c161_239] : memref<243xf32, #tpu.memory_space<smem>>
    %c162_240 = arith.constant 162 : index
    %1233 = memref.load %arg3[%c162_240] : memref<243xf32, #tpu.memory_space<smem>>
    %c163_241 = arith.constant 163 : index
    %1234 = memref.load %arg3[%c163_241] : memref<243xf32, #tpu.memory_space<smem>>
    %c164_242 = arith.constant 164 : index
    %1235 = memref.load %arg3[%c164_242] : memref<243xf32, #tpu.memory_space<smem>>
    %c165_243 = arith.constant 165 : index
    %1236 = memref.load %arg3[%c165_243] : memref<243xf32, #tpu.memory_space<smem>>
    %c166_244 = arith.constant 166 : index
    %1237 = memref.load %arg3[%c166_244] : memref<243xf32, #tpu.memory_space<smem>>
    %c167_245 = arith.constant 167 : index
    %1238 = memref.load %arg3[%c167_245] : memref<243xf32, #tpu.memory_space<smem>>
    %c168_246 = arith.constant 168 : index
    %1239 = memref.load %arg3[%c168_246] : memref<243xf32, #tpu.memory_space<smem>>
    %c169_247 = arith.constant 169 : index
    %1240 = memref.load %arg3[%c169_247] : memref<243xf32, #tpu.memory_space<smem>>
    %c170_248 = arith.constant 170 : index
    %1241 = memref.load %arg3[%c170_248] : memref<243xf32, #tpu.memory_space<smem>>
    %c171_249 = arith.constant 171 : index
    %1242 = memref.load %arg3[%c171_249] : memref<243xf32, #tpu.memory_space<smem>>
    %c172_250 = arith.constant 172 : index
    %1243 = memref.load %arg3[%c172_250] : memref<243xf32, #tpu.memory_space<smem>>
    %c173_251 = arith.constant 173 : index
    %1244 = memref.load %arg3[%c173_251] : memref<243xf32, #tpu.memory_space<smem>>
    %c174_252 = arith.constant 174 : index
    %1245 = memref.load %arg3[%c174_252] : memref<243xf32, #tpu.memory_space<smem>>
    %c175_253 = arith.constant 175 : index
    %1246 = memref.load %arg3[%c175_253] : memref<243xf32, #tpu.memory_space<smem>>
    %c176_254 = arith.constant 176 : index
    %1247 = memref.load %arg3[%c176_254] : memref<243xf32, #tpu.memory_space<smem>>
    %c177_255 = arith.constant 177 : index
    %1248 = memref.load %arg3[%c177_255] : memref<243xf32, #tpu.memory_space<smem>>
    %c178_256 = arith.constant 178 : index
    %1249 = memref.load %arg3[%c178_256] : memref<243xf32, #tpu.memory_space<smem>>
    %c179_257 = arith.constant 179 : index
    %1250 = memref.load %arg3[%c179_257] : memref<243xf32, #tpu.memory_space<smem>>
    %c180_258 = arith.constant 180 : index
    %1251 = memref.load %arg3[%c180_258] : memref<243xf32, #tpu.memory_space<smem>>
    %c181_259 = arith.constant 181 : index
    %1252 = memref.load %arg3[%c181_259] : memref<243xf32, #tpu.memory_space<smem>>
    %c182_260 = arith.constant 182 : index
    %1253 = memref.load %arg3[%c182_260] : memref<243xf32, #tpu.memory_space<smem>>
    %c183_261 = arith.constant 183 : index
    %1254 = memref.load %arg3[%c183_261] : memref<243xf32, #tpu.memory_space<smem>>
    %c184_262 = arith.constant 184 : index
    %1255 = memref.load %arg3[%c184_262] : memref<243xf32, #tpu.memory_space<smem>>
    %c185_263 = arith.constant 185 : index
    %1256 = memref.load %arg3[%c185_263] : memref<243xf32, #tpu.memory_space<smem>>
    %c186_264 = arith.constant 186 : index
    %1257 = memref.load %arg3[%c186_264] : memref<243xf32, #tpu.memory_space<smem>>
    %c187_265 = arith.constant 187 : index
    %1258 = memref.load %arg3[%c187_265] : memref<243xf32, #tpu.memory_space<smem>>
    %c188_266 = arith.constant 188 : index
    %1259 = memref.load %arg3[%c188_266] : memref<243xf32, #tpu.memory_space<smem>>
    %c189_267 = arith.constant 189 : index
    %1260 = memref.load %arg3[%c189_267] : memref<243xf32, #tpu.memory_space<smem>>
    %c190_268 = arith.constant 190 : index
    %1261 = memref.load %arg3[%c190_268] : memref<243xf32, #tpu.memory_space<smem>>
    %c191_269 = arith.constant 191 : index
    %1262 = memref.load %arg3[%c191_269] : memref<243xf32, #tpu.memory_space<smem>>
    %c192_270 = arith.constant 192 : index
    %1263 = memref.load %arg3[%c192_270] : memref<243xf32, #tpu.memory_space<smem>>
    %c193_271 = arith.constant 193 : index
    %1264 = memref.load %arg3[%c193_271] : memref<243xf32, #tpu.memory_space<smem>>
    %c194_272 = arith.constant 194 : index
    %1265 = memref.load %arg3[%c194_272] : memref<243xf32, #tpu.memory_space<smem>>
    %c195_273 = arith.constant 195 : index
    %1266 = memref.load %arg3[%c195_273] : memref<243xf32, #tpu.memory_space<smem>>
    %c196_274 = arith.constant 196 : index
    %1267 = memref.load %arg3[%c196_274] : memref<243xf32, #tpu.memory_space<smem>>
    %c197_275 = arith.constant 197 : index
    %1268 = memref.load %arg3[%c197_275] : memref<243xf32, #tpu.memory_space<smem>>
    %c198_276 = arith.constant 198 : index
    %1269 = memref.load %arg3[%c198_276] : memref<243xf32, #tpu.memory_space<smem>>
    %c199_277 = arith.constant 199 : index
    %1270 = memref.load %arg3[%c199_277] : memref<243xf32, #tpu.memory_space<smem>>
    %c200_278 = arith.constant 200 : index
    %1271 = memref.load %arg3[%c200_278] : memref<243xf32, #tpu.memory_space<smem>>
    %c201_279 = arith.constant 201 : index
    %1272 = memref.load %arg3[%c201_279] : memref<243xf32, #tpu.memory_space<smem>>
    %c202_280 = arith.constant 202 : index
    %1273 = memref.load %arg3[%c202_280] : memref<243xf32, #tpu.memory_space<smem>>
    %c203_281 = arith.constant 203 : index
    %1274 = memref.load %arg3[%c203_281] : memref<243xf32, #tpu.memory_space<smem>>
    %c204_282 = arith.constant 204 : index
    %1275 = memref.load %arg3[%c204_282] : memref<243xf32, #tpu.memory_space<smem>>
    %c205_283 = arith.constant 205 : index
    %1276 = memref.load %arg3[%c205_283] : memref<243xf32, #tpu.memory_space<smem>>
    %c206_284 = arith.constant 206 : index
    %1277 = memref.load %arg3[%c206_284] : memref<243xf32, #tpu.memory_space<smem>>
    %c207_285 = arith.constant 207 : index
    %1278 = memref.load %arg3[%c207_285] : memref<243xf32, #tpu.memory_space<smem>>
    %c208_286 = arith.constant 208 : index
    %1279 = memref.load %arg3[%c208_286] : memref<243xf32, #tpu.memory_space<smem>>
    %c209_287 = arith.constant 209 : index
    %1280 = memref.load %arg3[%c209_287] : memref<243xf32, #tpu.memory_space<smem>>
    %c210_288 = arith.constant 210 : index
    %1281 = memref.load %arg3[%c210_288] : memref<243xf32, #tpu.memory_space<smem>>
    %c211_289 = arith.constant 211 : index
    %1282 = memref.load %arg3[%c211_289] : memref<243xf32, #tpu.memory_space<smem>>
    %c212_290 = arith.constant 212 : index
    %1283 = memref.load %arg3[%c212_290] : memref<243xf32, #tpu.memory_space<smem>>
    %c213_291 = arith.constant 213 : index
    %1284 = memref.load %arg3[%c213_291] : memref<243xf32, #tpu.memory_space<smem>>
    %c214_292 = arith.constant 214 : index
    %1285 = memref.load %arg3[%c214_292] : memref<243xf32, #tpu.memory_space<smem>>
    %c215_293 = arith.constant 215 : index
    %1286 = memref.load %arg3[%c215_293] : memref<243xf32, #tpu.memory_space<smem>>
    %c216_294 = arith.constant 216 : index
    %1287 = memref.load %arg3[%c216_294] : memref<243xf32, #tpu.memory_space<smem>>
    %c217_295 = arith.constant 217 : index
    %1288 = memref.load %arg3[%c217_295] : memref<243xf32, #tpu.memory_space<smem>>
    %c218_296 = arith.constant 218 : index
    %1289 = memref.load %arg3[%c218_296] : memref<243xf32, #tpu.memory_space<smem>>
    %c219_297 = arith.constant 219 : index
    %1290 = memref.load %arg3[%c219_297] : memref<243xf32, #tpu.memory_space<smem>>
    %c220_298 = arith.constant 220 : index
    %1291 = memref.load %arg3[%c220_298] : memref<243xf32, #tpu.memory_space<smem>>
    %c221_299 = arith.constant 221 : index
    %1292 = memref.load %arg3[%c221_299] : memref<243xf32, #tpu.memory_space<smem>>
    %c222_300 = arith.constant 222 : index
    %1293 = memref.load %arg3[%c222_300] : memref<243xf32, #tpu.memory_space<smem>>
    %c223_301 = arith.constant 223 : index
    %1294 = memref.load %arg3[%c223_301] : memref<243xf32, #tpu.memory_space<smem>>
    %c224_302 = arith.constant 224 : index
    %1295 = memref.load %arg3[%c224_302] : memref<243xf32, #tpu.memory_space<smem>>
    %c225_303 = arith.constant 225 : index
    %1296 = memref.load %arg3[%c225_303] : memref<243xf32, #tpu.memory_space<smem>>
    %c226_304 = arith.constant 226 : index
    %1297 = memref.load %arg3[%c226_304] : memref<243xf32, #tpu.memory_space<smem>>
    %c227_305 = arith.constant 227 : index
    %1298 = memref.load %arg3[%c227_305] : memref<243xf32, #tpu.memory_space<smem>>
    %c228_306 = arith.constant 228 : index
    %1299 = memref.load %arg3[%c228_306] : memref<243xf32, #tpu.memory_space<smem>>
    %c229_307 = arith.constant 229 : index
    %1300 = memref.load %arg3[%c229_307] : memref<243xf32, #tpu.memory_space<smem>>
    %c230_308 = arith.constant 230 : index
    %1301 = memref.load %arg3[%c230_308] : memref<243xf32, #tpu.memory_space<smem>>
    %c231_309 = arith.constant 231 : index
    %1302 = memref.load %arg3[%c231_309] : memref<243xf32, #tpu.memory_space<smem>>
    %c232_310 = arith.constant 232 : index
    %1303 = memref.load %arg3[%c232_310] : memref<243xf32, #tpu.memory_space<smem>>
    %c233_311 = arith.constant 233 : index
    %1304 = memref.load %arg3[%c233_311] : memref<243xf32, #tpu.memory_space<smem>>
    %c234_312 = arith.constant 234 : index
    %1305 = memref.load %arg3[%c234_312] : memref<243xf32, #tpu.memory_space<smem>>
    %c235_313 = arith.constant 235 : index
    %1306 = memref.load %arg3[%c235_313] : memref<243xf32, #tpu.memory_space<smem>>
    %c236_314 = arith.constant 236 : index
    %1307 = memref.load %arg3[%c236_314] : memref<243xf32, #tpu.memory_space<smem>>
    %c237_315 = arith.constant 237 : index
    %1308 = memref.load %arg3[%c237_315] : memref<243xf32, #tpu.memory_space<smem>>
    %c238_316 = arith.constant 238 : index
    %1309 = memref.load %arg3[%c238_316] : memref<243xf32, #tpu.memory_space<smem>>
    %c239_317 = arith.constant 239 : index
    %1310 = memref.load %arg3[%c239_317] : memref<243xf32, #tpu.memory_space<smem>>
    %c240_318 = arith.constant 240 : index
    %1311 = memref.load %arg3[%c240_318] : memref<243xf32, #tpu.memory_space<smem>>
    %c241_319 = arith.constant 241 : index
    %1312 = memref.load %arg3[%c241_319] : memref<243xf32, #tpu.memory_space<smem>>
    %c242_320 = arith.constant 242 : index
    %1313 = memref.load %arg3[%c242_320] : memref<243xf32, #tpu.memory_space<smem>>
    %1314 = vector.extract_strided_slice %1056 {offsets = [0, 0], sizes = [6, 128], strides = [1, 1]} : vector<8x128xf32> to vector<6x128xf32>
    %1315 = vector.extract_strided_slice %1056 {offsets = [1, 0], sizes = [6, 128], strides = [1, 1]} : vector<8x128xf32> to vector<6x128xf32>
    %1316 = vector.extract_strided_slice %1056 {offsets = [2, 0], sizes = [6, 128], strides = [1, 1]} : vector<8x128xf32> to vector<6x128xf32>
    %1317 = vector.extract_strided_slice %1063 {offsets = [0, 0], sizes = [6, 128], strides = [1, 1]} : vector<8x128xf32> to vector<6x128xf32>
    %1318 = vector.extract_strided_slice %1063 {offsets = [1, 0], sizes = [6, 128], strides = [1, 1]} : vector<8x128xf32> to vector<6x128xf32>
    %1319 = vector.extract_strided_slice %1063 {offsets = [2, 0], sizes = [6, 128], strides = [1, 1]} : vector<8x128xf32> to vector<6x128xf32>
    %1320 = vector.extract_strided_slice %1070 {offsets = [0, 0], sizes = [6, 128], strides = [1, 1]} : vector<8x128xf32> to vector<6x128xf32>
    %1321 = vector.extract_strided_slice %1070 {offsets = [1, 0], sizes = [6, 128], strides = [1, 1]} : vector<8x128xf32> to vector<6x128xf32>
    %1322 = vector.extract_strided_slice %1070 {offsets = [2, 0], sizes = [6, 128], strides = [1, 1]} : vector<8x128xf32> to vector<6x128xf32>
    %1323 = vector.broadcast %1071 : f32 to vector<6x128xf32>
    %1324 = arith.mulf %1323, %1314 : vector<6x128xf32>
    %1325 = vector.broadcast %1152 : f32 to vector<6x128xf32>
    %1326 = arith.mulf %1325, %1314 : vector<6x128xf32>
    %1327 = vector.broadcast %1233 : f32 to vector<6x128xf32>
    %1328 = arith.mulf %1327, %1314 : vector<6x128xf32>
    %1329 = vector.broadcast %1080 : f32 to vector<6x128xf32>
    %1330 = arith.mulf %1329, %1315 : vector<6x128xf32>
    %1331 = arith.addf %1324, %1330 : vector<6x128xf32>
    %1332 = vector.broadcast %1161 : f32 to vector<6x128xf32>
    %1333 = arith.mulf %1332, %1315 : vector<6x128xf32>
    %1334 = arith.addf %1326, %1333 : vector<6x128xf32>
    %1335 = vector.broadcast %1242 : f32 to vector<6x128xf32>
    %1336 = arith.mulf %1335, %1315 : vector<6x128xf32>
    %1337 = arith.addf %1328, %1336 : vector<6x128xf32>
    %1338 = vector.broadcast %1089 : f32 to vector<6x128xf32>
    %1339 = arith.mulf %1338, %1316 : vector<6x128xf32>
    %1340 = arith.addf %1331, %1339 : vector<6x128xf32>
    %1341 = vector.broadcast %1170 : f32 to vector<6x128xf32>
    %1342 = arith.mulf %1341, %1316 : vector<6x128xf32>
    %1343 = arith.addf %1334, %1342 : vector<6x128xf32>
    %1344 = vector.broadcast %1251 : f32 to vector<6x128xf32>
    %1345 = arith.mulf %1344, %1316 : vector<6x128xf32>
    %1346 = arith.addf %1337, %1345 : vector<6x128xf32>
    %1347 = vector.broadcast %1098 : f32 to vector<6x128xf32>
    %1348 = arith.mulf %1347, %1317 : vector<6x128xf32>
    %1349 = vector.broadcast %1179 : f32 to vector<6x128xf32>
    %1350 = arith.mulf %1349, %1317 : vector<6x128xf32>
    %1351 = vector.broadcast %1260 : f32 to vector<6x128xf32>
    %1352 = arith.mulf %1351, %1317 : vector<6x128xf32>
    %1353 = vector.broadcast %1107 : f32 to vector<6x128xf32>
    %1354 = arith.mulf %1353, %1318 : vector<6x128xf32>
    %1355 = arith.addf %1348, %1354 : vector<6x128xf32>
    %1356 = vector.broadcast %1188 : f32 to vector<6x128xf32>
    %1357 = arith.mulf %1356, %1318 : vector<6x128xf32>
    %1358 = arith.addf %1350, %1357 : vector<6x128xf32>
    %1359 = vector.broadcast %1269 : f32 to vector<6x128xf32>
    %1360 = arith.mulf %1359, %1318 : vector<6x128xf32>
    %1361 = arith.addf %1352, %1360 : vector<6x128xf32>
    %1362 = vector.broadcast %1116 : f32 to vector<6x128xf32>
    %1363 = arith.mulf %1362, %1319 : vector<6x128xf32>
    %1364 = arith.addf %1355, %1363 : vector<6x128xf32>
    %1365 = vector.broadcast %1197 : f32 to vector<6x128xf32>
    %1366 = arith.mulf %1365, %1319 : vector<6x128xf32>
    %1367 = arith.addf %1358, %1366 : vector<6x128xf32>
    %1368 = vector.broadcast %1278 : f32 to vector<6x128xf32>
    %1369 = arith.mulf %1368, %1319 : vector<6x128xf32>
    %1370 = arith.addf %1361, %1369 : vector<6x128xf32>
    %1371 = vector.broadcast %1125 : f32 to vector<6x128xf32>
    %1372 = arith.mulf %1371, %1320 : vector<6x128xf32>
    %1373 = vector.broadcast %1206 : f32 to vector<6x128xf32>
    %1374 = arith.mulf %1373, %1320 : vector<6x128xf32>
    %1375 = vector.broadcast %1287 : f32 to vector<6x128xf32>
    %1376 = arith.mulf %1375, %1320 : vector<6x128xf32>
    %1377 = vector.broadcast %1134 : f32 to vector<6x128xf32>
    %1378 = arith.mulf %1377, %1321 : vector<6x128xf32>
    %1379 = arith.addf %1372, %1378 : vector<6x128xf32>
    %1380 = vector.broadcast %1215 : f32 to vector<6x128xf32>
    %1381 = arith.mulf %1380, %1321 : vector<6x128xf32>
    %1382 = arith.addf %1374, %1381 : vector<6x128xf32>
    %1383 = vector.broadcast %1296 : f32 to vector<6x128xf32>
    %1384 = arith.mulf %1383, %1321 : vector<6x128xf32>
    %1385 = arith.addf %1376, %1384 : vector<6x128xf32>
    %1386 = vector.broadcast %1143 : f32 to vector<6x128xf32>
    %1387 = arith.mulf %1386, %1322 : vector<6x128xf32>
    %1388 = arith.addf %1379, %1387 : vector<6x128xf32>
    %1389 = vector.broadcast %1224 : f32 to vector<6x128xf32>
    %1390 = arith.mulf %1389, %1322 : vector<6x128xf32>
    %1391 = arith.addf %1382, %1390 : vector<6x128xf32>
    %1392 = vector.broadcast %1305 : f32 to vector<6x128xf32>
    %1393 = arith.mulf %1392, %1322 : vector<6x128xf32>
    %1394 = arith.addf %1385, %1393 : vector<6x128xf32>
    %c127_i32_321 = arith.constant 127 : i32
    %1395 = tpu.dynamic_rotate %1314 by %c127_i32_321 dim 1 : vector<6x128xf32>, i32 -> vector<6x128xf32>
    %1396 = vector.broadcast %1072 : f32 to vector<6x128xf32>
    %1397 = arith.mulf %1396, %1395 : vector<6x128xf32>
    %1398 = arith.addf %1340, %1397 : vector<6x128xf32>
    %1399 = vector.broadcast %1153 : f32 to vector<6x128xf32>
    %1400 = arith.mulf %1399, %1395 : vector<6x128xf32>
    %1401 = arith.addf %1343, %1400 : vector<6x128xf32>
    %1402 = vector.broadcast %1234 : f32 to vector<6x128xf32>
    %1403 = arith.mulf %1402, %1395 : vector<6x128xf32>
    %1404 = arith.addf %1346, %1403 : vector<6x128xf32>
    %c127_i32_322 = arith.constant 127 : i32
    %1405 = tpu.dynamic_rotate %1315 by %c127_i32_322 dim 1 : vector<6x128xf32>, i32 -> vector<6x128xf32>
    %1406 = vector.broadcast %1081 : f32 to vector<6x128xf32>
    %1407 = arith.mulf %1406, %1405 : vector<6x128xf32>
    %1408 = arith.addf %1398, %1407 : vector<6x128xf32>
    %1409 = vector.broadcast %1162 : f32 to vector<6x128xf32>
    %1410 = arith.mulf %1409, %1405 : vector<6x128xf32>
    %1411 = arith.addf %1401, %1410 : vector<6x128xf32>
    %1412 = vector.broadcast %1243 : f32 to vector<6x128xf32>
    %1413 = arith.mulf %1412, %1405 : vector<6x128xf32>
    %1414 = arith.addf %1404, %1413 : vector<6x128xf32>
    %c127_i32_323 = arith.constant 127 : i32
    %1415 = tpu.dynamic_rotate %1316 by %c127_i32_323 dim 1 : vector<6x128xf32>, i32 -> vector<6x128xf32>
    %1416 = vector.broadcast %1090 : f32 to vector<6x128xf32>
    %1417 = arith.mulf %1416, %1415 : vector<6x128xf32>
    %1418 = arith.addf %1408, %1417 : vector<6x128xf32>
    %1419 = vector.broadcast %1171 : f32 to vector<6x128xf32>
    %1420 = arith.mulf %1419, %1415 : vector<6x128xf32>
    %1421 = arith.addf %1411, %1420 : vector<6x128xf32>
    %1422 = vector.broadcast %1252 : f32 to vector<6x128xf32>
    %1423 = arith.mulf %1422, %1415 : vector<6x128xf32>
    %1424 = arith.addf %1414, %1423 : vector<6x128xf32>
    %c127_i32_324 = arith.constant 127 : i32
    %1425 = tpu.dynamic_rotate %1317 by %c127_i32_324 dim 1 : vector<6x128xf32>, i32 -> vector<6x128xf32>
    %1426 = vector.broadcast %1099 : f32 to vector<6x128xf32>
    %1427 = arith.mulf %1426, %1425 : vector<6x128xf32>
    %1428 = arith.addf %1364, %1427 : vector<6x128xf32>
    %1429 = vector.broadcast %1180 : f32 to vector<6x128xf32>
    %1430 = arith.mulf %1429, %1425 : vector<6x128xf32>
    %1431 = arith.addf %1367, %1430 : vector<6x128xf32>
    %1432 = vector.broadcast %1261 : f32 to vector<6x128xf32>
    %1433 = arith.mulf %1432, %1425 : vector<6x128xf32>
    %1434 = arith.addf %1370, %1433 : vector<6x128xf32>
    %c127_i32_325 = arith.constant 127 : i32
    %1435 = tpu.dynamic_rotate %1318 by %c127_i32_325 dim 1 : vector<6x128xf32>, i32 -> vector<6x128xf32>
    %1436 = vector.broadcast %1108 : f32 to vector<6x128xf32>
    %1437 = arith.mulf %1436, %1435 : vector<6x128xf32>
    %1438 = arith.addf %1428, %1437 : vector<6x128xf32>
    %1439 = vector.broadcast %1189 : f32 to vector<6x128xf32>
    %1440 = arith.mulf %1439, %1435 : vector<6x128xf32>
    %1441 = arith.addf %1431, %1440 : vector<6x128xf32>
    %1442 = vector.broadcast %1270 : f32 to vector<6x128xf32>
    %1443 = arith.mulf %1442, %1435 : vector<6x128xf32>
    %1444 = arith.addf %1434, %1443 : vector<6x128xf32>
    %c127_i32_326 = arith.constant 127 : i32
    %1445 = tpu.dynamic_rotate %1319 by %c127_i32_326 dim 1 : vector<6x128xf32>, i32 -> vector<6x128xf32>
    %1446 = vector.broadcast %1117 : f32 to vector<6x128xf32>
    %1447 = arith.mulf %1446, %1445 : vector<6x128xf32>
    %1448 = arith.addf %1438, %1447 : vector<6x128xf32>
    %1449 = vector.broadcast %1198 : f32 to vector<6x128xf32>
    %1450 = arith.mulf %1449, %1445 : vector<6x128xf32>
    %1451 = arith.addf %1441, %1450 : vector<6x128xf32>
    %1452 = vector.broadcast %1279 : f32 to vector<6x128xf32>
    %1453 = arith.mulf %1452, %1445 : vector<6x128xf32>
    %1454 = arith.addf %1444, %1453 : vector<6x128xf32>
    %c127_i32_327 = arith.constant 127 : i32
    %1455 = tpu.dynamic_rotate %1320 by %c127_i32_327 dim 1 : vector<6x128xf32>, i32 -> vector<6x128xf32>
    %1456 = vector.broadcast %1126 : f32 to vector<6x128xf32>
    %1457 = arith.mulf %1456, %1455 : vector<6x128xf32>
    %1458 = arith.addf %1388, %1457 : vector<6x128xf32>
    %1459 = vector.broadcast %1207 : f32 to vector<6x128xf32>
    %1460 = arith.mulf %1459, %1455 : vector<6x128xf32>
    %1461 = arith.addf %1391, %1460 : vector<6x128xf32>
    %1462 = vector.broadcast %1288 : f32 to vector<6x128xf32>
    %1463 = arith.mulf %1462, %1455 : vector<6x128xf32>
    %1464 = arith.addf %1394, %1463 : vector<6x128xf32>
    %c127_i32_328 = arith.constant 127 : i32
    %1465 = tpu.dynamic_rotate %1321 by %c127_i32_328 dim 1 : vector<6x128xf32>, i32 -> vector<6x128xf32>
    %1466 = vector.broadcast %1135 : f32 to vector<6x128xf32>
    %1467 = arith.mulf %1466, %1465 : vector<6x128xf32>
    %1468 = arith.addf %1458, %1467 : vector<6x128xf32>
    %1469 = vector.broadcast %1216 : f32 to vector<6x128xf32>
    %1470 = arith.mulf %1469, %1465 : vector<6x128xf32>
    %1471 = arith.addf %1461, %1470 : vector<6x128xf32>
    %1472 = vector.broadcast %1297 : f32 to vector<6x128xf32>
    %1473 = arith.mulf %1472, %1465 : vector<6x128xf32>
    %1474 = arith.addf %1464, %1473 : vector<6x128xf32>
    %c127_i32_329 = arith.constant 127 : i32
    %1475 = tpu.dynamic_rotate %1322 by %c127_i32_329 dim 1 : vector<6x128xf32>, i32 -> vector<6x128xf32>
    %1476 = vector.broadcast %1144 : f32 to vector<6x128xf32>
    %1477 = arith.mulf %1476, %1475 : vector<6x128xf32>
    %1478 = arith.addf %1468, %1477 : vector<6x128xf32>
    %1479 = vector.broadcast %1225 : f32 to vector<6x128xf32>
    %1480 = arith.mulf %1479, %1475 : vector<6x128xf32>
    %1481 = arith.addf %1471, %1480 : vector<6x128xf32>
    %1482 = vector.broadcast %1306 : f32 to vector<6x128xf32>
    %1483 = arith.mulf %1482, %1475 : vector<6x128xf32>
    %1484 = arith.addf %1474, %1483 : vector<6x128xf32>
    %c126_i32_330 = arith.constant 126 : i32
    %1485 = tpu.dynamic_rotate %1314 by %c126_i32_330 dim 1 : vector<6x128xf32>, i32 -> vector<6x128xf32>
    %1486 = vector.broadcast %1073 : f32 to vector<6x128xf32>
    %1487 = arith.mulf %1486, %1485 : vector<6x128xf32>
    %1488 = arith.addf %1418, %1487 : vector<6x128xf32>
    %1489 = vector.broadcast %1154 : f32 to vector<6x128xf32>
    %1490 = arith.mulf %1489, %1485 : vector<6x128xf32>
    %1491 = arith.addf %1421, %1490 : vector<6x128xf32>
    %1492 = vector.broadcast %1235 : f32 to vector<6x128xf32>
    %1493 = arith.mulf %1492, %1485 : vector<6x128xf32>
    %1494 = arith.addf %1424, %1493 : vector<6x128xf32>
    %c126_i32_331 = arith.constant 126 : i32
    %1495 = tpu.dynamic_rotate %1315 by %c126_i32_331 dim 1 : vector<6x128xf32>, i32 -> vector<6x128xf32>
    %1496 = vector.broadcast %1082 : f32 to vector<6x128xf32>
    %1497 = arith.mulf %1496, %1495 : vector<6x128xf32>
    %1498 = arith.addf %1488, %1497 : vector<6x128xf32>
    %1499 = vector.broadcast %1163 : f32 to vector<6x128xf32>
    %1500 = arith.mulf %1499, %1495 : vector<6x128xf32>
    %1501 = arith.addf %1491, %1500 : vector<6x128xf32>
    %1502 = vector.broadcast %1244 : f32 to vector<6x128xf32>
    %1503 = arith.mulf %1502, %1495 : vector<6x128xf32>
    %1504 = arith.addf %1494, %1503 : vector<6x128xf32>
    %c126_i32_332 = arith.constant 126 : i32
    %1505 = tpu.dynamic_rotate %1316 by %c126_i32_332 dim 1 : vector<6x128xf32>, i32 -> vector<6x128xf32>
    %1506 = vector.broadcast %1091 : f32 to vector<6x128xf32>
    %1507 = arith.mulf %1506, %1505 : vector<6x128xf32>
    %1508 = arith.addf %1498, %1507 : vector<6x128xf32>
    %1509 = vector.broadcast %1172 : f32 to vector<6x128xf32>
    %1510 = arith.mulf %1509, %1505 : vector<6x128xf32>
    %1511 = arith.addf %1501, %1510 : vector<6x128xf32>
    %1512 = vector.broadcast %1253 : f32 to vector<6x128xf32>
    %1513 = arith.mulf %1512, %1505 : vector<6x128xf32>
    %1514 = arith.addf %1504, %1513 : vector<6x128xf32>
    %c126_i32_333 = arith.constant 126 : i32
    %1515 = tpu.dynamic_rotate %1317 by %c126_i32_333 dim 1 : vector<6x128xf32>, i32 -> vector<6x128xf32>
    %1516 = vector.broadcast %1100 : f32 to vector<6x128xf32>
    %1517 = arith.mulf %1516, %1515 : vector<6x128xf32>
    %1518 = arith.addf %1448, %1517 : vector<6x128xf32>
    %1519 = vector.broadcast %1181 : f32 to vector<6x128xf32>
    %1520 = arith.mulf %1519, %1515 : vector<6x128xf32>
    %1521 = arith.addf %1451, %1520 : vector<6x128xf32>
    %1522 = vector.broadcast %1262 : f32 to vector<6x128xf32>
    %1523 = arith.mulf %1522, %1515 : vector<6x128xf32>
    %1524 = arith.addf %1454, %1523 : vector<6x128xf32>
    %c126_i32_334 = arith.constant 126 : i32
    %1525 = tpu.dynamic_rotate %1318 by %c126_i32_334 dim 1 : vector<6x128xf32>, i32 -> vector<6x128xf32>
    %1526 = vector.broadcast %1109 : f32 to vector<6x128xf32>
    %1527 = arith.mulf %1526, %1525 : vector<6x128xf32>
    %1528 = arith.addf %1518, %1527 : vector<6x128xf32>
    %1529 = vector.broadcast %1190 : f32 to vector<6x128xf32>
    %1530 = arith.mulf %1529, %1525 : vector<6x128xf32>
    %1531 = arith.addf %1521, %1530 : vector<6x128xf32>
    %1532 = vector.broadcast %1271 : f32 to vector<6x128xf32>
    %1533 = arith.mulf %1532, %1525 : vector<6x128xf32>
    %1534 = arith.addf %1524, %1533 : vector<6x128xf32>
    %c126_i32_335 = arith.constant 126 : i32
    %1535 = tpu.dynamic_rotate %1319 by %c126_i32_335 dim 1 : vector<6x128xf32>, i32 -> vector<6x128xf32>
    %1536 = vector.broadcast %1118 : f32 to vector<6x128xf32>
    %1537 = arith.mulf %1536, %1535 : vector<6x128xf32>
    %1538 = arith.addf %1528, %1537 : vector<6x128xf32>
    %1539 = vector.broadcast %1199 : f32 to vector<6x128xf32>
    %1540 = arith.mulf %1539, %1535 : vector<6x128xf32>
    %1541 = arith.addf %1531, %1540 : vector<6x128xf32>
    %1542 = vector.broadcast %1280 : f32 to vector<6x128xf32>
    %1543 = arith.mulf %1542, %1535 : vector<6x128xf32>
    %1544 = arith.addf %1534, %1543 : vector<6x128xf32>
    %c126_i32_336 = arith.constant 126 : i32
    %1545 = tpu.dynamic_rotate %1320 by %c126_i32_336 dim 1 : vector<6x128xf32>, i32 -> vector<6x128xf32>
    %1546 = vector.broadcast %1127 : f32 to vector<6x128xf32>
    %1547 = arith.mulf %1546, %1545 : vector<6x128xf32>
    %1548 = arith.addf %1478, %1547 : vector<6x128xf32>
    %1549 = vector.broadcast %1208 : f32 to vector<6x128xf32>
    %1550 = arith.mulf %1549, %1545 : vector<6x128xf32>
    %1551 = arith.addf %1481, %1550 : vector<6x128xf32>
    %1552 = vector.broadcast %1289 : f32 to vector<6x128xf32>
    %1553 = arith.mulf %1552, %1545 : vector<6x128xf32>
    %1554 = arith.addf %1484, %1553 : vector<6x128xf32>
    %c126_i32_337 = arith.constant 126 : i32
    %1555 = tpu.dynamic_rotate %1321 by %c126_i32_337 dim 1 : vector<6x128xf32>, i32 -> vector<6x128xf32>
    %1556 = vector.broadcast %1136 : f32 to vector<6x128xf32>
    %1557 = arith.mulf %1556, %1555 : vector<6x128xf32>
    %1558 = arith.addf %1548, %1557 : vector<6x128xf32>
    %1559 = vector.broadcast %1217 : f32 to vector<6x128xf32>
    %1560 = arith.mulf %1559, %1555 : vector<6x128xf32>
    %1561 = arith.addf %1551, %1560 : vector<6x128xf32>
    %1562 = vector.broadcast %1298 : f32 to vector<6x128xf32>
    %1563 = arith.mulf %1562, %1555 : vector<6x128xf32>
    %1564 = arith.addf %1554, %1563 : vector<6x128xf32>
    %c126_i32_338 = arith.constant 126 : i32
    %1565 = tpu.dynamic_rotate %1322 by %c126_i32_338 dim 1 : vector<6x128xf32>, i32 -> vector<6x128xf32>
    %1566 = vector.broadcast %1145 : f32 to vector<6x128xf32>
    %1567 = arith.mulf %1566, %1565 : vector<6x128xf32>
    %1568 = arith.addf %1558, %1567 : vector<6x128xf32>
    %1569 = vector.broadcast %1226 : f32 to vector<6x128xf32>
    %1570 = arith.mulf %1569, %1565 : vector<6x128xf32>
    %1571 = arith.addf %1561, %1570 : vector<6x128xf32>
    %1572 = vector.broadcast %1307 : f32 to vector<6x128xf32>
    %1573 = arith.mulf %1572, %1565 : vector<6x128xf32>
    %1574 = arith.addf %1564, %1573 : vector<6x128xf32>
    %c118_i32_339 = arith.constant 118 : i32
    %1575 = tpu.dynamic_rotate %1314 by %c118_i32_339 dim 1 : vector<6x128xf32>, i32 -> vector<6x128xf32>
    %1576 = vector.broadcast %1074 : f32 to vector<6x128xf32>
    %1577 = arith.mulf %1576, %1575 : vector<6x128xf32>
    %1578 = arith.addf %1508, %1577 : vector<6x128xf32>
    %1579 = vector.broadcast %1155 : f32 to vector<6x128xf32>
    %1580 = arith.mulf %1579, %1575 : vector<6x128xf32>
    %1581 = arith.addf %1511, %1580 : vector<6x128xf32>
    %1582 = vector.broadcast %1236 : f32 to vector<6x128xf32>
    %1583 = arith.mulf %1582, %1575 : vector<6x128xf32>
    %1584 = arith.addf %1514, %1583 : vector<6x128xf32>
    %c118_i32_340 = arith.constant 118 : i32
    %1585 = tpu.dynamic_rotate %1315 by %c118_i32_340 dim 1 : vector<6x128xf32>, i32 -> vector<6x128xf32>
    %1586 = vector.broadcast %1083 : f32 to vector<6x128xf32>
    %1587 = arith.mulf %1586, %1585 : vector<6x128xf32>
    %1588 = arith.addf %1578, %1587 : vector<6x128xf32>
    %1589 = vector.broadcast %1164 : f32 to vector<6x128xf32>
    %1590 = arith.mulf %1589, %1585 : vector<6x128xf32>
    %1591 = arith.addf %1581, %1590 : vector<6x128xf32>
    %1592 = vector.broadcast %1245 : f32 to vector<6x128xf32>
    %1593 = arith.mulf %1592, %1585 : vector<6x128xf32>
    %1594 = arith.addf %1584, %1593 : vector<6x128xf32>
    %c118_i32_341 = arith.constant 118 : i32
    %1595 = tpu.dynamic_rotate %1316 by %c118_i32_341 dim 1 : vector<6x128xf32>, i32 -> vector<6x128xf32>
    %1596 = vector.broadcast %1092 : f32 to vector<6x128xf32>
    %1597 = arith.mulf %1596, %1595 : vector<6x128xf32>
    %1598 = arith.addf %1588, %1597 : vector<6x128xf32>
    %1599 = vector.broadcast %1173 : f32 to vector<6x128xf32>
    %1600 = arith.mulf %1599, %1595 : vector<6x128xf32>
    %1601 = arith.addf %1591, %1600 : vector<6x128xf32>
    %1602 = vector.broadcast %1254 : f32 to vector<6x128xf32>
    %1603 = arith.mulf %1602, %1595 : vector<6x128xf32>
    %1604 = arith.addf %1594, %1603 : vector<6x128xf32>
    %c118_i32_342 = arith.constant 118 : i32
    %1605 = tpu.dynamic_rotate %1317 by %c118_i32_342 dim 1 : vector<6x128xf32>, i32 -> vector<6x128xf32>
    %1606 = vector.broadcast %1101 : f32 to vector<6x128xf32>
    %1607 = arith.mulf %1606, %1605 : vector<6x128xf32>
    %1608 = arith.addf %1538, %1607 : vector<6x128xf32>
    %1609 = vector.broadcast %1182 : f32 to vector<6x128xf32>
    %1610 = arith.mulf %1609, %1605 : vector<6x128xf32>
    %1611 = arith.addf %1541, %1610 : vector<6x128xf32>
    %1612 = vector.broadcast %1263 : f32 to vector<6x128xf32>
    %1613 = arith.mulf %1612, %1605 : vector<6x128xf32>
    %1614 = arith.addf %1544, %1613 : vector<6x128xf32>
    %c118_i32_343 = arith.constant 118 : i32
    %1615 = tpu.dynamic_rotate %1318 by %c118_i32_343 dim 1 : vector<6x128xf32>, i32 -> vector<6x128xf32>
    %1616 = vector.broadcast %1110 : f32 to vector<6x128xf32>
    %1617 = arith.mulf %1616, %1615 : vector<6x128xf32>
    %1618 = arith.addf %1608, %1617 : vector<6x128xf32>
    %1619 = vector.broadcast %1191 : f32 to vector<6x128xf32>
    %1620 = arith.mulf %1619, %1615 : vector<6x128xf32>
    %1621 = arith.addf %1611, %1620 : vector<6x128xf32>
    %1622 = vector.broadcast %1272 : f32 to vector<6x128xf32>
    %1623 = arith.mulf %1622, %1615 : vector<6x128xf32>
    %1624 = arith.addf %1614, %1623 : vector<6x128xf32>
    %c118_i32_344 = arith.constant 118 : i32
    %1625 = tpu.dynamic_rotate %1319 by %c118_i32_344 dim 1 : vector<6x128xf32>, i32 -> vector<6x128xf32>
    %1626 = vector.broadcast %1119 : f32 to vector<6x128xf32>
    %1627 = arith.mulf %1626, %1625 : vector<6x128xf32>
    %1628 = arith.addf %1618, %1627 : vector<6x128xf32>
    %1629 = vector.broadcast %1200 : f32 to vector<6x128xf32>
    %1630 = arith.mulf %1629, %1625 : vector<6x128xf32>
    %1631 = arith.addf %1621, %1630 : vector<6x128xf32>
    %1632 = vector.broadcast %1281 : f32 to vector<6x128xf32>
    %1633 = arith.mulf %1632, %1625 : vector<6x128xf32>
    %1634 = arith.addf %1624, %1633 : vector<6x128xf32>
    %c118_i32_345 = arith.constant 118 : i32
    %1635 = tpu.dynamic_rotate %1320 by %c118_i32_345 dim 1 : vector<6x128xf32>, i32 -> vector<6x128xf32>
    %1636 = vector.broadcast %1128 : f32 to vector<6x128xf32>
    %1637 = arith.mulf %1636, %1635 : vector<6x128xf32>
    %1638 = arith.addf %1568, %1637 : vector<6x128xf32>
    %1639 = vector.broadcast %1209 : f32 to vector<6x128xf32>
    %1640 = arith.mulf %1639, %1635 : vector<6x128xf32>
    %1641 = arith.addf %1571, %1640 : vector<6x128xf32>
    %1642 = vector.broadcast %1290 : f32 to vector<6x128xf32>
    %1643 = arith.mulf %1642, %1635 : vector<6x128xf32>
    %1644 = arith.addf %1574, %1643 : vector<6x128xf32>
    %c118_i32_346 = arith.constant 118 : i32
    %1645 = tpu.dynamic_rotate %1321 by %c118_i32_346 dim 1 : vector<6x128xf32>, i32 -> vector<6x128xf32>
    %1646 = vector.broadcast %1137 : f32 to vector<6x128xf32>
    %1647 = arith.mulf %1646, %1645 : vector<6x128xf32>
    %1648 = arith.addf %1638, %1647 : vector<6x128xf32>
    %1649 = vector.broadcast %1218 : f32 to vector<6x128xf32>
    %1650 = arith.mulf %1649, %1645 : vector<6x128xf32>
    %1651 = arith.addf %1641, %1650 : vector<6x128xf32>
    %1652 = vector.broadcast %1299 : f32 to vector<6x128xf32>
    %1653 = arith.mulf %1652, %1645 : vector<6x128xf32>
    %1654 = arith.addf %1644, %1653 : vector<6x128xf32>
    %c118_i32_347 = arith.constant 118 : i32
    %1655 = tpu.dynamic_rotate %1322 by %c118_i32_347 dim 1 : vector<6x128xf32>, i32 -> vector<6x128xf32>
    %1656 = vector.broadcast %1146 : f32 to vector<6x128xf32>
    %1657 = arith.mulf %1656, %1655 : vector<6x128xf32>
    %1658 = arith.addf %1648, %1657 : vector<6x128xf32>
    %1659 = vector.broadcast %1227 : f32 to vector<6x128xf32>
    %1660 = arith.mulf %1659, %1655 : vector<6x128xf32>
    %1661 = arith.addf %1651, %1660 : vector<6x128xf32>
    %1662 = vector.broadcast %1308 : f32 to vector<6x128xf32>
    %1663 = arith.mulf %1662, %1655 : vector<6x128xf32>
    %1664 = arith.addf %1654, %1663 : vector<6x128xf32>
    %c117_i32_348 = arith.constant 117 : i32
    %1665 = tpu.dynamic_rotate %1314 by %c117_i32_348 dim 1 : vector<6x128xf32>, i32 -> vector<6x128xf32>
    %1666 = vector.broadcast %1075 : f32 to vector<6x128xf32>
    %1667 = arith.mulf %1666, %1665 : vector<6x128xf32>
    %1668 = arith.addf %1598, %1667 : vector<6x128xf32>
    %1669 = vector.broadcast %1156 : f32 to vector<6x128xf32>
    %1670 = arith.mulf %1669, %1665 : vector<6x128xf32>
    %1671 = arith.addf %1601, %1670 : vector<6x128xf32>
    %1672 = vector.broadcast %1237 : f32 to vector<6x128xf32>
    %1673 = arith.mulf %1672, %1665 : vector<6x128xf32>
    %1674 = arith.addf %1604, %1673 : vector<6x128xf32>
    %c117_i32_349 = arith.constant 117 : i32
    %1675 = tpu.dynamic_rotate %1315 by %c117_i32_349 dim 1 : vector<6x128xf32>, i32 -> vector<6x128xf32>
    %1676 = vector.broadcast %1084 : f32 to vector<6x128xf32>
    %1677 = arith.mulf %1676, %1675 : vector<6x128xf32>
    %1678 = arith.addf %1668, %1677 : vector<6x128xf32>
    %1679 = vector.broadcast %1165 : f32 to vector<6x128xf32>
    %1680 = arith.mulf %1679, %1675 : vector<6x128xf32>
    %1681 = arith.addf %1671, %1680 : vector<6x128xf32>
    %1682 = vector.broadcast %1246 : f32 to vector<6x128xf32>
    %1683 = arith.mulf %1682, %1675 : vector<6x128xf32>
    %1684 = arith.addf %1674, %1683 : vector<6x128xf32>
    %c117_i32_350 = arith.constant 117 : i32
    %1685 = tpu.dynamic_rotate %1316 by %c117_i32_350 dim 1 : vector<6x128xf32>, i32 -> vector<6x128xf32>
    %1686 = vector.broadcast %1093 : f32 to vector<6x128xf32>
    %1687 = arith.mulf %1686, %1685 : vector<6x128xf32>
    %1688 = arith.addf %1678, %1687 : vector<6x128xf32>
    %1689 = vector.broadcast %1174 : f32 to vector<6x128xf32>
    %1690 = arith.mulf %1689, %1685 : vector<6x128xf32>
    %1691 = arith.addf %1681, %1690 : vector<6x128xf32>
    %1692 = vector.broadcast %1255 : f32 to vector<6x128xf32>
    %1693 = arith.mulf %1692, %1685 : vector<6x128xf32>
    %1694 = arith.addf %1684, %1693 : vector<6x128xf32>
    %c117_i32_351 = arith.constant 117 : i32
    %1695 = tpu.dynamic_rotate %1317 by %c117_i32_351 dim 1 : vector<6x128xf32>, i32 -> vector<6x128xf32>
    %1696 = vector.broadcast %1102 : f32 to vector<6x128xf32>
    %1697 = arith.mulf %1696, %1695 : vector<6x128xf32>
    %1698 = arith.addf %1628, %1697 : vector<6x128xf32>
    %1699 = vector.broadcast %1183 : f32 to vector<6x128xf32>
    %1700 = arith.mulf %1699, %1695 : vector<6x128xf32>
    %1701 = arith.addf %1631, %1700 : vector<6x128xf32>
    %1702 = vector.broadcast %1264 : f32 to vector<6x128xf32>
    %1703 = arith.mulf %1702, %1695 : vector<6x128xf32>
    %1704 = arith.addf %1634, %1703 : vector<6x128xf32>
    %c117_i32_352 = arith.constant 117 : i32
    %1705 = tpu.dynamic_rotate %1318 by %c117_i32_352 dim 1 : vector<6x128xf32>, i32 -> vector<6x128xf32>
    %1706 = vector.broadcast %1111 : f32 to vector<6x128xf32>
    %1707 = arith.mulf %1706, %1705 : vector<6x128xf32>
    %1708 = arith.addf %1698, %1707 : vector<6x128xf32>
    %1709 = vector.broadcast %1192 : f32 to vector<6x128xf32>
    %1710 = arith.mulf %1709, %1705 : vector<6x128xf32>
    %1711 = arith.addf %1701, %1710 : vector<6x128xf32>
    %1712 = vector.broadcast %1273 : f32 to vector<6x128xf32>
    %1713 = arith.mulf %1712, %1705 : vector<6x128xf32>
    %1714 = arith.addf %1704, %1713 : vector<6x128xf32>
    %c117_i32_353 = arith.constant 117 : i32
    %1715 = tpu.dynamic_rotate %1319 by %c117_i32_353 dim 1 : vector<6x128xf32>, i32 -> vector<6x128xf32>
    %1716 = vector.broadcast %1120 : f32 to vector<6x128xf32>
    %1717 = arith.mulf %1716, %1715 : vector<6x128xf32>
    %1718 = arith.addf %1708, %1717 : vector<6x128xf32>
    %1719 = vector.broadcast %1201 : f32 to vector<6x128xf32>
    %1720 = arith.mulf %1719, %1715 : vector<6x128xf32>
    %1721 = arith.addf %1711, %1720 : vector<6x128xf32>
    %1722 = vector.broadcast %1282 : f32 to vector<6x128xf32>
    %1723 = arith.mulf %1722, %1715 : vector<6x128xf32>
    %1724 = arith.addf %1714, %1723 : vector<6x128xf32>
    %c117_i32_354 = arith.constant 117 : i32
    %1725 = tpu.dynamic_rotate %1320 by %c117_i32_354 dim 1 : vector<6x128xf32>, i32 -> vector<6x128xf32>
    %1726 = vector.broadcast %1129 : f32 to vector<6x128xf32>
    %1727 = arith.mulf %1726, %1725 : vector<6x128xf32>
    %1728 = arith.addf %1658, %1727 : vector<6x128xf32>
    %1729 = vector.broadcast %1210 : f32 to vector<6x128xf32>
    %1730 = arith.mulf %1729, %1725 : vector<6x128xf32>
    %1731 = arith.addf %1661, %1730 : vector<6x128xf32>
    %1732 = vector.broadcast %1291 : f32 to vector<6x128xf32>
    %1733 = arith.mulf %1732, %1725 : vector<6x128xf32>
    %1734 = arith.addf %1664, %1733 : vector<6x128xf32>
    %c117_i32_355 = arith.constant 117 : i32
    %1735 = tpu.dynamic_rotate %1321 by %c117_i32_355 dim 1 : vector<6x128xf32>, i32 -> vector<6x128xf32>
    %1736 = vector.broadcast %1138 : f32 to vector<6x128xf32>
    %1737 = arith.mulf %1736, %1735 : vector<6x128xf32>
    %1738 = arith.addf %1728, %1737 : vector<6x128xf32>
    %1739 = vector.broadcast %1219 : f32 to vector<6x128xf32>
    %1740 = arith.mulf %1739, %1735 : vector<6x128xf32>
    %1741 = arith.addf %1731, %1740 : vector<6x128xf32>
    %1742 = vector.broadcast %1300 : f32 to vector<6x128xf32>
    %1743 = arith.mulf %1742, %1735 : vector<6x128xf32>
    %1744 = arith.addf %1734, %1743 : vector<6x128xf32>
    %c117_i32_356 = arith.constant 117 : i32
    %1745 = tpu.dynamic_rotate %1322 by %c117_i32_356 dim 1 : vector<6x128xf32>, i32 -> vector<6x128xf32>
    %1746 = vector.broadcast %1147 : f32 to vector<6x128xf32>
    %1747 = arith.mulf %1746, %1745 : vector<6x128xf32>
    %1748 = arith.addf %1738, %1747 : vector<6x128xf32>
    %1749 = vector.broadcast %1228 : f32 to vector<6x128xf32>
    %1750 = arith.mulf %1749, %1745 : vector<6x128xf32>
    %1751 = arith.addf %1741, %1750 : vector<6x128xf32>
    %1752 = vector.broadcast %1309 : f32 to vector<6x128xf32>
    %1753 = arith.mulf %1752, %1745 : vector<6x128xf32>
    %1754 = arith.addf %1744, %1753 : vector<6x128xf32>
    %c116_i32_357 = arith.constant 116 : i32
    %1755 = tpu.dynamic_rotate %1314 by %c116_i32_357 dim 1 : vector<6x128xf32>, i32 -> vector<6x128xf32>
    %1756 = vector.broadcast %1076 : f32 to vector<6x128xf32>
    %1757 = arith.mulf %1756, %1755 : vector<6x128xf32>
    %1758 = arith.addf %1688, %1757 : vector<6x128xf32>
    %1759 = vector.broadcast %1157 : f32 to vector<6x128xf32>
    %1760 = arith.mulf %1759, %1755 : vector<6x128xf32>
    %1761 = arith.addf %1691, %1760 : vector<6x128xf32>
    %1762 = vector.broadcast %1238 : f32 to vector<6x128xf32>
    %1763 = arith.mulf %1762, %1755 : vector<6x128xf32>
    %1764 = arith.addf %1694, %1763 : vector<6x128xf32>
    %c116_i32_358 = arith.constant 116 : i32
    %1765 = tpu.dynamic_rotate %1315 by %c116_i32_358 dim 1 : vector<6x128xf32>, i32 -> vector<6x128xf32>
    %1766 = vector.broadcast %1085 : f32 to vector<6x128xf32>
    %1767 = arith.mulf %1766, %1765 : vector<6x128xf32>
    %1768 = arith.addf %1758, %1767 : vector<6x128xf32>
    %1769 = vector.broadcast %1166 : f32 to vector<6x128xf32>
    %1770 = arith.mulf %1769, %1765 : vector<6x128xf32>
    %1771 = arith.addf %1761, %1770 : vector<6x128xf32>
    %1772 = vector.broadcast %1247 : f32 to vector<6x128xf32>
    %1773 = arith.mulf %1772, %1765 : vector<6x128xf32>
    %1774 = arith.addf %1764, %1773 : vector<6x128xf32>
    %c116_i32_359 = arith.constant 116 : i32
    %1775 = tpu.dynamic_rotate %1316 by %c116_i32_359 dim 1 : vector<6x128xf32>, i32 -> vector<6x128xf32>
    %1776 = vector.broadcast %1094 : f32 to vector<6x128xf32>
    %1777 = arith.mulf %1776, %1775 : vector<6x128xf32>
    %1778 = arith.addf %1768, %1777 : vector<6x128xf32>
    %1779 = vector.broadcast %1175 : f32 to vector<6x128xf32>
    %1780 = arith.mulf %1779, %1775 : vector<6x128xf32>
    %1781 = arith.addf %1771, %1780 : vector<6x128xf32>
    %1782 = vector.broadcast %1256 : f32 to vector<6x128xf32>
    %1783 = arith.mulf %1782, %1775 : vector<6x128xf32>
    %1784 = arith.addf %1774, %1783 : vector<6x128xf32>
    %c116_i32_360 = arith.constant 116 : i32
    %1785 = tpu.dynamic_rotate %1317 by %c116_i32_360 dim 1 : vector<6x128xf32>, i32 -> vector<6x128xf32>
    %1786 = vector.broadcast %1103 : f32 to vector<6x128xf32>
    %1787 = arith.mulf %1786, %1785 : vector<6x128xf32>
    %1788 = arith.addf %1718, %1787 : vector<6x128xf32>
    %1789 = vector.broadcast %1184 : f32 to vector<6x128xf32>
    %1790 = arith.mulf %1789, %1785 : vector<6x128xf32>
    %1791 = arith.addf %1721, %1790 : vector<6x128xf32>
    %1792 = vector.broadcast %1265 : f32 to vector<6x128xf32>
    %1793 = arith.mulf %1792, %1785 : vector<6x128xf32>
    %1794 = arith.addf %1724, %1793 : vector<6x128xf32>
    %c116_i32_361 = arith.constant 116 : i32
    %1795 = tpu.dynamic_rotate %1318 by %c116_i32_361 dim 1 : vector<6x128xf32>, i32 -> vector<6x128xf32>
    %1796 = vector.broadcast %1112 : f32 to vector<6x128xf32>
    %1797 = arith.mulf %1796, %1795 : vector<6x128xf32>
    %1798 = arith.addf %1788, %1797 : vector<6x128xf32>
    %1799 = vector.broadcast %1193 : f32 to vector<6x128xf32>
    %1800 = arith.mulf %1799, %1795 : vector<6x128xf32>
    %1801 = arith.addf %1791, %1800 : vector<6x128xf32>
    %1802 = vector.broadcast %1274 : f32 to vector<6x128xf32>
    %1803 = arith.mulf %1802, %1795 : vector<6x128xf32>
    %1804 = arith.addf %1794, %1803 : vector<6x128xf32>
    %c116_i32_362 = arith.constant 116 : i32
    %1805 = tpu.dynamic_rotate %1319 by %c116_i32_362 dim 1 : vector<6x128xf32>, i32 -> vector<6x128xf32>
    %1806 = vector.broadcast %1121 : f32 to vector<6x128xf32>
    %1807 = arith.mulf %1806, %1805 : vector<6x128xf32>
    %1808 = arith.addf %1798, %1807 : vector<6x128xf32>
    %1809 = vector.broadcast %1202 : f32 to vector<6x128xf32>
    %1810 = arith.mulf %1809, %1805 : vector<6x128xf32>
    %1811 = arith.addf %1801, %1810 : vector<6x128xf32>
    %1812 = vector.broadcast %1283 : f32 to vector<6x128xf32>
    %1813 = arith.mulf %1812, %1805 : vector<6x128xf32>
    %1814 = arith.addf %1804, %1813 : vector<6x128xf32>
    %c116_i32_363 = arith.constant 116 : i32
    %1815 = tpu.dynamic_rotate %1320 by %c116_i32_363 dim 1 : vector<6x128xf32>, i32 -> vector<6x128xf32>
    %1816 = vector.broadcast %1130 : f32 to vector<6x128xf32>
    %1817 = arith.mulf %1816, %1815 : vector<6x128xf32>
    %1818 = arith.addf %1748, %1817 : vector<6x128xf32>
    %1819 = vector.broadcast %1211 : f32 to vector<6x128xf32>
    %1820 = arith.mulf %1819, %1815 : vector<6x128xf32>
    %1821 = arith.addf %1751, %1820 : vector<6x128xf32>
    %1822 = vector.broadcast %1292 : f32 to vector<6x128xf32>
    %1823 = arith.mulf %1822, %1815 : vector<6x128xf32>
    %1824 = arith.addf %1754, %1823 : vector<6x128xf32>
    %c116_i32_364 = arith.constant 116 : i32
    %1825 = tpu.dynamic_rotate %1321 by %c116_i32_364 dim 1 : vector<6x128xf32>, i32 -> vector<6x128xf32>
    %1826 = vector.broadcast %1139 : f32 to vector<6x128xf32>
    %1827 = arith.mulf %1826, %1825 : vector<6x128xf32>
    %1828 = arith.addf %1818, %1827 : vector<6x128xf32>
    %1829 = vector.broadcast %1220 : f32 to vector<6x128xf32>
    %1830 = arith.mulf %1829, %1825 : vector<6x128xf32>
    %1831 = arith.addf %1821, %1830 : vector<6x128xf32>
    %1832 = vector.broadcast %1301 : f32 to vector<6x128xf32>
    %1833 = arith.mulf %1832, %1825 : vector<6x128xf32>
    %1834 = arith.addf %1824, %1833 : vector<6x128xf32>
    %c116_i32_365 = arith.constant 116 : i32
    %1835 = tpu.dynamic_rotate %1322 by %c116_i32_365 dim 1 : vector<6x128xf32>, i32 -> vector<6x128xf32>
    %1836 = vector.broadcast %1148 : f32 to vector<6x128xf32>
    %1837 = arith.mulf %1836, %1835 : vector<6x128xf32>
    %1838 = arith.addf %1828, %1837 : vector<6x128xf32>
    %1839 = vector.broadcast %1229 : f32 to vector<6x128xf32>
    %1840 = arith.mulf %1839, %1835 : vector<6x128xf32>
    %1841 = arith.addf %1831, %1840 : vector<6x128xf32>
    %1842 = vector.broadcast %1310 : f32 to vector<6x128xf32>
    %1843 = arith.mulf %1842, %1835 : vector<6x128xf32>
    %1844 = arith.addf %1834, %1843 : vector<6x128xf32>
    %c108_i32_366 = arith.constant 108 : i32
    %1845 = tpu.dynamic_rotate %1314 by %c108_i32_366 dim 1 : vector<6x128xf32>, i32 -> vector<6x128xf32>
    %1846 = vector.broadcast %1077 : f32 to vector<6x128xf32>
    %1847 = arith.mulf %1846, %1845 : vector<6x128xf32>
    %1848 = arith.addf %1778, %1847 : vector<6x128xf32>
    %1849 = vector.broadcast %1158 : f32 to vector<6x128xf32>
    %1850 = arith.mulf %1849, %1845 : vector<6x128xf32>
    %1851 = arith.addf %1781, %1850 : vector<6x128xf32>
    %1852 = vector.broadcast %1239 : f32 to vector<6x128xf32>
    %1853 = arith.mulf %1852, %1845 : vector<6x128xf32>
    %1854 = arith.addf %1784, %1853 : vector<6x128xf32>
    %c108_i32_367 = arith.constant 108 : i32
    %1855 = tpu.dynamic_rotate %1315 by %c108_i32_367 dim 1 : vector<6x128xf32>, i32 -> vector<6x128xf32>
    %1856 = vector.broadcast %1086 : f32 to vector<6x128xf32>
    %1857 = arith.mulf %1856, %1855 : vector<6x128xf32>
    %1858 = arith.addf %1848, %1857 : vector<6x128xf32>
    %1859 = vector.broadcast %1167 : f32 to vector<6x128xf32>
    %1860 = arith.mulf %1859, %1855 : vector<6x128xf32>
    %1861 = arith.addf %1851, %1860 : vector<6x128xf32>
    %1862 = vector.broadcast %1248 : f32 to vector<6x128xf32>
    %1863 = arith.mulf %1862, %1855 : vector<6x128xf32>
    %1864 = arith.addf %1854, %1863 : vector<6x128xf32>
    %c108_i32_368 = arith.constant 108 : i32
    %1865 = tpu.dynamic_rotate %1316 by %c108_i32_368 dim 1 : vector<6x128xf32>, i32 -> vector<6x128xf32>
    %1866 = vector.broadcast %1095 : f32 to vector<6x128xf32>
    %1867 = arith.mulf %1866, %1865 : vector<6x128xf32>
    %1868 = arith.addf %1858, %1867 : vector<6x128xf32>
    %1869 = vector.broadcast %1176 : f32 to vector<6x128xf32>
    %1870 = arith.mulf %1869, %1865 : vector<6x128xf32>
    %1871 = arith.addf %1861, %1870 : vector<6x128xf32>
    %1872 = vector.broadcast %1257 : f32 to vector<6x128xf32>
    %1873 = arith.mulf %1872, %1865 : vector<6x128xf32>
    %1874 = arith.addf %1864, %1873 : vector<6x128xf32>
    %c108_i32_369 = arith.constant 108 : i32
    %1875 = tpu.dynamic_rotate %1317 by %c108_i32_369 dim 1 : vector<6x128xf32>, i32 -> vector<6x128xf32>
    %1876 = vector.broadcast %1104 : f32 to vector<6x128xf32>
    %1877 = arith.mulf %1876, %1875 : vector<6x128xf32>
    %1878 = arith.addf %1808, %1877 : vector<6x128xf32>
    %1879 = vector.broadcast %1185 : f32 to vector<6x128xf32>
    %1880 = arith.mulf %1879, %1875 : vector<6x128xf32>
    %1881 = arith.addf %1811, %1880 : vector<6x128xf32>
    %1882 = vector.broadcast %1266 : f32 to vector<6x128xf32>
    %1883 = arith.mulf %1882, %1875 : vector<6x128xf32>
    %1884 = arith.addf %1814, %1883 : vector<6x128xf32>
    %c108_i32_370 = arith.constant 108 : i32
    %1885 = tpu.dynamic_rotate %1318 by %c108_i32_370 dim 1 : vector<6x128xf32>, i32 -> vector<6x128xf32>
    %1886 = vector.broadcast %1113 : f32 to vector<6x128xf32>
    %1887 = arith.mulf %1886, %1885 : vector<6x128xf32>
    %1888 = arith.addf %1878, %1887 : vector<6x128xf32>
    %1889 = vector.broadcast %1194 : f32 to vector<6x128xf32>
    %1890 = arith.mulf %1889, %1885 : vector<6x128xf32>
    %1891 = arith.addf %1881, %1890 : vector<6x128xf32>
    %1892 = vector.broadcast %1275 : f32 to vector<6x128xf32>
    %1893 = arith.mulf %1892, %1885 : vector<6x128xf32>
    %1894 = arith.addf %1884, %1893 : vector<6x128xf32>
    %c108_i32_371 = arith.constant 108 : i32
    %1895 = tpu.dynamic_rotate %1319 by %c108_i32_371 dim 1 : vector<6x128xf32>, i32 -> vector<6x128xf32>
    %1896 = vector.broadcast %1122 : f32 to vector<6x128xf32>
    %1897 = arith.mulf %1896, %1895 : vector<6x128xf32>
    %1898 = arith.addf %1888, %1897 : vector<6x128xf32>
    %1899 = vector.broadcast %1203 : f32 to vector<6x128xf32>
    %1900 = arith.mulf %1899, %1895 : vector<6x128xf32>
    %1901 = arith.addf %1891, %1900 : vector<6x128xf32>
    %1902 = vector.broadcast %1284 : f32 to vector<6x128xf32>
    %1903 = arith.mulf %1902, %1895 : vector<6x128xf32>
    %1904 = arith.addf %1894, %1903 : vector<6x128xf32>
    %c108_i32_372 = arith.constant 108 : i32
    %1905 = tpu.dynamic_rotate %1320 by %c108_i32_372 dim 1 : vector<6x128xf32>, i32 -> vector<6x128xf32>
    %1906 = vector.broadcast %1131 : f32 to vector<6x128xf32>
    %1907 = arith.mulf %1906, %1905 : vector<6x128xf32>
    %1908 = arith.addf %1838, %1907 : vector<6x128xf32>
    %1909 = vector.broadcast %1212 : f32 to vector<6x128xf32>
    %1910 = arith.mulf %1909, %1905 : vector<6x128xf32>
    %1911 = arith.addf %1841, %1910 : vector<6x128xf32>
    %1912 = vector.broadcast %1293 : f32 to vector<6x128xf32>
    %1913 = arith.mulf %1912, %1905 : vector<6x128xf32>
    %1914 = arith.addf %1844, %1913 : vector<6x128xf32>
    %c108_i32_373 = arith.constant 108 : i32
    %1915 = tpu.dynamic_rotate %1321 by %c108_i32_373 dim 1 : vector<6x128xf32>, i32 -> vector<6x128xf32>
    %1916 = vector.broadcast %1140 : f32 to vector<6x128xf32>
    %1917 = arith.mulf %1916, %1915 : vector<6x128xf32>
    %1918 = arith.addf %1908, %1917 : vector<6x128xf32>
    %1919 = vector.broadcast %1221 : f32 to vector<6x128xf32>
    %1920 = arith.mulf %1919, %1915 : vector<6x128xf32>
    %1921 = arith.addf %1911, %1920 : vector<6x128xf32>
    %1922 = vector.broadcast %1302 : f32 to vector<6x128xf32>
    %1923 = arith.mulf %1922, %1915 : vector<6x128xf32>
    %1924 = arith.addf %1914, %1923 : vector<6x128xf32>
    %c108_i32_374 = arith.constant 108 : i32
    %1925 = tpu.dynamic_rotate %1322 by %c108_i32_374 dim 1 : vector<6x128xf32>, i32 -> vector<6x128xf32>
    %1926 = vector.broadcast %1149 : f32 to vector<6x128xf32>
    %1927 = arith.mulf %1926, %1925 : vector<6x128xf32>
    %1928 = arith.addf %1918, %1927 : vector<6x128xf32>
    %1929 = vector.broadcast %1230 : f32 to vector<6x128xf32>
    %1930 = arith.mulf %1929, %1925 : vector<6x128xf32>
    %1931 = arith.addf %1921, %1930 : vector<6x128xf32>
    %1932 = vector.broadcast %1311 : f32 to vector<6x128xf32>
    %1933 = arith.mulf %1932, %1925 : vector<6x128xf32>
    %1934 = arith.addf %1924, %1933 : vector<6x128xf32>
    %c107_i32_375 = arith.constant 107 : i32
    %1935 = tpu.dynamic_rotate %1314 by %c107_i32_375 dim 1 : vector<6x128xf32>, i32 -> vector<6x128xf32>
    %1936 = vector.broadcast %1078 : f32 to vector<6x128xf32>
    %1937 = arith.mulf %1936, %1935 : vector<6x128xf32>
    %1938 = arith.addf %1868, %1937 : vector<6x128xf32>
    %1939 = vector.broadcast %1159 : f32 to vector<6x128xf32>
    %1940 = arith.mulf %1939, %1935 : vector<6x128xf32>
    %1941 = arith.addf %1871, %1940 : vector<6x128xf32>
    %1942 = vector.broadcast %1240 : f32 to vector<6x128xf32>
    %1943 = arith.mulf %1942, %1935 : vector<6x128xf32>
    %1944 = arith.addf %1874, %1943 : vector<6x128xf32>
    %c107_i32_376 = arith.constant 107 : i32
    %1945 = tpu.dynamic_rotate %1315 by %c107_i32_376 dim 1 : vector<6x128xf32>, i32 -> vector<6x128xf32>
    %1946 = vector.broadcast %1087 : f32 to vector<6x128xf32>
    %1947 = arith.mulf %1946, %1945 : vector<6x128xf32>
    %1948 = arith.addf %1938, %1947 : vector<6x128xf32>
    %1949 = vector.broadcast %1168 : f32 to vector<6x128xf32>
    %1950 = arith.mulf %1949, %1945 : vector<6x128xf32>
    %1951 = arith.addf %1941, %1950 : vector<6x128xf32>
    %1952 = vector.broadcast %1249 : f32 to vector<6x128xf32>
    %1953 = arith.mulf %1952, %1945 : vector<6x128xf32>
    %1954 = arith.addf %1944, %1953 : vector<6x128xf32>
    %c107_i32_377 = arith.constant 107 : i32
    %1955 = tpu.dynamic_rotate %1316 by %c107_i32_377 dim 1 : vector<6x128xf32>, i32 -> vector<6x128xf32>
    %1956 = vector.broadcast %1096 : f32 to vector<6x128xf32>
    %1957 = arith.mulf %1956, %1955 : vector<6x128xf32>
    %1958 = arith.addf %1948, %1957 : vector<6x128xf32>
    %1959 = vector.broadcast %1177 : f32 to vector<6x128xf32>
    %1960 = arith.mulf %1959, %1955 : vector<6x128xf32>
    %1961 = arith.addf %1951, %1960 : vector<6x128xf32>
    %1962 = vector.broadcast %1258 : f32 to vector<6x128xf32>
    %1963 = arith.mulf %1962, %1955 : vector<6x128xf32>
    %1964 = arith.addf %1954, %1963 : vector<6x128xf32>
    %c107_i32_378 = arith.constant 107 : i32
    %1965 = tpu.dynamic_rotate %1317 by %c107_i32_378 dim 1 : vector<6x128xf32>, i32 -> vector<6x128xf32>
    %1966 = vector.broadcast %1105 : f32 to vector<6x128xf32>
    %1967 = arith.mulf %1966, %1965 : vector<6x128xf32>
    %1968 = arith.addf %1898, %1967 : vector<6x128xf32>
    %1969 = vector.broadcast %1186 : f32 to vector<6x128xf32>
    %1970 = arith.mulf %1969, %1965 : vector<6x128xf32>
    %1971 = arith.addf %1901, %1970 : vector<6x128xf32>
    %1972 = vector.broadcast %1267 : f32 to vector<6x128xf32>
    %1973 = arith.mulf %1972, %1965 : vector<6x128xf32>
    %1974 = arith.addf %1904, %1973 : vector<6x128xf32>
    %c107_i32_379 = arith.constant 107 : i32
    %1975 = tpu.dynamic_rotate %1318 by %c107_i32_379 dim 1 : vector<6x128xf32>, i32 -> vector<6x128xf32>
    %1976 = vector.broadcast %1114 : f32 to vector<6x128xf32>
    %1977 = arith.mulf %1976, %1975 : vector<6x128xf32>
    %1978 = arith.addf %1968, %1977 : vector<6x128xf32>
    %1979 = vector.broadcast %1195 : f32 to vector<6x128xf32>
    %1980 = arith.mulf %1979, %1975 : vector<6x128xf32>
    %1981 = arith.addf %1971, %1980 : vector<6x128xf32>
    %1982 = vector.broadcast %1276 : f32 to vector<6x128xf32>
    %1983 = arith.mulf %1982, %1975 : vector<6x128xf32>
    %1984 = arith.addf %1974, %1983 : vector<6x128xf32>
    %c107_i32_380 = arith.constant 107 : i32
    %1985 = tpu.dynamic_rotate %1319 by %c107_i32_380 dim 1 : vector<6x128xf32>, i32 -> vector<6x128xf32>
    %1986 = vector.broadcast %1123 : f32 to vector<6x128xf32>
    %1987 = arith.mulf %1986, %1985 : vector<6x128xf32>
    %1988 = arith.addf %1978, %1987 : vector<6x128xf32>
    %1989 = vector.broadcast %1204 : f32 to vector<6x128xf32>
    %1990 = arith.mulf %1989, %1985 : vector<6x128xf32>
    %1991 = arith.addf %1981, %1990 : vector<6x128xf32>
    %1992 = vector.broadcast %1285 : f32 to vector<6x128xf32>
    %1993 = arith.mulf %1992, %1985 : vector<6x128xf32>
    %1994 = arith.addf %1984, %1993 : vector<6x128xf32>
    %c107_i32_381 = arith.constant 107 : i32
    %1995 = tpu.dynamic_rotate %1320 by %c107_i32_381 dim 1 : vector<6x128xf32>, i32 -> vector<6x128xf32>
    %1996 = vector.broadcast %1132 : f32 to vector<6x128xf32>
    %1997 = arith.mulf %1996, %1995 : vector<6x128xf32>
    %1998 = arith.addf %1928, %1997 : vector<6x128xf32>
    %1999 = vector.broadcast %1213 : f32 to vector<6x128xf32>
    %2000 = arith.mulf %1999, %1995 : vector<6x128xf32>
    %2001 = arith.addf %1931, %2000 : vector<6x128xf32>
    %2002 = vector.broadcast %1294 : f32 to vector<6x128xf32>
    %2003 = arith.mulf %2002, %1995 : vector<6x128xf32>
    %2004 = arith.addf %1934, %2003 : vector<6x128xf32>
    %c107_i32_382 = arith.constant 107 : i32
    %2005 = tpu.dynamic_rotate %1321 by %c107_i32_382 dim 1 : vector<6x128xf32>, i32 -> vector<6x128xf32>
    %2006 = vector.broadcast %1141 : f32 to vector<6x128xf32>
    %2007 = arith.mulf %2006, %2005 : vector<6x128xf32>
    %2008 = arith.addf %1998, %2007 : vector<6x128xf32>
    %2009 = vector.broadcast %1222 : f32 to vector<6x128xf32>
    %2010 = arith.mulf %2009, %2005 : vector<6x128xf32>
    %2011 = arith.addf %2001, %2010 : vector<6x128xf32>
    %2012 = vector.broadcast %1303 : f32 to vector<6x128xf32>
    %2013 = arith.mulf %2012, %2005 : vector<6x128xf32>
    %2014 = arith.addf %2004, %2013 : vector<6x128xf32>
    %c107_i32_383 = arith.constant 107 : i32
    %2015 = tpu.dynamic_rotate %1322 by %c107_i32_383 dim 1 : vector<6x128xf32>, i32 -> vector<6x128xf32>
    %2016 = vector.broadcast %1150 : f32 to vector<6x128xf32>
    %2017 = arith.mulf %2016, %2015 : vector<6x128xf32>
    %2018 = arith.addf %2008, %2017 : vector<6x128xf32>
    %2019 = vector.broadcast %1231 : f32 to vector<6x128xf32>
    %2020 = arith.mulf %2019, %2015 : vector<6x128xf32>
    %2021 = arith.addf %2011, %2020 : vector<6x128xf32>
    %2022 = vector.broadcast %1312 : f32 to vector<6x128xf32>
    %2023 = arith.mulf %2022, %2015 : vector<6x128xf32>
    %2024 = arith.addf %2014, %2023 : vector<6x128xf32>
    %c106_i32_384 = arith.constant 106 : i32
    %2025 = tpu.dynamic_rotate %1314 by %c106_i32_384 dim 1 : vector<6x128xf32>, i32 -> vector<6x128xf32>
    %2026 = vector.broadcast %1079 : f32 to vector<6x128xf32>
    %2027 = arith.mulf %2026, %2025 : vector<6x128xf32>
    %2028 = arith.addf %1958, %2027 : vector<6x128xf32>
    %2029 = vector.broadcast %1160 : f32 to vector<6x128xf32>
    %2030 = arith.mulf %2029, %2025 : vector<6x128xf32>
    %2031 = arith.addf %1961, %2030 : vector<6x128xf32>
    %2032 = vector.broadcast %1241 : f32 to vector<6x128xf32>
    %2033 = arith.mulf %2032, %2025 : vector<6x128xf32>
    %2034 = arith.addf %1964, %2033 : vector<6x128xf32>
    %c106_i32_385 = arith.constant 106 : i32
    %2035 = tpu.dynamic_rotate %1315 by %c106_i32_385 dim 1 : vector<6x128xf32>, i32 -> vector<6x128xf32>
    %2036 = vector.broadcast %1088 : f32 to vector<6x128xf32>
    %2037 = arith.mulf %2036, %2035 : vector<6x128xf32>
    %2038 = arith.addf %2028, %2037 : vector<6x128xf32>
    %2039 = vector.broadcast %1169 : f32 to vector<6x128xf32>
    %2040 = arith.mulf %2039, %2035 : vector<6x128xf32>
    %2041 = arith.addf %2031, %2040 : vector<6x128xf32>
    %2042 = vector.broadcast %1250 : f32 to vector<6x128xf32>
    %2043 = arith.mulf %2042, %2035 : vector<6x128xf32>
    %2044 = arith.addf %2034, %2043 : vector<6x128xf32>
    %c106_i32_386 = arith.constant 106 : i32
    %2045 = tpu.dynamic_rotate %1316 by %c106_i32_386 dim 1 : vector<6x128xf32>, i32 -> vector<6x128xf32>
    %2046 = vector.broadcast %1097 : f32 to vector<6x128xf32>
    %2047 = arith.mulf %2046, %2045 : vector<6x128xf32>
    %2048 = arith.addf %2038, %2047 : vector<6x128xf32>
    %2049 = vector.broadcast %1178 : f32 to vector<6x128xf32>
    %2050 = arith.mulf %2049, %2045 : vector<6x128xf32>
    %2051 = arith.addf %2041, %2050 : vector<6x128xf32>
    %2052 = vector.broadcast %1259 : f32 to vector<6x128xf32>
    %2053 = arith.mulf %2052, %2045 : vector<6x128xf32>
    %2054 = arith.addf %2044, %2053 : vector<6x128xf32>
    %c106_i32_387 = arith.constant 106 : i32
    %2055 = tpu.dynamic_rotate %1317 by %c106_i32_387 dim 1 : vector<6x128xf32>, i32 -> vector<6x128xf32>
    %2056 = vector.broadcast %1106 : f32 to vector<6x128xf32>
    %2057 = arith.mulf %2056, %2055 : vector<6x128xf32>
    %2058 = arith.addf %1988, %2057 : vector<6x128xf32>
    %2059 = vector.broadcast %1187 : f32 to vector<6x128xf32>
    %2060 = arith.mulf %2059, %2055 : vector<6x128xf32>
    %2061 = arith.addf %1991, %2060 : vector<6x128xf32>
    %2062 = vector.broadcast %1268 : f32 to vector<6x128xf32>
    %2063 = arith.mulf %2062, %2055 : vector<6x128xf32>
    %2064 = arith.addf %1994, %2063 : vector<6x128xf32>
    %c106_i32_388 = arith.constant 106 : i32
    %2065 = tpu.dynamic_rotate %1318 by %c106_i32_388 dim 1 : vector<6x128xf32>, i32 -> vector<6x128xf32>
    %2066 = vector.broadcast %1115 : f32 to vector<6x128xf32>
    %2067 = arith.mulf %2066, %2065 : vector<6x128xf32>
    %2068 = arith.addf %2058, %2067 : vector<6x128xf32>
    %2069 = vector.broadcast %1196 : f32 to vector<6x128xf32>
    %2070 = arith.mulf %2069, %2065 : vector<6x128xf32>
    %2071 = arith.addf %2061, %2070 : vector<6x128xf32>
    %2072 = vector.broadcast %1277 : f32 to vector<6x128xf32>
    %2073 = arith.mulf %2072, %2065 : vector<6x128xf32>
    %2074 = arith.addf %2064, %2073 : vector<6x128xf32>
    %c106_i32_389 = arith.constant 106 : i32
    %2075 = tpu.dynamic_rotate %1319 by %c106_i32_389 dim 1 : vector<6x128xf32>, i32 -> vector<6x128xf32>
    %2076 = vector.broadcast %1124 : f32 to vector<6x128xf32>
    %2077 = arith.mulf %2076, %2075 : vector<6x128xf32>
    %2078 = arith.addf %2068, %2077 : vector<6x128xf32>
    %2079 = vector.broadcast %1205 : f32 to vector<6x128xf32>
    %2080 = arith.mulf %2079, %2075 : vector<6x128xf32>
    %2081 = arith.addf %2071, %2080 : vector<6x128xf32>
    %2082 = vector.broadcast %1286 : f32 to vector<6x128xf32>
    %2083 = arith.mulf %2082, %2075 : vector<6x128xf32>
    %2084 = arith.addf %2074, %2083 : vector<6x128xf32>
    %c106_i32_390 = arith.constant 106 : i32
    %2085 = tpu.dynamic_rotate %1320 by %c106_i32_390 dim 1 : vector<6x128xf32>, i32 -> vector<6x128xf32>
    %2086 = vector.broadcast %1133 : f32 to vector<6x128xf32>
    %2087 = arith.mulf %2086, %2085 : vector<6x128xf32>
    %2088 = arith.addf %2018, %2087 : vector<6x128xf32>
    %2089 = vector.broadcast %1214 : f32 to vector<6x128xf32>
    %2090 = arith.mulf %2089, %2085 : vector<6x128xf32>
    %2091 = arith.addf %2021, %2090 : vector<6x128xf32>
    %2092 = vector.broadcast %1295 : f32 to vector<6x128xf32>
    %2093 = arith.mulf %2092, %2085 : vector<6x128xf32>
    %2094 = arith.addf %2024, %2093 : vector<6x128xf32>
    %c106_i32_391 = arith.constant 106 : i32
    %2095 = tpu.dynamic_rotate %1321 by %c106_i32_391 dim 1 : vector<6x128xf32>, i32 -> vector<6x128xf32>
    %2096 = vector.broadcast %1142 : f32 to vector<6x128xf32>
    %2097 = arith.mulf %2096, %2095 : vector<6x128xf32>
    %2098 = arith.addf %2088, %2097 : vector<6x128xf32>
    %2099 = vector.broadcast %1223 : f32 to vector<6x128xf32>
    %2100 = arith.mulf %2099, %2095 : vector<6x128xf32>
    %2101 = arith.addf %2091, %2100 : vector<6x128xf32>
    %2102 = vector.broadcast %1304 : f32 to vector<6x128xf32>
    %2103 = arith.mulf %2102, %2095 : vector<6x128xf32>
    %2104 = arith.addf %2094, %2103 : vector<6x128xf32>
    %c106_i32_392 = arith.constant 106 : i32
    %2105 = tpu.dynamic_rotate %1322 by %c106_i32_392 dim 1 : vector<6x128xf32>, i32 -> vector<6x128xf32>
    %2106 = vector.broadcast %1151 : f32 to vector<6x128xf32>
    %2107 = arith.mulf %2106, %2105 : vector<6x128xf32>
    %2108 = arith.addf %2098, %2107 : vector<6x128xf32>
    %2109 = vector.broadcast %1232 : f32 to vector<6x128xf32>
    %2110 = arith.mulf %2109, %2105 : vector<6x128xf32>
    %2111 = arith.addf %2101, %2110 : vector<6x128xf32>
    %2112 = vector.broadcast %1313 : f32 to vector<6x128xf32>
    %2113 = arith.mulf %2112, %2105 : vector<6x128xf32>
    %2114 = arith.addf %2104, %2113 : vector<6x128xf32>
    %2115 = arith.addf %2048, %2078 : vector<6x128xf32>
    %2116 = arith.addf %2115, %2108 : vector<6x128xf32>
    %c0_393 = arith.constant 0 : index
    %2117 = memref.load %arg4[%c0_393] : memref<3xf32, #tpu.memory_space<smem>>
    %2118 = vector.broadcast %2117 : f32 to vector<6x128xf32>
    %2119 = arith.addf %2116, %2118 : vector<6x128xf32>
    %2120 = arith.addf %2051, %2081 : vector<6x128xf32>
    %2121 = arith.addf %2120, %2111 : vector<6x128xf32>
    %c1_394 = arith.constant 1 : index
    %2122 = memref.load %arg4[%c1_394] : memref<3xf32, #tpu.memory_space<smem>>
    %2123 = vector.broadcast %2122 : f32 to vector<6x128xf32>
    %2124 = arith.addf %2121, %2123 : vector<6x128xf32>
    %2125 = arith.addf %2054, %2084 : vector<6x128xf32>
    %2126 = arith.addf %2125, %2114 : vector<6x128xf32>
    %c2_395 = arith.constant 2 : index
    %2127 = memref.load %arg4[%c2_395] : memref<3xf32, #tpu.memory_space<smem>>
    %2128 = vector.broadcast %2127 : f32 to vector<6x128xf32>
    %2129 = arith.addf %2126, %2128 : vector<6x128xf32>
    %c0_396 = arith.constant 0 : index
    %c0_397 = arith.constant 0 : index
    %c0_398 = arith.constant 0 : index
    %2130 = vector.load %arg5[%c0_396, %c0_397, %c0_398] : memref<3x6x128xf32, #tpu.memory_space<vmem>>, vector<1x6x128xf32>
    %2131 = vector.shape_cast %2130 : vector<1x6x128xf32> to vector<6x128xf32>
    %2132 = vector.shape_cast %2119 : vector<6x128xf32> to vector<1x6x128xf32>
    tpu.vector_store %arg5[%c0_396, %c0_397, %c0_398], %2132 {strides = array<i32>} : memref<3x6x128xf32, #tpu.memory_space<vmem>>, vector<1x6x128xf32>,
    %c1_399 = arith.constant 1 : index
    %c0_400 = arith.constant 0 : index
    %c0_401 = arith.constant 0 : index
    %2133 = vector.load %arg5[%c1_399, %c0_400, %c0_401] : memref<3x6x128xf32, #tpu.memory_space<vmem>>, vector<1x6x128xf32>
    %2134 = vector.shape_cast %2133 : vector<1x6x128xf32> to vector<6x128xf32>
    %2135 = vector.shape_cast %2124 : vector<6x128xf32> to vector<1x6x128xf32>
    tpu.vector_store %arg5[%c1_399, %c0_400, %c0_401], %2135 {strides = array<i32>} : memref<3x6x128xf32, #tpu.memory_space<vmem>>, vector<1x6x128xf32>,
    %c2_402 = arith.constant 2 : index
    %c0_403 = arith.constant 0 : index
    %c0_404 = arith.constant 0 : index
    %2136 = vector.load %arg5[%c2_402, %c0_403, %c0_404] : memref<3x6x128xf32, #tpu.memory_space<vmem>>, vector<1x6x128xf32>
    %2137 = vector.shape_cast %2136 : vector<1x6x128xf32> to vector<6x128xf32>
    %2138 = vector.shape_cast %2129 : vector<6x128xf32> to vector<1x6x128xf32>
    tpu.vector_store %arg5[%c2_402, %c0_403, %c0_404], %2138 {strides = array<i32>} : memref<3x6x128xf32, #tpu.memory_space<vmem>>, vector<1x6x128xf32>,
    return
  }
}

</mosaic_0001>

<llo_original>
// kernel: tpu_custom_call.1
$region0: #{tpu_custom_call.1}
  #allocation0 [shape = 'u32[]', space=smem, size = 0x4, offset = 0x4, fixed_abs, tag = 'smem constant byte address 0x4 - core index']
  #allocation1 [shape = 'u32[144,128]{1,0:T(1,128)}', space=vmem, size = 0x12000, scoped, tag = 'internal scratch']
  %s0 = inlined_call_operand.vmem [shape: f32[3,10,128], index: 0, kind: input, shape index: {}]
  %s1 = inlined_call_operand.vmem [shape: f32[243], index: 1, kind: input, shape index: {}]
  %s2 = inlined_call_operand.vmem [shape: f32[3], index: 2, kind: input, shape index: {}]
  %s3 = inlined_call_operand.vmem [shape: f32[243], index: 3, kind: input, shape index: {}]
  %s4 = inlined_call_operand.vmem [shape: f32[3], index: 4, kind: input, shape index: {}]
  %s5 = inlined_call_operand.hbm [shape: f32[3,6,128], index: 5, kind: output, shape index: {}]
  %s6 = sld [smem:[#allocation0]]
  $region46: #{tpu_custom_call.1} parent=0
    _
  %s8 = ssub.s32 1, %s6
  %s9 = scalar_select 0, %s8, %s6
  $region1: #{tpu_custom_call.1} parent=0
    #allocation2 [shape = 'u8[1024]{0}', space=smem, size = 0x400, scoped, tag = 'input window, operand 1, single buffered']
    #allocation3 [shape = 's32[1]{0}', space=sflag, size = 0x4, scoped, tag = 'scoped memory for tpu_custom_call.1']
    #allocation4 [shape = 's32[1]{0}', space=sflag, size = 0x4, scoped, tag = 'scoped memory for tpu_custom_call.1']
    #allocation5 [shape = 'u8[512]{0}', space=smem, size = 0x200, scoped, tag = 'input window, operand 2, single buffered']
    #allocation6 [shape = 's32[1]{0}', space=sflag, size = 0x4, scoped, tag = 'scoped memory for tpu_custom_call.1']
    #allocation7 [shape = 'u8[1024]{0}', space=smem, size = 0x400, scoped, tag = 'input window, operand 3, single buffered']
    #allocation8 [shape = 'u8[512]{0}', space=smem, size = 0x200, scoped, tag = 'input window, operand 4, single buffered']
    #allocation9 [shape = 's32[1]{0}', space=sflag, size = 0x4, scoped, tag = 'scoped memory for tpu_custom_call.1']
    #allocation10 [shape = 'u8[12288]{0}', space=vmem, size = 0x3000, scoped, tag = 'output window, operand 0, single buffered']
    %10 = vsyncpa [#allocation4], 0
    %11 = vsyncpa [#allocation6], 0
    %12 = vsyncpa [#allocation9], 0
    %13 = vsyncpa [#allocation3], 0
    // Predicated region
    $region2: #{tpu_custom_call.1} parent=1 // pred_check
      _
    $region3: #{tpu_custom_call.1} parent=1 // pred_check_branch
      %15 = sbr.rel (0) target = $region5
    $region4: #{tpu_custom_call.1} parent=1 // pred_region
      _
    $region5: #{tpu_custom_call.1} parent=1 // pred_fallthru
      _
    // Predicated region
    $region6: #{tpu_custom_call.1} parent=1 // pred_check
      _
    $region7: #{tpu_custom_call.1} parent=1 // pred_check_branch
      %17 = sbr.rel (0) target = $region9
    $region8: #{tpu_custom_call.1} parent=1 // pred_region
      %s19 = ssub.s32 32, 32
      %20 = vsyncadd [#allocation4], %s19
      %s22 = sshll.u32 %s1, 4
      %s23 = int_to_ptr.vmem [resolvable:$true] %s22
      %25 = dma.vmem_to_smem %s23, 32, [#allocation2], [#allocation4]
    $region9: #{tpu_custom_call.1} parent=1 // pred_fallthru
      _
    // Predicated region
    $region10: #{tpu_custom_call.1} parent=1 // pred_check
      _
    $region11: #{tpu_custom_call.1} parent=1 // pred_check_branch
      %27 = sbr.rel (0) target = $region13
    $region12: #{tpu_custom_call.1} parent=1 // pred_region
      %s29 = ssub.s32 16, 16
      %30 = vsyncadd [#allocation6], %s29
      %s32 = sshll.u32 %s2, 4
      %s33 = int_to_ptr.vmem [resolvable:$true] %s32
      %35 = dma.vmem_to_smem %s33, 16, [#allocation5], [#allocation6]
    $region13: #{tpu_custom_call.1} parent=1 // pred_fallthru
      _
    // Predicated region
    $region14: #{tpu_custom_call.1} parent=1 // pred_check
      _
    $region15: #{tpu_custom_call.1} parent=1 // pred_check_branch
      %37 = sbr.rel (0) target = $region17
    $region16: #{tpu_custom_call.1} parent=1 // pred_region
      %s39 = ssub.s32 32, 32
      %40 = vsyncadd [#allocation6], %s39
      %s42 = sshll.u32 %s3, 4
      %s43 = int_to_ptr.vmem [resolvable:$true] %s42
      %45 = dma.vmem_to_smem %s43, 32, [#allocation7], [#allocation6]
    $region17: #{tpu_custom_call.1} parent=1 // pred_fallthru
      _
    // Predicated region
    $region18: #{tpu_custom_call.1} parent=1 // pred_check
      _
    $region19: #{tpu_custom_call.1} parent=1 // pred_check_branch
      %47 = sbr.rel (0) target = $region21
    $region20: #{tpu_custom_call.1} parent=1 // pred_region
      %s49 = ssub.s32 16, 16
      %50 = vsyncadd [#allocation9], %s49
      %s52 = sshll.u32 %s4, 4
      %s53 = int_to_ptr.vmem [resolvable:$true] %s52
      %55 = dma.vmem_to_smem %s53, 16, [#allocation8], [#allocation9]
    $region21: #{tpu_custom_call.1} parent=1 // pred_fallthru
      _
    // Predicated region
    $region22: #{tpu_custom_call.1} parent=1 // pred_check
      _
    $region23: #{tpu_custom_call.1} parent=1 // pred_check_branch
      %57 = sbr.rel (0) target = $region25
    $region24: #{tpu_custom_call.1} parent=1 // pred_region
      %58 = dma.done [#allocation4], 32
    $region25: #{tpu_custom_call.1} parent=1 // pred_fallthru
      _
    // Predicated region
    $region26: #{tpu_custom_call.1} parent=1 // pred_check
      _
    $region27: #{tpu_custom_call.1} parent=1 // pred_check_branch
      %60 = sbr.rel (0) target = $region29
    $region28: #{tpu_custom_call.1} parent=1 // pred_region
      %61 = dma.done [#allocation6], 16
    $region29: #{tpu_custom_call.1} parent=1 // pred_fallthru
      _
    // Predicated region
    $region30: #{tpu_custom_call.1} parent=1 // pred_check
      _
    $region31: #{tpu_custom_call.1} parent=1 // pred_check_branch
      %63 = sbr.rel (0) target = $region33
    $region32: #{tpu_custom_call.1} parent=1 // pred_region
      %64 = dma.done [#allocation6], 32
    $region33: #{tpu_custom_call.1} parent=1 // pred_fallthru
      _
    // Predicated region
    $region34: #{tpu_custom_call.1} parent=1 // pred_check
      _
    $region35: #{tpu_custom_call.1} parent=1 // pred_check_branch
      %66 = sbr.rel (0) target = $region37
    $region36: #{tpu_custom_call.1} parent=1 // pred_region
      %67 = dma.done [#allocation9], 16
    $region37: #{tpu_custom_call.1} parent=1 // pred_fallthru
      _
    %68 = sfence
    %v69 = vld [vmem:[%s0] sm:$0xff]
    %v70 = vld [vmem:[%s0 + $0x8] sm:$0x3]
    %s71 = scalar_lea.vmem %s0, 16
    %v72 = vld [vmem:[%s71] sm:$0xff]
    %v73 = vld [vmem:[%s71 + $0x8] sm:$0x3]
    %s74 = scalar_lea.vmem %s0, 32
    %v75 = vld [vmem:[%s74] sm:$0xff]
    %v76 = vld [vmem:[%s74 + $0x8] sm:$0x3]
    %s77 = sld [smem:[#allocation2]]
    %s78 = sld [smem:[#allocation2 + $0x1]]
    %s79 = sld [smem:[#allocation2 + $0x2]]
    %s80 = sld [smem:[#allocation2 + $0x3]]
    %s81 = sld [smem:[#allocation2 + $0x4]]
    %s82 = sld [smem:[#allocation2 + $0x5]]
    %s83 = sld [smem:[#allocation2 + $0x6]]
    %s84 = sld [smem:[#allocation2 + $0x7]]
    %s85 = sld [smem:[#allocation2 + $0x8]]
    %s86 = sld [smem:[#allocation2 + $0x9]]
    %s87 = sld [smem:[#allocation2 + $0xa]]
    %s88 = sld [smem:[#allocation2 + $0xb]]
    %s89 = sld [smem:[#allocation2 + $0xc]]
    %s90 = sld [smem:[#allocation2 + $0xd]]
    %s91 = sld [smem:[#allocation2 + $0xe]]
    %s92 = sld [smem:[#allocation2 + $0xf]]
    %s93 = sld [smem:[#allocation2 + $0x10]]
    %s94 = sld [smem:[#allocation2 + $0x11]]
    %s95 = sld [smem:[#allocation2 + $0x12]]
    %s96 = sld [smem:[#allocation2 + $0x13]]
    %s97 = sld [smem:[#allocation2 + $0x14]]
    %s98 = sld [smem:[#allocation2 + $0x15]]
    %s99 = sld [smem:[#allocation2 + $0x16]]
    %s100 = sld [smem:[#allocation2 + $0x17]]
    %s101 = sld [smem:[#allocation2 + $0x18]]
    %s102 = sld [smem:[#allocation2 + $0x19]]
    %s103 = sld [smem:[#allocation2 + $0x1a]]
    %s104 = sld [smem:[#allocation2 + $0x1b]]
    %s105 = sld [smem:[#allocation2 + $0x1c]]
    %s106 = sld [smem:[#allocation2 + $0x1d]]
    %s107 = sld [smem:[#allocation2 + $0x1e]]
    %s108 = sld [smem:[#allocation2 + $0x1f]]
    %s109 = sld [smem:[#allocation2 + $0x20]]
    %s110 = sld [smem:[#allocation2 + $0x21]]
    %s111 = sld [smem:[#allocation2 + $0x22]]
    %s112 = sld [smem:[#allocation2 + $0x23]]
    %s113 = sld [smem:[#allocation2 + $0x24]]
    %s114 = sld [smem:[#allocation2 + $0x25]]
    %s115 = sld [smem:[#allocation2 + $0x26]]
    %s116 = sld [smem:[#allocation2 + $0x27]]
    %s117 = sld [smem:[#allocation2 + $0x28]]
    %s118 = sld [smem:[#allocation2 + $0x29]]
    %s119 = sld [smem:[#allocation2 + $0x2a]]
    %s120 = sld [smem:[#allocation2 + $0x2b]]
    %s121 = sld [smem:[#allocation2 + $0x2c]]
    %s122 = sld [smem:[#allocation2 + $0x2d]]
    %s123 = sld [smem:[#allocation2 + $0x2e]]
    %s124 = sld [smem:[#allocation2 + $0x2f]]
    %s125 = sld [smem:[#allocation2 + $0x30]]
    %s126 = sld [smem:[#allocation2 + $0x31]]
    %s127 = sld [smem:[#allocation2 + $0x32]]
    %s128 = sld [smem:[#allocation2 + $0x33]]
    %s129 = sld [smem:[#allocation2 + $0x34]]
    %s130 = sld [smem:[#allocation2 + $0x35]]
    %s131 = sld [smem:[#allocation2 + $0x36]]
    %s132 = sld [smem:[#allocation2 + $0x37]]
    %s133 = sld [smem:[#allocation2 + $0x38]]
    %s134 = sld [smem:[#allocation2 + $0x39]]
    %s135 = sld [smem:[#allocation2 + $0x3a]]
    %s136 = sld [smem:[#allocation2 + $0x3b]]
    %s137 = sld [smem:[#allocation2 + $0x3c]]
    %s138 = sld [smem:[#allocation2 + $0x3d]]
    %s139 = sld [smem:[#allocation2 + $0x3e]]
    %s140 = sld [smem:[#allocation2 + $0x3f]]
    %s141 = sld [smem:[#allocation2 + $0x40]]
    %s142 = sld [smem:[#allocation2 + $0x41]]
    %s143 = sld [smem:[#allocation2 + $0x42]]
    %s144 = sld [smem:[#allocation2 + $0x43]]
    %s145 = sld [smem:[#allocation2 + $0x44]]
    %s146 = sld [smem:[#allocation2 + $0x45]]
    %s147 = sld [smem:[#allocation2 + $0x46]]
    %s148 = sld [smem:[#allocation2 + $0x47]]
    %s149 = sld [smem:[#allocation2 + $0x48]]
    %s150 = sld [smem:[#allocation2 + $0x49]]
    %s151 = sld [smem:[#allocation2 + $0x4a]]
    %s152 = sld [smem:[#allocation2 + $0x4b]]
    %s153 = sld [smem:[#allocation2 + $0x4c]]
    %s154 = sld [smem:[#allocation2 + $0x4d]]
    %s155 = sld [smem:[#allocation2 + $0x4e]]
    %s156 = sld [smem:[#allocation2 + $0x4f]]
    %s157 = sld [smem:[#allocation2 + $0x50]]
    %s158 = sld [smem:[#allocation2 + $0x51]]
    %s159 = sld [smem:[#allocation2 + $0x52]]
    %s160 = sld [smem:[#allocation2 + $0x53]]
    %s161 = sld [smem:[#allocation2 + $0x54]]
    %s162 = sld [smem:[#allocation2 + $0x55]]
    %s163 = sld [smem:[#allocation2 + $0x56]]
    %s164 = sld [smem:[#allocation2 + $0x57]]
    %s165 = sld [smem:[#allocation2 + $0x58]]
    %s166 = sld [smem:[#allocation2 + $0x59]]
    %s167 = sld [smem:[#allocation2 + $0x5a]]
    %s168 = sld [smem:[#allocation2 + $0x5b]]
    %s169 = sld [smem:[#allocation2 + $0x5c]]
    %s170 = sld [smem:[#allocation2 + $0x5d]]
    %s171 = sld [smem:[#allocation2 + $0x5e]]
    %s172 = sld [smem:[#allocation2 + $0x5f]]
    %s173 = sld [smem:[#allocation2 + $0x60]]
    %s174 = sld [smem:[#allocation2 + $0x61]]
    %s175 = sld [smem:[#allocation2 + $0x62]]
    %s176 = sld [smem:[#allocation2 + $0x63]]
    %s177 = sld [smem:[#allocation2 + $0x64]]
    %s178 = sld [smem:[#allocation2 + $0x65]]
    %s179 = sld [smem:[#allocation2 + $0x66]]
    %s180 = sld [smem:[#allocation2 + $0x67]]
    %s181 = sld [smem:[#allocation2 + $0x68]]
    %s182 = sld [smem:[#allocation2 + $0x69]]
    %s183 = sld [smem:[#allocation2 + $0x6a]]
    %s184 = sld [smem:[#allocation2 + $0x6b]]
    %s185 = sld [smem:[#allocation2 + $0x6c]]
    %s186 = sld [smem:[#allocation2 + $0x6d]]
    %s187 = sld [smem:[#allocation2 + $0x6e]]
    %s188 = sld [smem:[#allocation2 + $0x6f]]
    %s189 = sld [smem:[#allocation2 + $0x70]]
    %s190 = sld [smem:[#allocation2 + $0x71]]
    %s191 = sld [smem:[#allocation2 + $0x72]]
    %s192 = sld [smem:[#allocation2 + $0x73]]
    %s193 = sld [smem:[#allocation2 + $0x74]]
    %s194 = sld [smem:[#allocation2 + $0x75]]
    %s195 = sld [smem:[#allocation2 + $0x76]]
    %s196 = sld [smem:[#allocation2 + $0x77]]
    %s197 = sld [smem:[#allocation2 + $0x78]]
    %s198 = sld [smem:[#allocation2 + $0x79]]
    %s199 = sld [smem:[#allocation2 + $0x7a]]
    %s200 = sld [smem:[#allocation2 + $0x7b]]
    %s201 = sld [smem:[#allocation2 + $0x7c]]
    %s202 = sld [smem:[#allocation2 + $0x7d]]
    %s203 = sld [smem:[#allocation2 + $0x7e]]
    %s204 = sld [smem:[#allocation2 + $0x7f]]
    %s205 = sld [smem:[#allocation2 + $0x80]]
    %s206 = sld [smem:[#allocation2 + $0x81]]
    %s207 = sld [smem:[#allocation2 + $0x82]]
    %s208 = sld [smem:[#allocation2 + $0x83]]
    %s209 = sld [smem:[#allocation2 + $0x84]]
    %s210 = sld [smem:[#allocation2 + $0x85]]
    %s211 = sld [smem:[#allocation2 + $0x86]]
    %s212 = sld [smem:[#allocation2 + $0x87]]
    %s213 = sld [smem:[#allocation2 + $0x88]]
    %s214 = sld [smem:[#allocation2 + $0x89]]
    %s215 = sld [smem:[#allocation2 + $0x8a]]
    %s216 = sld [smem:[#allocation2 + $0x8b]]
    %s217 = sld [smem:[#allocation2 + $0x8c]]
    %s218 = sld [smem:[#allocation2 + $0x8d]]
    %s219 = sld [smem:[#allocation2 + $0x8e]]
    %s220 = sld [smem:[#allocation2 + $0x8f]]
    %s221 = sld [smem:[#allocation2 + $0x90]]
    %s222 = sld [smem:[#allocation2 + $0x91]]
    %s223 = sld [smem:[#allocation2 + $0x92]]
    %s224 = sld [smem:[#allocation2 + $0x93]]
    %s225 = sld [smem:[#allocation2 + $0x94]]
    %s226 = sld [smem:[#allocation2 + $0x95]]
    %s227 = sld [smem:[#allocation2 + $0x96]]
    %s228 = sld [smem:[#allocation2 + $0x97]]
    %s229 = sld [smem:[#allocation2 + $0x98]]
    %s230 = sld [smem:[#allocation2 + $0x99]]
    %s231 = sld [smem:[#allocation2 + $0x9a]]
    %s232 = sld [smem:[#allocation2 + $0x9b]]
    %s233 = sld [smem:[#allocation2 + $0x9c]]
    %s234 = sld [smem:[#allocation2 + $0x9d]]
    %s235 = sld [smem:[#allocation2 + $0x9e]]
    %s236 = sld [smem:[#allocation2 + $0x9f]]
    %s237 = sld [smem:[#allocation2 + $0xa0]]
    %s238 = sld [smem:[#allocation2 + $0xa1]]
    %s239 = sld [smem:[#allocation2 + $0xa2]]
    %s240 = sld [smem:[#allocation2 + $0xa3]]
    %s241 = sld [smem:[#allocation2 + $0xa4]]
    %s242 = sld [smem:[#allocation2 + $0xa5]]
    %s243 = sld [smem:[#allocation2 + $0xa6]]
    %s244 = sld [smem:[#allocation2 + $0xa7]]
    %s245 = sld [smem:[#allocation2 + $0xa8]]
    %s246 = sld [smem:[#allocation2 + $0xa9]]
    %s247 = sld [smem:[#allocation2 + $0xaa]]
    %s248 = sld [smem:[#allocation2 + $0xab]]
    %s249 = sld [smem:[#allocation2 + $0xac]]
    %s250 = sld [smem:[#allocation2 + $0xad]]
    %s251 = sld [smem:[#allocation2 + $0xae]]
    %s252 = sld [smem:[#allocation2 + $0xaf]]
    %s253 = sld [smem:[#allocation2 + $0xb0]]
    %s254 = sld [smem:[#allocation2 + $0xb1]]
    %s255 = sld [smem:[#allocation2 + $0xb2]]
    %s256 = sld [smem:[#allocation2 + $0xb3]]
    %s257 = sld [smem:[#allocation2 + $0xb4]]
    %s258 = sld [smem:[#allocation2 + $0xb5]]
    %s259 = sld [smem:[#allocation2 + $0xb6]]
    %s260 = sld [smem:[#allocation2 + $0xb7]]
    %s261 = sld [smem:[#allocation2 + $0xb8]]
    %s262 = sld [smem:[#allocation2 + $0xb9]]
    %s263 = sld [smem:[#allocation2 + $0xba]]
    %s264 = sld [smem:[#allocation2 + $0xbb]]
    %s265 = sld [smem:[#allocation2 + $0xbc]]
    %s266 = sld [smem:[#allocation2 + $0xbd]]
    %s267 = sld [smem:[#allocation2 + $0xbe]]
    %s268 = sld [smem:[#allocation2 + $0xbf]]
    %s269 = sld [smem:[#allocation2 + $0xc0]]
    %s270 = sld [smem:[#allocation2 + $0xc1]]
    %s271 = sld [smem:[#allocation2 + $0xc2]]
    %s272 = sld [smem:[#allocation2 + $0xc3]]
    %s273 = sld [smem:[#allocation2 + $0xc4]]
    %s274 = sld [smem:[#allocation2 + $0xc5]]
    %s275 = sld [smem:[#allocation2 + $0xc6]]
    %s276 = sld [smem:[#allocation2 + $0xc7]]
    %s277 = sld [smem:[#allocation2 + $0xc8]]
    %s278 = sld [smem:[#allocation2 + $0xc9]]
    %s279 = sld [smem:[#allocation2 + $0xca]]
    %s280 = sld [smem:[#allocation2 + $0xcb]]
    %s281 = sld [smem:[#allocation2 + $0xcc]]
    %s282 = sld [smem:[#allocation2 + $0xcd]]
    %s283 = sld [smem:[#allocation2 + $0xce]]
    %s284 = sld [smem:[#allocation2 + $0xcf]]
    %s285 = sld [smem:[#allocation2 + $0xd0]]
    %s286 = sld [smem:[#allocation2 + $0xd1]]
    %s287 = sld [smem:[#allocation2 + $0xd2]]
    %s288 = sld [smem:[#allocation2 + $0xd3]]
    %s289 = sld [smem:[#allocation2 + $0xd4]]
    %s290 = sld [smem:[#allocation2 + $0xd5]]
    %s291 = sld [smem:[#allocation2 + $0xd6]]
    %s292 = sld [smem:[#allocation2 + $0xd7]]
    %s293 = sld [smem:[#allocation2 + $0xd8]]
    %s294 = sld [smem:[#allocation2 + $0xd9]]
    %s295 = sld [smem:[#allocation2 + $0xda]]
    %s296 = sld [smem:[#allocation2 + $0xdb]]
    %s297 = sld [smem:[#allocation2 + $0xdc]]
    %s298 = sld [smem:[#allocation2 + $0xdd]]
    %s299 = sld [smem:[#allocation2 + $0xde]]
    %s300 = sld [smem:[#allocation2 + $0xdf]]
    %s301 = sld [smem:[#allocation2 + $0xe0]]
    %s302 = sld [smem:[#allocation2 + $0xe1]]
    %s303 = sld [smem:[#allocation2 + $0xe2]]
    %s304 = sld [smem:[#allocation2 + $0xe3]]
    %s305 = sld [smem:[#allocation2 + $0xe4]]
    %s306 = sld [smem:[#allocation2 + $0xe5]]
    %s307 = sld [smem:[#allocation2 + $0xe6]]
    %s308 = sld [smem:[#allocation2 + $0xe7]]
    %s309 = sld [smem:[#allocation2 + $0xe8]]
    %s310 = sld [smem:[#allocation2 + $0xe9]]
    %s311 = sld [smem:[#allocation2 + $0xea]]
    %s312 = sld [smem:[#allocation2 + $0xeb]]
    %s313 = sld [smem:[#allocation2 + $0xec]]
    %s314 = sld [smem:[#allocation2 + $0xed]]
    %s315 = sld [smem:[#allocation2 + $0xee]]
    %s316 = sld [smem:[#allocation2 + $0xef]]
    %s317 = sld [smem:[#allocation2 + $0xf0]]
    %s318 = sld [smem:[#allocation2 + $0xf1]]
    %s319 = sld [smem:[#allocation2 + $0xf2]]
    %v320 = vstv %s77
    %v321 = vmul.f32 %v320, %v69
    %v322 = vstv %s158
    %v323 = vmul.f32 %v322, %v69
    %v324 = vstv %s239
    %v325 = vmul.f32 %v324, %v69
    %v326 = vstv %s86
    %v327 = vmul.f32 %v326, %v69
    %v328 = vmul.f32 %v326, %v70
    %vm331 = vcmask 1046528
    %v332 = vrot.slane %v327, 1
    %v333 = vrot.slane %v328, 1
    %v334 = vsel %vm331, %v332, %v333
    %v336 = vadd.f32 %v321, %v334
    %v337 = vstv %s167
    %v338 = vmul.f32 %v337, %v69
    %v339 = vmul.f32 %v337, %v70
    %v342 = vrot.slane %v338, 1
    %v343 = vrot.slane %v339, 1
    %v344 = vsel %vm331, %v342, %v343
    %v346 = vadd.f32 %v323, %v344
    %v347 = vstv %s248
    %v348 = vmul.f32 %v347, %v69
    %v349 = vmul.f32 %v347, %v70
    %v352 = vrot.slane %v348, 1
    %v353 = vrot.slane %v349, 1
    %v354 = vsel %vm331, %v352, %v353
    %v356 = vadd.f32 %v325, %v354
    %v357 = vstv %s95
    %v358 = vmul.f32 %v357, %v69
    %v359 = vmul.f32 %v357, %v70
    %vm362 = vcmask 1045504
    %v363 = vrot.slane %v358, 2
    %v364 = vrot.slane %v359, 2
    %v365 = vsel %vm362, %v363, %v364
    %v367 = vadd.f32 %v336, %v365
    %v368 = vstv %s176
    %v369 = vmul.f32 %v368, %v69
    %v370 = vmul.f32 %v368, %v70
    %v373 = vrot.slane %v369, 2
    %v374 = vrot.slane %v370, 2
    %v375 = vsel %vm362, %v373, %v374
    %v377 = vadd.f32 %v346, %v375
    %v378 = vstv %s257
    %v379 = vmul.f32 %v378, %v69
    %v380 = vmul.f32 %v378, %v70
    %v383 = vrot.slane %v379, 2
    %v384 = vrot.slane %v380, 2
    %v385 = vsel %vm362, %v383, %v384
    %v387 = vadd.f32 %v356, %v385
    %v388 = vstv %s104
    %v389 = vmul.f32 %v388, %v72
    %v390 = vstv %s185
    %v391 = vmul.f32 %v390, %v72
    %v392 = vstv %s266
    %v393 = vmul.f32 %v392, %v72
    %v394 = vstv %s113
    %v395 = vmul.f32 %v394, %v72
    %v396 = vmul.f32 %v394, %v73
    %v399 = vrot.slane %v395, 1
    %v400 = vrot.slane %v396, 1
    %v401 = vsel %vm331, %v399, %v400
    %v403 = vadd.f32 %v389, %v401
    %v404 = vstv %s194
    %v405 = vmul.f32 %v404, %v72
    %v406 = vmul.f32 %v404, %v73
    %v409 = vrot.slane %v405, 1
    %v410 = vrot.slane %v406, 1
    %v411 = vsel %vm331, %v409, %v410
    %v413 = vadd.f32 %v391, %v411
    %v414 = vstv %s275
    %v415 = vmul.f32 %v414, %v72
    %v416 = vmul.f32 %v414, %v73
    %v419 = vrot.slane %v415, 1
    %v420 = vrot.slane %v416, 1
    %v421 = vsel %vm331, %v419, %v420
    %v423 = vadd.f32 %v393, %v421
    %v424 = vstv %s122
    %v425 = vmul.f32 %v424, %v72
    %v426 = vmul.f32 %v424, %v73
    %v429 = vrot.slane %v425, 2
    %v430 = vrot.slane %v426, 2
    %v431 = vsel %vm362, %v429, %v430
    %v433 = vadd.f32 %v403, %v431
    %v434 = vstv %s203
    %v435 = vmul.f32 %v434, %v72
    %v436 = vmul.f32 %v434, %v73
    %v439 = vrot.slane %v435, 2
    %v440 = vrot.slane %v436, 2
    %v441 = vsel %vm362, %v439, %v440
    %v443 = vadd.f32 %v413, %v441
    %v444 = vstv %s284
    %v445 = vmul.f32 %v444, %v72
    %v446 = vmul.f32 %v444, %v73
    %v449 = vrot.slane %v445, 2
    %v450 = vrot.slane %v446, 2
    %v451 = vsel %vm362, %v449, %v450
    %v453 = vadd.f32 %v423, %v451
    %v454 = vstv %s131
    %v455 = vmul.f32 %v454, %v75
    %v456 = vstv %s212
    %v457 = vmul.f32 %v456, %v75
    %v458 = vstv %s293
    %v459 = vmul.f32 %v458, %v75
    %v460 = vstv %s140
    %v461 = vmul.f32 %v460, %v75
    %v462 = vmul.f32 %v460, %v76
    %v465 = vrot.slane %v461, 1
    %v466 = vrot.slane %v462, 1
    %v467 = vsel %vm331, %v465, %v466
    %v469 = vadd.f32 %v455, %v467
    %v470 = vstv %s221
    %v471 = vmul.f32 %v470, %v75
    %v472 = vmul.f32 %v470, %v76
    %v475 = vrot.slane %v471, 1
    %v476 = vrot.slane %v472, 1
    %v477 = vsel %vm331, %v475, %v476
    %v479 = vadd.f32 %v457, %v477
    %v480 = vstv %s302
    %v481 = vmul.f32 %v480, %v75
    %v482 = vmul.f32 %v480, %v76
    %v485 = vrot.slane %v481, 1
    %v486 = vrot.slane %v482, 1
    %v487 = vsel %vm331, %v485, %v486
    %v489 = vadd.f32 %v459, %v487
    %v490 = vstv %s149
    %v491 = vmul.f32 %v490, %v75
    %v492 = vmul.f32 %v490, %v76
    %v495 = vrot.slane %v491, 2
    %v496 = vrot.slane %v492, 2
    %v497 = vsel %vm362, %v495, %v496
    %v499 = vadd.f32 %v469, %v497
    %v500 = vstv %s230
    %v501 = vmul.f32 %v500, %v75
    %v502 = vmul.f32 %v500, %v76
    %v505 = vrot.slane %v501, 2
    %v506 = vrot.slane %v502, 2
    %v507 = vsel %vm362, %v505, %v506
    %v509 = vadd.f32 %v479, %v507
    %v510 = vstv %s311
    %v511 = vmul.f32 %v510, %v75
    %v512 = vmul.f32 %v510, %v76
    %v515 = vrot.slane %v511, 2
    %v516 = vrot.slane %v512, 2
    %v517 = vsel %vm362, %v515, %v516
    %v519 = vadd.f32 %v489, %v517
    %520 = vrot.lane.b32.xlu0 %v69, 127
    %v521 = vpop.permute.xlu0 %520
    %v522 = vstv %s78
    %v523 = vmul.f32 %v522, %v521
    %v524 = vadd.f32 %v367, %v523
    %v525 = vstv %s159
    %v526 = vmul.f32 %v525, %v521
    %v527 = vadd.f32 %v377, %v526
    %v528 = vstv %s240
    %v529 = vmul.f32 %v528, %v521
    %v530 = vadd.f32 %v387, %v529
    %v533 = vrot.slane %v69, 1
    %v534 = vrot.slane %v70, 1
    %v535 = vsel %vm331, %v533, %v534
    %537 = vrot.lane.b32.xlu0 %v535, 127
    %v538 = vpop.permute.xlu0 %537
    %v539 = vstv %s87
    %v540 = vmul.f32 %v539, %v538
    %v541 = vadd.f32 %v524, %v540
    %v542 = vstv %s168
    %v543 = vmul.f32 %v542, %v538
    %v544 = vadd.f32 %v527, %v543
    %v545 = vstv %s249
    %v546 = vmul.f32 %v545, %v538
    %v547 = vadd.f32 %v530, %v546
    %v548 = vrot.slane %v69, 2
    %v549 = vrot.slane %v70, 2
    %v550 = vsel %vm362, %v548, %v549
    %552 = vrot.lane.b32.xlu0 %v550, 127
    %v553 = vpop.permute.xlu0 %552
    %v554 = vstv %s96
    %v555 = vmul.f32 %v554, %v553
    %v556 = vadd.f32 %v541, %v555
    %v557 = vstv %s177
    %v558 = vmul.f32 %v557, %v553
    %v559 = vadd.f32 %v544, %v558
    %v560 = vstv %s258
    %v561 = vmul.f32 %v560, %v553
    %v562 = vadd.f32 %v547, %v561
    %563 = vrot.lane.b32.xlu0 %v72, 127
    %v564 = vpop.permute.xlu0 %563
    %v565 = vstv %s105
    %v566 = vmul.f32 %v565, %v564
    %v567 = vadd.f32 %v433, %v566
    %v568 = vstv %s186
    %v569 = vmul.f32 %v568, %v564
    %v570 = vadd.f32 %v443, %v569
    %v571 = vstv %s267
    %v572 = vmul.f32 %v571, %v564
    %v573 = vadd.f32 %v453, %v572
    %v576 = vrot.slane %v72, 1
    %v577 = vrot.slane %v73, 1
    %v578 = vsel %vm331, %v576, %v577
    %580 = vrot.lane.b32.xlu0 %v578, 127
    %v581 = vpop.permute.xlu0 %580
    %v582 = vstv %s114
    %v583 = vmul.f32 %v582, %v581
    %v584 = vadd.f32 %v567, %v583
    %v585 = vstv %s195
    %v586 = vmul.f32 %v585, %v581
    %v587 = vadd.f32 %v570, %v586
    %v588 = vstv %s276
    %v589 = vmul.f32 %v588, %v581
    %v590 = vadd.f32 %v573, %v589
    %v591 = vrot.slane %v72, 2
    %v592 = vrot.slane %v73, 2
    %v593 = vsel %vm362, %v591, %v592
    %595 = vrot.lane.b32.xlu0 %v593, 127
    %v596 = vpop.permute.xlu0 %595
    %v597 = vstv %s123
    %v598 = vmul.f32 %v597, %v596
    %v599 = vadd.f32 %v584, %v598
    %v600 = vstv %s204
    %v601 = vmul.f32 %v600, %v596
    %v602 = vadd.f32 %v587, %v601
    %v603 = vstv %s285
    %v604 = vmul.f32 %v603, %v596
    %v605 = vadd.f32 %v590, %v604
    %606 = vrot.lane.b32.xlu0 %v75, 127
    %v607 = vpop.permute.xlu0 %606
    %v608 = vstv %s132
    %v609 = vmul.f32 %v608, %v607
    %v610 = vadd.f32 %v499, %v609
    %v611 = vstv %s213
    %v612 = vmul.f32 %v611, %v607
    %v613 = vadd.f32 %v509, %v612
    %v614 = vstv %s294
    %v615 = vmul.f32 %v614, %v607
    %v616 = vadd.f32 %v519, %v615
    %v619 = vrot.slane %v75, 1
    %v620 = vrot.slane %v76, 1
    %v621 = vsel %vm331, %v619, %v620
    %623 = vrot.lane.b32.xlu0 %v621, 127
    %v624 = vpop.permute.xlu0 %623
    %v625 = vstv %s141
    %v626 = vmul.f32 %v625, %v624
    %v627 = vadd.f32 %v610, %v626
    %v628 = vstv %s222
    %v629 = vmul.f32 %v628, %v624
    %v630 = vadd.f32 %v613, %v629
    %v631 = vstv %s303
    %v632 = vmul.f32 %v631, %v624
    %v633 = vadd.f32 %v616, %v632
    %v634 = vrot.slane %v75, 2
    %v635 = vrot.slane %v76, 2
    %v636 = vsel %vm362, %v634, %v635
    %638 = vrot.lane.b32.xlu0 %v636, 127
    %v639 = vpop.permute.xlu0 %638
    %v640 = vstv %s150
    %v641 = vmul.f32 %v640, %v639
    %v642 = vadd.f32 %v627, %v641
    %v643 = vstv %s231
    %v644 = vmul.f32 %v643, %v639
    %v645 = vadd.f32 %v630, %v644
    %v646 = vstv %s312
    %v647 = vmul.f32 %v646, %v639
    %v648 = vadd.f32 %v633, %v647
    %649 = vrot.lane.b32.xlu0 %v69, 126
    %v650 = vpop.permute.xlu0 %649
    %v651 = vstv %s79
    %v652 = vmul.f32 %v651, %v650
    %v653 = vadd.f32 %v556, %v652
    %v654 = vstv %s160
    %v655 = vmul.f32 %v654, %v650
    %v656 = vadd.f32 %v559, %v655
    %v657 = vstv %s241
    %v658 = vmul.f32 %v657, %v650
    %v659 = vadd.f32 %v562, %v658
    %660 = vrot.lane.b32.xlu0 %v535, 126
    %v661 = vpop.permute.xlu0 %660
    %v662 = vstv %s88
    %v663 = vmul.f32 %v662, %v661
    %v664 = vadd.f32 %v653, %v663
    %v665 = vstv %s169
    %v666 = vmul.f32 %v665, %v661
    %v667 = vadd.f32 %v656, %v666
    %v668 = vstv %s250
    %v669 = vmul.f32 %v668, %v661
    %v670 = vadd.f32 %v659, %v669
    %671 = vrot.lane.b32.xlu0 %v550, 126
    %v672 = vpop.permute.xlu0 %671
    %v673 = vstv %s97
    %v674 = vmul.f32 %v673, %v672
    %v675 = vadd.f32 %v664, %v674
    %v676 = vstv %s178
    %v677 = vmul.f32 %v676, %v672
    %v678 = vadd.f32 %v667, %v677
    %v679 = vstv %s259
    %v680 = vmul.f32 %v679, %v672
    %v681 = vadd.f32 %v670, %v680
    %682 = vrot.lane.b32.xlu0 %v72, 126
    %v683 = vpop.permute.xlu0 %682
    %v684 = vstv %s106
    %v685 = vmul.f32 %v684, %v683
    %v686 = vadd.f32 %v599, %v685
    %v687 = vstv %s187
    %v688 = vmul.f32 %v687, %v683
    %v689 = vadd.f32 %v602, %v688
    %v690 = vstv %s268
    %v691 = vmul.f32 %v690, %v683
    %v692 = vadd.f32 %v605, %v691
    %693 = vrot.lane.b32.xlu0 %v578, 126
    %v694 = vpop.permute.xlu0 %693
    %v695 = vstv %s115
    %v696 = vmul.f32 %v695, %v694
    %v697 = vadd.f32 %v686, %v696
    %v698 = vstv %s196
    %v699 = vmul.f32 %v698, %v694
    %v700 = vadd.f32 %v689, %v699
    %v701 = vstv %s277
    %v702 = vmul.f32 %v701, %v694
    %v703 = vadd.f32 %v692, %v702
    %704 = vrot.lane.b32.xlu0 %v593, 126
    %v705 = vpop.permute.xlu0 %704
    %v706 = vstv %s124
    %v707 = vmul.f32 %v706, %v705
    %v708 = vadd.f32 %v697, %v707
    %v709 = vstv %s205
    %v710 = vmul.f32 %v709, %v705
    %v711 = vadd.f32 %v700, %v710
    %v712 = vstv %s286
    %v713 = vmul.f32 %v712, %v705
    %v714 = vadd.f32 %v703, %v713
    %715 = vrot.lane.b32.xlu0 %v75, 126
    %v716 = vpop.permute.xlu0 %715
    %v717 = vstv %s133
    %v718 = vmul.f32 %v717, %v716
    %v719 = vadd.f32 %v642, %v718
    %v720 = vstv %s214
    %v721 = vmul.f32 %v720, %v716
    %v722 = vadd.f32 %v645, %v721
    %v723 = vstv %s295
    %v724 = vmul.f32 %v723, %v716
    %v725 = vadd.f32 %v648, %v724
    %726 = vrot.lane.b32.xlu0 %v621, 126
    %v727 = vpop.permute.xlu0 %726
    %v728 = vstv %s142
    %v729 = vmul.f32 %v728, %v727
    %v730 = vadd.f32 %v719, %v729
    %v731 = vstv %s223
    %v732 = vmul.f32 %v731, %v727
    %v733 = vadd.f32 %v722, %v732
    %v734 = vstv %s304
    %v735 = vmul.f32 %v734, %v727
    %v736 = vadd.f32 %v725, %v735
    %737 = vrot.lane.b32.xlu0 %v636, 126
    %v738 = vpop.permute.xlu0 %737
    %v739 = vstv %s151
    %v740 = vmul.f32 %v739, %v738
    %v741 = vadd.f32 %v730, %v740
    %v742 = vstv %s232
    %v743 = vmul.f32 %v742, %v738
    %v744 = vadd.f32 %v733, %v743
    %v745 = vstv %s313
    %v746 = vmul.f32 %v745, %v738
    %v747 = vadd.f32 %v736, %v746
    %748 = vrot.lane.b32.xlu0 %v69, 118
    %v749 = vpop.permute.xlu0 %748
    %v750 = vstv %s80
    %v751 = vmul.f32 %v750, %v749
    %v752 = vadd.f32 %v675, %v751
    %v753 = vstv %s161
    %v754 = vmul.f32 %v753, %v749
    %v755 = vadd.f32 %v678, %v754
    %v756 = vstv %s242
    %v757 = vmul.f32 %v756, %v749
    %v758 = vadd.f32 %v681, %v757
    %759 = vrot.lane.b32.xlu0 %v535, 118
    %v760 = vpop.permute.xlu0 %759
    %v761 = vstv %s89
    %v762 = vmul.f32 %v761, %v760
    %v763 = vadd.f32 %v752, %v762
    %v764 = vstv %s170
    %v765 = vmul.f32 %v764, %v760
    %v766 = vadd.f32 %v755, %v765
    %v767 = vstv %s251
    %v768 = vmul.f32 %v767, %v760
    %v769 = vadd.f32 %v758, %v768
    %770 = vrot.lane.b32.xlu0 %v550, 118
    %v771 = vpop.permute.xlu0 %770
    %v772 = vstv %s98
    %v773 = vmul.f32 %v772, %v771
    %v774 = vadd.f32 %v763, %v773
    %v775 = vstv %s179
    %v776 = vmul.f32 %v775, %v771
    %v777 = vadd.f32 %v766, %v776
    %v778 = vstv %s260
    %v779 = vmul.f32 %v778, %v771
    %v780 = vadd.f32 %v769, %v779
    %781 = vrot.lane.b32.xlu0 %v72, 118
    %v782 = vpop.permute.xlu0 %781
    %v783 = vstv %s107
    %v784 = vmul.f32 %v783, %v782
    %v785 = vadd.f32 %v708, %v784
    %v786 = vstv %s188
    %v787 = vmul.f32 %v786, %v782
    %v788 = vadd.f32 %v711, %v787
    %v789 = vstv %s269
    %v790 = vmul.f32 %v789, %v782
    %v791 = vadd.f32 %v714, %v790
    %792 = vrot.lane.b32.xlu0 %v578, 118
    %v793 = vpop.permute.xlu0 %792
    %v794 = vstv %s116
    %v795 = vmul.f32 %v794, %v793
    %v796 = vadd.f32 %v785, %v795
    %v797 = vstv %s197
    %v798 = vmul.f32 %v797, %v793
    %v799 = vadd.f32 %v788, %v798
    %v800 = vstv %s278
    %v801 = vmul.f32 %v800, %v793
    %v802 = vadd.f32 %v791, %v801
    %803 = vrot.lane.b32.xlu0 %v593, 118
    %v804 = vpop.permute.xlu0 %803
    %v805 = vstv %s125
    %v806 = vmul.f32 %v805, %v804
    %v807 = vadd.f32 %v796, %v806
    %v808 = vstv %s206
    %v809 = vmul.f32 %v808, %v804
    %v810 = vadd.f32 %v799, %v809
    %v811 = vstv %s287
    %v812 = vmul.f32 %v811, %v804
    %v813 = vadd.f32 %v802, %v812
    %814 = vrot.lane.b32.xlu0 %v75, 118
    %v815 = vpop.permute.xlu0 %814
    %v816 = vstv %s134
    %v817 = vmul.f32 %v816, %v815
    %v818 = vadd.f32 %v741, %v817
    %v819 = vstv %s215
    %v820 = vmul.f32 %v819, %v815
    %v821 = vadd.f32 %v744, %v820
    %v822 = vstv %s296
    %v823 = vmul.f32 %v822, %v815
    %v824 = vadd.f32 %v747, %v823
    %825 = vrot.lane.b32.xlu0 %v621, 118
    %v826 = vpop.permute.xlu0 %825
    %v827 = vstv %s143
    %v828 = vmul.f32 %v827, %v826
    %v829 = vadd.f32 %v818, %v828
    %v830 = vstv %s224
    %v831 = vmul.f32 %v830, %v826
    %v832 = vadd.f32 %v821, %v831
    %v833 = vstv %s305
    %v834 = vmul.f32 %v833, %v826
    %v835 = vadd.f32 %v824, %v834
    %836 = vrot.lane.b32.xlu0 %v636, 118
    %v837 = vpop.permute.xlu0 %836
    %v838 = vstv %s152
    %v839 = vmul.f32 %v838, %v837
    %v840 = vadd.f32 %v829, %v839
    %v841 = vstv %s233
    %v842 = vmul.f32 %v841, %v837
    %v843 = vadd.f32 %v832, %v842
    %v844 = vstv %s314
    %v845 = vmul.f32 %v844, %v837
    %v846 = vadd.f32 %v835, %v845
    %847 = vrot.lane.b32.xlu0 %v69, 117
    %v848 = vpop.permute.xlu0 %847
    %v849 = vstv %s81
    %v850 = vmul.f32 %v849, %v848
    %v851 = vadd.f32 %v774, %v850
    %v852 = vstv %s162
    %v853 = vmul.f32 %v852, %v848
    %v854 = vadd.f32 %v777, %v853
    %v855 = vstv %s243
    %v856 = vmul.f32 %v855, %v848
    %v857 = vadd.f32 %v780, %v856
    %858 = vrot.lane.b32.xlu0 %v535, 117
    %v859 = vpop.permute.xlu0 %858
    %v860 = vstv %s90
    %v861 = vmul.f32 %v860, %v859
    %v862 = vadd.f32 %v851, %v861
    %v863 = vstv %s171
    %v864 = vmul.f32 %v863, %v859
    %v865 = vadd.f32 %v854, %v864
    %v866 = vstv %s252
    %v867 = vmul.f32 %v866, %v859
    %v868 = vadd.f32 %v857, %v867
    %869 = vrot.lane.b32.xlu0 %v550, 117
    %v870 = vpop.permute.xlu0 %869
    %v871 = vstv %s99
    %v872 = vmul.f32 %v871, %v870
    %v873 = vadd.f32 %v862, %v872
    %v874 = vstv %s180
    %v875 = vmul.f32 %v874, %v870
    %v876 = vadd.f32 %v865, %v875
    %v877 = vstv %s261
    %v878 = vmul.f32 %v877, %v870
    %v879 = vadd.f32 %v868, %v878
    %880 = vrot.lane.b32.xlu0 %v72, 117
    %v881 = vpop.permute.xlu0 %880
    %v882 = vstv %s108
    %v883 = vmul.f32 %v882, %v881
    %v884 = vadd.f32 %v807, %v883
    %v885 = vstv %s189
    %v886 = vmul.f32 %v885, %v881
    %v887 = vadd.f32 %v810, %v886
    %v888 = vstv %s270
    %v889 = vmul.f32 %v888, %v881
    %v890 = vadd.f32 %v813, %v889
    %891 = vrot.lane.b32.xlu0 %v578, 117
    %v892 = vpop.permute.xlu0 %891
    %v893 = vstv %s117
    %v894 = vmul.f32 %v893, %v892
    %v895 = vadd.f32 %v884, %v894
    %v896 = vstv %s198
    %v897 = vmul.f32 %v896, %v892
    %v898 = vadd.f32 %v887, %v897
    %v899 = vstv %s279
    %v900 = vmul.f32 %v899, %v892
    %v901 = vadd.f32 %v890, %v900
    %902 = vrot.lane.b32.xlu0 %v593, 117
    %v903 = vpop.permute.xlu0 %902
    %v904 = vstv %s126
    %v905 = vmul.f32 %v904, %v903
    %v906 = vadd.f32 %v895, %v905
    %v907 = vstv %s207
    %v908 = vmul.f32 %v907, %v903
    %v909 = vadd.f32 %v898, %v908
    %v910 = vstv %s288
    %v911 = vmul.f32 %v910, %v903
    %v912 = vadd.f32 %v901, %v911
    %913 = vrot.lane.b32.xlu0 %v75, 117
    %v914 = vpop.permute.xlu0 %913
    %v915 = vstv %s135
    %v916 = vmul.f32 %v915, %v914
    %v917 = vadd.f32 %v840, %v916
    %v918 = vstv %s216
    %v919 = vmul.f32 %v918, %v914
    %v920 = vadd.f32 %v843, %v919
    %v921 = vstv %s297
    %v922 = vmul.f32 %v921, %v914
    %v923 = vadd.f32 %v846, %v922
    %924 = vrot.lane.b32.xlu0 %v621, 117
    %v925 = vpop.permute.xlu0 %924
    %v926 = vstv %s144
    %v927 = vmul.f32 %v926, %v925
    %v928 = vadd.f32 %v917, %v927
    %v929 = vstv %s225
    %v930 = vmul.f32 %v929, %v925
    %v931 = vadd.f32 %v920, %v930
    %v932 = vstv %s306
    %v933 = vmul.f32 %v932, %v925
    %v934 = vadd.f32 %v923, %v933
    %935 = vrot.lane.b32.xlu0 %v636, 117
    %v936 = vpop.permute.xlu0 %935
    %v937 = vstv %s153
    %v938 = vmul.f32 %v937, %v936
    %v939 = vadd.f32 %v928, %v938
    %v940 = vstv %s234
    %v941 = vmul.f32 %v940, %v936
    %v942 = vadd.f32 %v931, %v941
    %v943 = vstv %s315
    %v944 = vmul.f32 %v943, %v936
    %v945 = vadd.f32 %v934, %v944
    %946 = vrot.lane.b32.xlu0 %v69, 116
    %v947 = vpop.permute.xlu0 %946
    %v948 = vstv %s82
    %v949 = vmul.f32 %v948, %v947
    %v950 = vadd.f32 %v873, %v949
    %v951 = vstv %s163
    %v952 = vmul.f32 %v951, %v947
    %v953 = vadd.f32 %v876, %v952
    %v954 = vstv %s244
    %v955 = vmul.f32 %v954, %v947
    %v956 = vadd.f32 %v879, %v955
    %957 = vrot.lane.b32.xlu0 %v535, 116
    %v958 = vpop.permute.xlu0 %957
    %v959 = vstv %s91
    %v960 = vmul.f32 %v959, %v958
    %v961 = vadd.f32 %v950, %v960
    %v962 = vstv %s172
    %v963 = vmul.f32 %v962, %v958
    %v964 = vadd.f32 %v953, %v963
    %v965 = vstv %s253
    %v966 = vmul.f32 %v965, %v958
    %v967 = vadd.f32 %v956, %v966
    %968 = vrot.lane.b32.xlu0 %v550, 116
    %v969 = vpop.permute.xlu0 %968
    %v970 = vstv %s100
    %v971 = vmul.f32 %v970, %v969
    %v972 = vadd.f32 %v961, %v971
    %v973 = vstv %s181
    %v974 = vmul.f32 %v973, %v969
    %v975 = vadd.f32 %v964, %v974
    %v976 = vstv %s262
    %v977 = vmul.f32 %v976, %v969
    %v978 = vadd.f32 %v967, %v977
    %979 = vrot.lane.b32.xlu0 %v72, 116
    %v980 = vpop.permute.xlu0 %979
    %v981 = vstv %s109
    %v982 = vmul.f32 %v981, %v980
    %v983 = vadd.f32 %v906, %v982
    %v984 = vstv %s190
    %v985 = vmul.f32 %v984, %v980
    %v986 = vadd.f32 %v909, %v985
    %v987 = vstv %s271
    %v988 = vmul.f32 %v987, %v980
    %v989 = vadd.f32 %v912, %v988
    %990 = vrot.lane.b32.xlu0 %v578, 116
    %v991 = vpop.permute.xlu0 %990
    %v992 = vstv %s118
    %v993 = vmul.f32 %v992, %v991
    %v994 = vadd.f32 %v983, %v993
    %v995 = vstv %s199
    %v996 = vmul.f32 %v995, %v991
    %v997 = vadd.f32 %v986, %v996
    %v998 = vstv %s280
    %v999 = vmul.f32 %v998, %v991
    %v1000 = vadd.f32 %v989, %v999
    %1001 = vrot.lane.b32.xlu0 %v593, 116
    %v1002 = vpop.permute.xlu0 %1001
    %v1003 = vstv %s127
    %v1004 = vmul.f32 %v1003, %v1002
    %v1005 = vadd.f32 %v994, %v1004
    %v1006 = vstv %s208
    %v1007 = vmul.f32 %v1006, %v1002
    %v1008 = vadd.f32 %v997, %v1007
    %v1009 = vstv %s289
    %v1010 = vmul.f32 %v1009, %v1002
    %v1011 = vadd.f32 %v1000, %v1010
    %1012 = vrot.lane.b32.xlu0 %v75, 116
    %v1013 = vpop.permute.xlu0 %1012
    %v1014 = vstv %s136
    %v1015 = vmul.f32 %v1014, %v1013
    %v1016 = vadd.f32 %v939, %v1015
    %v1017 = vstv %s217
    %v1018 = vmul.f32 %v1017, %v1013
    %v1019 = vadd.f32 %v942, %v1018
    %v1020 = vstv %s298
    %v1021 = vmul.f32 %v1020, %v1013
    %v1022 = vadd.f32 %v945, %v1021
    %1023 = vrot.lane.b32.xlu0 %v621, 116
    %v1024 = vpop.permute.xlu0 %1023
    %v1025 = vstv %s145
    %v1026 = vmul.f32 %v1025, %v1024
    %v1027 = vadd.f32 %v1016, %v1026
    %v1028 = vstv %s226
    %v1029 = vmul.f32 %v1028, %v1024
    %v1030 = vadd.f32 %v1019, %v1029
    %v1031 = vstv %s307
    %v1032 = vmul.f32 %v1031, %v1024
    %v1033 = vadd.f32 %v1022, %v1032
    %1034 = vrot.lane.b32.xlu0 %v636, 116
    %v1035 = vpop.permute.xlu0 %1034
    %v1036 = vstv %s154
    %v1037 = vmul.f32 %v1036, %v1035
    %v1038 = vadd.f32 %v1027, %v1037
    %v1039 = vstv %s235
    %v1040 = vmul.f32 %v1039, %v1035
    %v1041 = vadd.f32 %v1030, %v1040
    %v1042 = vstv %s316
    %v1043 = vmul.f32 %v1042, %v1035
    %v1044 = vadd.f32 %v1033, %v1043
    %1045 = vrot.lane.b32.xlu0 %v69, 108
    %v1046 = vpop.permute.xlu0 %1045
    %v1047 = vstv %s83
    %v1048 = vmul.f32 %v1047, %v1046
    %v1049 = vadd.f32 %v972, %v1048
    %v1050 = vstv %s164
    %v1051 = vmul.f32 %v1050, %v1046
    %v1052 = vadd.f32 %v975, %v1051
    %v1053 = vstv %s245
    %v1054 = vmul.f32 %v1053, %v1046
    %v1055 = vadd.f32 %v978, %v1054
    %1056 = vrot.lane.b32.xlu0 %v535, 108
    %v1057 = vpop.permute.xlu0 %1056
    %v1058 = vstv %s92
    %v1059 = vmul.f32 %v1058, %v1057
    %v1060 = vadd.f32 %v1049, %v1059
    %v1061 = vstv %s173
    %v1062 = vmul.f32 %v1061, %v1057
    %v1063 = vadd.f32 %v1052, %v1062
    %v1064 = vstv %s254
    %v1065 = vmul.f32 %v1064, %v1057
    %v1066 = vadd.f32 %v1055, %v1065
    %1067 = vrot.lane.b32.xlu0 %v550, 108
    %v1068 = vpop.permute.xlu0 %1067
    %v1069 = vstv %s101
    %v1070 = vmul.f32 %v1069, %v1068
    %v1071 = vadd.f32 %v1060, %v1070
    %v1072 = vstv %s182
    %v1073 = vmul.f32 %v1072, %v1068
    %v1074 = vadd.f32 %v1063, %v1073
    %v1075 = vstv %s263
    %v1076 = vmul.f32 %v1075, %v1068
    %v1077 = vadd.f32 %v1066, %v1076
    %1078 = vrot.lane.b32.xlu0 %v72, 108
    %v1079 = vpop.permute.xlu0 %1078
    %v1080 = vstv %s110
    %v1081 = vmul.f32 %v1080, %v1079
    %v1082 = vadd.f32 %v1005, %v1081
    %v1083 = vstv %s191
    %v1084 = vmul.f32 %v1083, %v1079
    %v1085 = vadd.f32 %v1008, %v1084
    %v1086 = vstv %s272
    %v1087 = vmul.f32 %v1086, %v1079
    %v1088 = vadd.f32 %v1011, %v1087
    %1089 = vrot.lane.b32.xlu0 %v578, 108
    %v1090 = vpop.permute.xlu0 %1089
    %v1091 = vstv %s119
    %v1092 = vmul.f32 %v1091, %v1090
    %v1093 = vadd.f32 %v1082, %v1092
    %v1094 = vstv %s200
    %v1095 = vmul.f32 %v1094, %v1090
    %v1096 = vadd.f32 %v1085, %v1095
    %v1097 = vstv %s281
    %v1098 = vmul.f32 %v1097, %v1090
    %v1099 = vadd.f32 %v1088, %v1098
    %1100 = vrot.lane.b32.xlu0 %v593, 108
    %v1101 = vpop.permute.xlu0 %1100
    %v1102 = vstv %s128
    %v1103 = vmul.f32 %v1102, %v1101
    %v1104 = vadd.f32 %v1093, %v1103
    %v1105 = vstv %s209
    %v1106 = vmul.f32 %v1105, %v1101
    %v1107 = vadd.f32 %v1096, %v1106
    %v1108 = vstv %s290
    %v1109 = vmul.f32 %v1108, %v1101
    %v1110 = vadd.f32 %v1099, %v1109
    %1111 = vrot.lane.b32.xlu0 %v75, 108
    %v1112 = vpop.permute.xlu0 %1111
    %v1113 = vstv %s137
    %v1114 = vmul.f32 %v1113, %v1112
    %v1115 = vadd.f32 %v1038, %v1114
    %v1116 = vstv %s218
    %v1117 = vmul.f32 %v1116, %v1112
    %v1118 = vadd.f32 %v1041, %v1117
    %v1119 = vstv %s299
    %v1120 = vmul.f32 %v1119, %v1112
    %v1121 = vadd.f32 %v1044, %v1120
    %1122 = vrot.lane.b32.xlu0 %v621, 108
    %v1123 = vpop.permute.xlu0 %1122
    %v1124 = vstv %s146
    %v1125 = vmul.f32 %v1124, %v1123
    %v1126 = vadd.f32 %v1115, %v1125
    %v1127 = vstv %s227
    %v1128 = vmul.f32 %v1127, %v1123
    %v1129 = vadd.f32 %v1118, %v1128
    %v1130 = vstv %s308
    %v1131 = vmul.f32 %v1130, %v1123
    %v1132 = vadd.f32 %v1121, %v1131
    %1133 = vrot.lane.b32.xlu0 %v636, 108
    %v1134 = vpop.permute.xlu0 %1133
    %v1135 = vstv %s155
    %v1136 = vmul.f32 %v1135, %v1134
    %v1137 = vadd.f32 %v1126, %v1136
    %v1138 = vstv %s236
    %v1139 = vmul.f32 %v1138, %v1134
    %v1140 = vadd.f32 %v1129, %v1139
    %v1141 = vstv %s317
    %v1142 = vmul.f32 %v1141, %v1134
    %v1143 = vadd.f32 %v1132, %v1142
    %1144 = vrot.lane.b32.xlu0 %v69, 107
    %v1145 = vpop.permute.xlu0 %1144
    %v1146 = vstv %s84
    %v1147 = vmul.f32 %v1146, %v1145
    %v1148 = vadd.f32 %v1071, %v1147
    %v1149 = vstv %s165
    %v1150 = vmul.f32 %v1149, %v1145
    %v1151 = vadd.f32 %v1074, %v1150
    %v1152 = vstv %s246
    %v1153 = vmul.f32 %v1152, %v1145
    %v1154 = vadd.f32 %v1077, %v1153
    %1155 = vrot.lane.b32.xlu0 %v535, 107
    %v1156 = vpop.permute.xlu0 %1155
    %v1157 = vstv %s93
    %v1158 = vmul.f32 %v1157, %v1156
    %v1159 = vadd.f32 %v1148, %v1158
    %v1160 = vstv %s174
    %v1161 = vmul.f32 %v1160, %v1156
    %v1162 = vadd.f32 %v1151, %v1161
    %v1163 = vstv %s255
    %v1164 = vmul.f32 %v1163, %v1156
    %v1165 = vadd.f32 %v1154, %v1164
    %1166 = vrot.lane.b32.xlu0 %v550, 107
    %v1167 = vpop.permute.xlu0 %1166
    %v1168 = vstv %s102
    %v1169 = vmul.f32 %v1168, %v1167
    %v1170 = vadd.f32 %v1159, %v1169
    %v1171 = vstv %s183
    %v1172 = vmul.f32 %v1171, %v1167
    %v1173 = vadd.f32 %v1162, %v1172
    %v1174 = vstv %s264
    %v1175 = vmul.f32 %v1174, %v1167
    %v1176 = vadd.f32 %v1165, %v1175
    %1177 = vrot.lane.b32.xlu0 %v72, 107
    %v1178 = vpop.permute.xlu0 %1177
    %v1179 = vstv %s111
    %v1180 = vmul.f32 %v1179, %v1178
    %v1181 = vadd.f32 %v1104, %v1180
    %v1182 = vstv %s192
    %v1183 = vmul.f32 %v1182, %v1178
    %v1184 = vadd.f32 %v1107, %v1183
    %v1185 = vstv %s273
    %v1186 = vmul.f32 %v1185, %v1178
    %v1187 = vadd.f32 %v1110, %v1186
    %1188 = vrot.lane.b32.xlu0 %v578, 107
    %v1189 = vpop.permute.xlu0 %1188
    %v1190 = vstv %s120
    %v1191 = vmul.f32 %v1190, %v1189
    %v1192 = vadd.f32 %v1181, %v1191
    %v1193 = vstv %s201
    %v1194 = vmul.f32 %v1193, %v1189
    %v1195 = vadd.f32 %v1184, %v1194
    %v1196 = vstv %s282
    %v1197 = vmul.f32 %v1196, %v1189
    %v1198 = vadd.f32 %v1187, %v1197
    %1199 = vrot.lane.b32.xlu0 %v593, 107
    %v1200 = vpop.permute.xlu0 %1199
    %v1201 = vstv %s129
    %v1202 = vmul.f32 %v1201, %v1200
    %v1203 = vadd.f32 %v1192, %v1202
    %v1204 = vstv %s210
    %v1205 = vmul.f32 %v1204, %v1200
    %v1206 = vadd.f32 %v1195, %v1205
    %v1207 = vstv %s291
    %v1208 = vmul.f32 %v1207, %v1200
    %v1209 = vadd.f32 %v1198, %v1208
    %1210 = vrot.lane.b32.xlu0 %v75, 107
    %v1211 = vpop.permute.xlu0 %1210
    %v1212 = vstv %s138
    %v1213 = vmul.f32 %v1212, %v1211
    %v1214 = vadd.f32 %v1137, %v1213
    %v1215 = vstv %s219
    %v1216 = vmul.f32 %v1215, %v1211
    %v1217 = vadd.f32 %v1140, %v1216
    %v1218 = vstv %s300
    %v1219 = vmul.f32 %v1218, %v1211
    %v1220 = vadd.f32 %v1143, %v1219
    %1221 = vrot.lane.b32.xlu0 %v621, 107
    %v1222 = vpop.permute.xlu0 %1221
    %v1223 = vstv %s147
    %v1224 = vmul.f32 %v1223, %v1222
    %v1225 = vadd.f32 %v1214, %v1224
    %v1226 = vstv %s228
    %v1227 = vmul.f32 %v1226, %v1222
    %v1228 = vadd.f32 %v1217, %v1227
    %v1229 = vstv %s309
    %v1230 = vmul.f32 %v1229, %v1222
    %v1231 = vadd.f32 %v1220, %v1230
    %1232 = vrot.lane.b32.xlu0 %v636, 107
    %v1233 = vpop.permute.xlu0 %1232
    %v1234 = vstv %s156
    %v1235 = vmul.f32 %v1234, %v1233
    %v1236 = vadd.f32 %v1225, %v1235
    %v1237 = vstv %s237
    %v1238 = vmul.f32 %v1237, %v1233
    %v1239 = vadd.f32 %v1228, %v1238
    %v1240 = vstv %s318
    %v1241 = vmul.f32 %v1240, %v1233
    %v1242 = vadd.f32 %v1231, %v1241
    %1243 = vrot.lane.b32.xlu0 %v69, 106
    %v1244 = vpop.permute.xlu0 %1243
    %v1245 = vstv %s85
    %v1246 = vmul.f32 %v1245, %v1244
    %v1247 = vadd.f32 %v1170, %v1246
    %v1248 = vstv %s166
    %v1249 = vmul.f32 %v1248, %v1244
    %v1250 = vadd.f32 %v1173, %v1249
    %v1251 = vstv %s247
    %v1252 = vmul.f32 %v1251, %v1244
    %v1253 = vadd.f32 %v1176, %v1252
    %1254 = vrot.lane.b32.xlu0 %v535, 106
    %v1255 = vpop.permute.xlu0 %1254
    %v1256 = vstv %s94
    %v1257 = vmul.f32 %v1256, %v1255
    %v1258 = vadd.f32 %v1247, %v1257
    %v1259 = vstv %s175
    %v1260 = vmul.f32 %v1259, %v1255
    %v1261 = vadd.f32 %v1250, %v1260
    %v1262 = vstv %s256
    %v1263 = vmul.f32 %v1262, %v1255
    %v1264 = vadd.f32 %v1253, %v1263
    %1265 = vrot.lane.b32.xlu0 %v550, 106
    %v1266 = vpop.permute.xlu0 %1265
    %v1267 = vstv %s103
    %v1268 = vmul.f32 %v1267, %v1266
    %v1269 = vadd.f32 %v1258, %v1268
    %v1270 = vstv %s184
    %v1271 = vmul.f32 %v1270, %v1266
    %v1272 = vadd.f32 %v1261, %v1271
    %v1273 = vstv %s265
    %v1274 = vmul.f32 %v1273, %v1266
    %v1275 = vadd.f32 %v1264, %v1274
    %1276 = vrot.lane.b32.xlu0 %v72, 106
    %v1277 = vpop.permute.xlu0 %1276
    %v1278 = vstv %s112
    %v1279 = vmul.f32 %v1278, %v1277
    %v1280 = vadd.f32 %v1203, %v1279
    %v1281 = vstv %s193
    %v1282 = vmul.f32 %v1281, %v1277
    %v1283 = vadd.f32 %v1206, %v1282
    %v1284 = vstv %s274
    %v1285 = vmul.f32 %v1284, %v1277
    %v1286 = vadd.f32 %v1209, %v1285
    %1287 = vrot.lane.b32.xlu0 %v578, 106
    %v1288 = vpop.permute.xlu0 %1287
    %v1289 = vstv %s121
    %v1290 = vmul.f32 %v1289, %v1288
    %v1291 = vadd.f32 %v1280, %v1290
    %v1292 = vstv %s202
    %v1293 = vmul.f32 %v1292, %v1288
    %v1294 = vadd.f32 %v1283, %v1293
    %v1295 = vstv %s283
    %v1296 = vmul.f32 %v1295, %v1288
    %v1297 = vadd.f32 %v1286, %v1296
    %1298 = vrot.lane.b32.xlu0 %v593, 106
    %v1299 = vpop.permute.xlu0 %1298
    %v1300 = vstv %s130
    %v1301 = vmul.f32 %v1300, %v1299
    %v1302 = vadd.f32 %v1291, %v1301
    %v1303 = vstv %s211
    %v1304 = vmul.f32 %v1303, %v1299
    %v1305 = vadd.f32 %v1294, %v1304
    %v1306 = vstv %s292
    %v1307 = vmul.f32 %v1306, %v1299
    %v1308 = vadd.f32 %v1297, %v1307
    %1309 = vrot.lane.b32.xlu0 %v75, 106
    %v1310 = vpop.permute.xlu0 %1309
    %v1311 = vstv %s139
    %v1312 = vmul.f32 %v1311, %v1310
    %v1313 = vadd.f32 %v1236, %v1312
    %v1314 = vstv %s220
    %v1315 = vmul.f32 %v1314, %v1310
    %v1316 = vadd.f32 %v1239, %v1315
    %v1317 = vstv %s301
    %v1318 = vmul.f32 %v1317, %v1310
    %v1319 = vadd.f32 %v1242, %v1318
    %1320 = vrot.lane.b32.xlu0 %v621, 106
    %v1321 = vpop.permute.xlu0 %1320
    %v1322 = vstv %s148
    %v1323 = vmul.f32 %v1322, %v1321
    %v1324 = vadd.f32 %v1313, %v1323
    %v1325 = vstv %s229
    %v1326 = vmul.f32 %v1325, %v1321
    %v1327 = vadd.f32 %v1316, %v1326
    %v1328 = vstv %s310
    %v1329 = vmul.f32 %v1328, %v1321
    %v1330 = vadd.f32 %v1319, %v1329
    %1331 = vrot.lane.b32.xlu0 %v636, 106
    %v1332 = vpop.permute.xlu0 %1331
    %v1333 = vstv %s157
    %v1334 = vmul.f32 %v1333, %v1332
    %v1335 = vadd.f32 %v1324, %v1334
    %v1336 = vstv %s238
    %v1337 = vmul.f32 %v1336, %v1332
    %v1338 = vadd.f32 %v1327, %v1337
    %v1339 = vstv %s319
    %v1340 = vmul.f32 %v1339, %v1332
    %v1341 = vadd.f32 %v1330, %v1340
    %v1342 = vadd.f32 %v1269, %v1302
    %v1343 = vadd.f32 %v1342, %v1335
    %s1344 = sld [smem:[#allocation5]]
    %v1345 = vstv %s1344
    %v1346 = vadd.f32 %v1343, %v1345
    %v1347 = vmax.f32 %v1346, 0.0
    %v1348 = vadd.f32 %v1272, %v1305
    %v1349 = vadd.f32 %v1348, %v1338
    %s1350 = sld [smem:[#allocation5 + $0x1]]
    %v1351 = vstv %s1350
    %v1352 = vadd.f32 %v1349, %v1351
    %v1353 = vmax.f32 %v1352, 0.0
    %v1354 = vadd.f32 %v1275, %v1308
    %v1355 = vadd.f32 %v1354, %v1341
    %s1356 = sld [smem:[#allocation5 + $0x2]]
    %v1357 = vstv %s1356
    %v1358 = vadd.f32 %v1355, %v1357
    %v1359 = vmax.f32 %v1358, 0.0
    %s1360 = sld [smem:[#allocation7]]
    %s1361 = sld [smem:[#allocation7 + $0x1]]
    %s1362 = sld [smem:[#allocation7 + $0x2]]
    %s1363 = sld [smem:[#allocation7 + $0x3]]
    %s1364 = sld [smem:[#allocation7 + $0x4]]
    %s1365 = sld [smem:[#allocation7 + $0x5]]
    %s1366 = sld [smem:[#allocation7 + $0x6]]
    %s1367 = sld [smem:[#allocation7 + $0x7]]
    %s1368 = sld [smem:[#allocation7 + $0x8]]
    %s1369 = sld [smem:[#allocation7 + $0x9]]
    %s1370 = sld [smem:[#allocation7 + $0xa]]
    %s1371 = sld [smem:[#allocation7 + $0xb]]
    %s1372 = sld [smem:[#allocation7 + $0xc]]
    %s1373 = sld [smem:[#allocation7 + $0xd]]
    %s1374 = sld [smem:[#allocation7 + $0xe]]
    %s1375 = sld [smem:[#allocation7 + $0xf]]
    %s1376 = sld [smem:[#allocation7 + $0x10]]
    %s1377 = sld [smem:[#allocation7 + $0x11]]
    %s1378 = sld [smem:[#allocation7 + $0x12]]
    %s1379 = sld [smem:[#allocation7 + $0x13]]
    %s1380 = sld [smem:[#allocation7 + $0x14]]
    %s1381 = sld [smem:[#allocation7 + $0x15]]
    %s1382 = sld [smem:[#allocation7 + $0x16]]
    %s1383 = sld [smem:[#allocation7 + $0x17]]
    %s1384 = sld [smem:[#allocation7 + $0x18]]
    %s1385 = sld [smem:[#allocation7 + $0x19]]
    %s1386 = sld [smem:[#allocation7 + $0x1a]]
    %s1387 = sld [smem:[#allocation7 + $0x1b]]
    %s1388 = sld [smem:[#allocation7 + $0x1c]]
    %s1389 = sld [smem:[#allocation7 + $0x1d]]
    %s1390 = sld [smem:[#allocation7 + $0x1e]]
    %s1391 = sld [smem:[#allocation7 + $0x1f]]
    %s1392 = sld [smem:[#allocation7 + $0x20]]
    %s1393 = sld [smem:[#allocation7 + $0x21]]
    %s1394 = sld [smem:[#allocation7 + $0x22]]
    %s1395 = sld [smem:[#allocation7 + $0x23]]
    %s1396 = sld [smem:[#allocation7 + $0x24]]
    %s1397 = sld [smem:[#allocation7 + $0x25]]
    %s1398 = sld [smem:[#allocation7 + $0x26]]
    %s1399 = sld [smem:[#allocation7 + $0x27]]
    %s1400 = sld [smem:[#allocation7 + $0x28]]
    %s1401 = sld [smem:[#allocation7 + $0x29]]
    %s1402 = sld [smem:[#allocation7 + $0x2a]]
    %s1403 = sld [smem:[#allocation7 + $0x2b]]
    %s1404 = sld [smem:[#allocation7 + $0x2c]]
    %s1405 = sld [smem:[#allocation7 + $0x2d]]
    %s1406 = sld [smem:[#allocation7 + $0x2e]]
    %s1407 = sld [smem:[#allocation7 + $0x2f]]
    %s1408 = sld [smem:[#allocation7 + $0x30]]
    %s1409 = sld [smem:[#allocation7 + $0x31]]
    %s1410 = sld [smem:[#allocation7 + $0x32]]
    %s1411 = sld [smem:[#allocation7 + $0x33]]
    %s1412 = sld [smem:[#allocation7 + $0x34]]
    %s1413 = sld [smem:[#allocation7 + $0x35]]
    %s1414 = sld [smem:[#allocation7 + $0x36]]
    %s1415 = sld [smem:[#allocation7 + $0x37]]
    %s1416 = sld [smem:[#allocation7 + $0x38]]
    %s1417 = sld [smem:[#allocation7 + $0x39]]
    %s1418 = sld [smem:[#allocation7 + $0x3a]]
    %s1419 = sld [smem:[#allocation7 + $0x3b]]
    %s1420 = sld [smem:[#allocation7 + $0x3c]]
    %s1421 = sld [smem:[#allocation7 + $0x3d]]
    %s1422 = sld [smem:[#allocation7 + $0x3e]]
    %s1423 = sld [smem:[#allocation7 + $0x3f]]
    %s1424 = sld [smem:[#allocation7 + $0x40]]
    %s1425 = sld [smem:[#allocation7 + $0x41]]
    %s1426 = sld [smem:[#allocation7 + $0x42]]
    %s1427 = sld [smem:[#allocation7 + $0x43]]
    %s1428 = sld [smem:[#allocation7 + $0x44]]
    %s1429 = sld [smem:[#allocation7 + $0x45]]
    %s1430 = sld [smem:[#allocation7 + $0x46]]
    %s1431 = sld [smem:[#allocation7 + $0x47]]
    %s1432 = sld [smem:[#allocation7 + $0x48]]
    %s1433 = sld [smem:[#allocation7 + $0x49]]
    %s1434 = sld [smem:[#allocation7 + $0x4a]]
    %s1435 = sld [smem:[#allocation7 + $0x4b]]
    %s1436 = sld [smem:[#allocation7 + $0x4c]]
    %s1437 = sld [smem:[#allocation7 + $0x4d]]
    %s1438 = sld [smem:[#allocation7 + $0x4e]]
    %s1439 = sld [smem:[#allocation7 + $0x4f]]
    %s1440 = sld [smem:[#allocation7 + $0x50]]
    %s1441 = sld [smem:[#allocation7 + $0x51]]
    %s1442 = sld [smem:[#allocation7 + $0x52]]
    %s1443 = sld [smem:[#allocation7 + $0x53]]
    %s1444 = sld [smem:[#allocation7 + $0x54]]
    %s1445 = sld [smem:[#allocation7 + $0x55]]
    %s1446 = sld [smem:[#allocation7 + $0x56]]
    %s1447 = sld [smem:[#allocation7 + $0x57]]
    %s1448 = sld [smem:[#allocation7 + $0x58]]
    %s1449 = sld [smem:[#allocation7 + $0x59]]
    %s1450 = sld [smem:[#allocation7 + $0x5a]]
    %s1451 = sld [smem:[#allocation7 + $0x5b]]
    %s1452 = sld [smem:[#allocation7 + $0x5c]]
    %s1453 = sld [smem:[#allocation7 + $0x5d]]
    %s1454 = sld [smem:[#allocation7 + $0x5e]]
    %s1455 = sld [smem:[#allocation7 + $0x5f]]
    %s1456 = sld [smem:[#allocation7 + $0x60]]
    %s1457 = sld [smem:[#allocation7 + $0x61]]
    %s1458 = sld [smem:[#allocation7 + $0x62]]
    %s1459 = sld [smem:[#allocation7 + $0x63]]
    %s1460 = sld [smem:[#allocation7 + $0x64]]
    %s1461 = sld [smem:[#allocation7 + $0x65]]
    %s1462 = sld [smem:[#allocation7 + $0x66]]
    %s1463 = sld [smem:[#allocation7 + $0x67]]
    %s1464 = sld [smem:[#allocation7 + $0x68]]
    %s1465 = sld [smem:[#allocation7 + $0x69]]
    %s1466 = sld [smem:[#allocation7 + $0x6a]]
    %s1467 = sld [smem:[#allocation7 + $0x6b]]
    %s1468 = sld [smem:[#allocation7 + $0x6c]]
    %s1469 = sld [smem:[#allocation7 + $0x6d]]
    %s1470 = sld [smem:[#allocation7 + $0x6e]]
    %s1471 = sld [smem:[#allocation7 + $0x6f]]
    %s1472 = sld [smem:[#allocation7 + $0x70]]
    %s1473 = sld [smem:[#allocation7 + $0x71]]
    %s1474 = sld [smem:[#allocation7 + $0x72]]
    %s1475 = sld [smem:[#allocation7 + $0x73]]
    %s1476 = sld [smem:[#allocation7 + $0x74]]
    %s1477 = sld [smem:[#allocation7 + $0x75]]
    %s1478 = sld [smem:[#allocation7 + $0x76]]
    %s1479 = sld [smem:[#allocation7 + $0x77]]
    %s1480 = sld [smem:[#allocation7 + $0x78]]
    %s1481 = sld [smem:[#allocation7 + $0x79]]
    %s1482 = sld [smem:[#allocation7 + $0x7a]]
    %s1483 = sld [smem:[#allocation7 + $0x7b]]
    %s1484 = sld [smem:[#allocation7 + $0x7c]]
    %s1485 = sld [smem:[#allocation7 + $0x7d]]
    %s1486 = sld [smem:[#allocation7 + $0x7e]]
    %s1487 = sld [smem:[#allocation7 + $0x7f]]
    %s1488 = sld [smem:[#allocation7 + $0x80]]
    %s1489 = sld [smem:[#allocation7 + $0x81]]
    %s1490 = sld [smem:[#allocation7 + $0x82]]
    %s1491 = sld [smem:[#allocation7 + $0x83]]
    %s1492 = sld [smem:[#allocation7 + $0x84]]
    %s1493 = sld [smem:[#allocation7 + $0x85]]
    %s1494 = sld [smem:[#allocation7 + $0x86]]
    %s1495 = sld [smem:[#allocation7 + $0x87]]
    %s1496 = sld [smem:[#allocation7 + $0x88]]
    %s1497 = sld [smem:[#allocation7 + $0x89]]
    %s1498 = sld [smem:[#allocation7 + $0x8a]]
    %s1499 = sld [smem:[#allocation7 + $0x8b]]
    %s1500 = sld [smem:[#allocation7 + $0x8c]]
    %s1501 = sld [smem:[#allocation7 + $0x8d]]
    %s1502 = sld [smem:[#allocation7 + $0x8e]]
    %s1503 = sld [smem:[#allocation7 + $0x8f]]
    %s1504 = sld [smem:[#allocation7 + $0x90]]
    %s1505 = sld [smem:[#allocation7 + $0x91]]
    %s1506 = sld [smem:[#allocation7 + $0x92]]
    %s1507 = sld [smem:[#allocation7 + $0x93]]
    %s1508 = sld [smem:[#allocation7 + $0x94]]
    %s1509 = sld [smem:[#allocation7 + $0x95]]
    %s1510 = sld [smem:[#allocation7 + $0x96]]
    %s1511 = sld [smem:[#allocation7 + $0x97]]
    %s1512 = sld [smem:[#allocation7 + $0x98]]
    %s1513 = sld [smem:[#allocation7 + $0x99]]
    %s1514 = sld [smem:[#allocation7 + $0x9a]]
    %s1515 = sld [smem:[#allocation7 + $0x9b]]
    %s1516 = sld [smem:[#allocation7 + $0x9c]]
    %s1517 = sld [smem:[#allocation7 + $0x9d]]
    %s1518 = sld [smem:[#allocation7 + $0x9e]]
    %s1519 = sld [smem:[#allocation7 + $0x9f]]
    %s1520 = sld [smem:[#allocation7 + $0xa0]]
    %s1521 = sld [smem:[#allocation7 + $0xa1]]
    %s1522 = sld [smem:[#allocation7 + $0xa2]]
    %s1523 = sld [smem:[#allocation7 + $0xa3]]
    %s1524 = sld [smem:[#allocation7 + $0xa4]]
    %s1525 = sld [smem:[#allocation7 + $0xa5]]
    %s1526 = sld [smem:[#allocation7 + $0xa6]]
    %s1527 = sld [smem:[#allocation7 + $0xa7]]
    %s1528 = sld [smem:[#allocation7 + $0xa8]]
    %s1529 = sld [smem:[#allocation7 + $0xa9]]
    %s1530 = sld [smem:[#allocation7 + $0xaa]]
    %s1531 = sld [smem:[#allocation7 + $0xab]]
    %s1532 = sld [smem:[#allocation7 + $0xac]]
    %s1533 = sld [smem:[#allocation7 + $0xad]]
    %s1534 = sld [smem:[#allocation7 + $0xae]]
    %s1535 = sld [smem:[#allocation7 + $0xaf]]
    %s1536 = sld [smem:[#allocation7 + $0xb0]]
    %s1537 = sld [smem:[#allocation7 + $0xb1]]
    %s1538 = sld [smem:[#allocation7 + $0xb2]]
    %s1539 = sld [smem:[#allocation7 + $0xb3]]
    %s1540 = sld [smem:[#allocation7 + $0xb4]]
    %s1541 = sld [smem:[#allocation7 + $0xb5]]
    %s1542 = sld [smem:[#allocation7 + $0xb6]]
    %s1543 = sld [smem:[#allocation7 + $0xb7]]
    %s1544 = sld [smem:[#allocation7 + $0xb8]]
    %s1545 = sld [smem:[#allocation7 + $0xb9]]
    %s1546 = sld [smem:[#allocation7 + $0xba]]
    %s1547 = sld [smem:[#allocation7 + $0xbb]]
    %s1548 = sld [smem:[#allocation7 + $0xbc]]
    %s1549 = sld [smem:[#allocation7 + $0xbd]]
    %s1550 = sld [smem:[#allocation7 + $0xbe]]
    %s1551 = sld [smem:[#allocation7 + $0xbf]]
    %s1552 = sld [smem:[#allocation7 + $0xc0]]
    %s1553 = sld [smem:[#allocation7 + $0xc1]]
    %s1554 = sld [smem:[#allocation7 + $0xc2]]
    %s1555 = sld [smem:[#allocation7 + $0xc3]]
    %s1556 = sld [smem:[#allocation7 + $0xc4]]
    %s1557 = sld [smem:[#allocation7 + $0xc5]]
    %s1558 = sld [smem:[#allocation7 + $0xc6]]
    %s1559 = sld [smem:[#allocation7 + $0xc7]]
    %s1560 = sld [smem:[#allocation7 + $0xc8]]
    %s1561 = sld [smem:[#allocation7 + $0xc9]]
    %s1562 = sld [smem:[#allocation7 + $0xca]]
    %s1563 = sld [smem:[#allocation7 + $0xcb]]
    %s1564 = sld [smem:[#allocation7 + $0xcc]]
    %s1565 = sld [smem:[#allocation7 + $0xcd]]
    %s1566 = sld [smem:[#allocation7 + $0xce]]
    %s1567 = sld [smem:[#allocation7 + $0xcf]]
    %s1568 = sld [smem:[#allocation7 + $0xd0]]
    %s1569 = sld [smem:[#allocation7 + $0xd1]]
    %s1570 = sld [smem:[#allocation7 + $0xd2]]
    %s1571 = sld [smem:[#allocation7 + $0xd3]]
    %s1572 = sld [smem:[#allocation7 + $0xd4]]
    %s1573 = sld [smem:[#allocation7 + $0xd5]]
    %s1574 = sld [smem:[#allocation7 + $0xd6]]
    %s1575 = sld [smem:[#allocation7 + $0xd7]]
    %s1576 = sld [smem:[#allocation7 + $0xd8]]
    %s1577 = sld [smem:[#allocation7 + $0xd9]]
    %s1578 = sld [smem:[#allocation7 + $0xda]]
    %s1579 = sld [smem:[#allocation7 + $0xdb]]
    %s1580 = sld [smem:[#allocation7 + $0xdc]]
    %s1581 = sld [smem:[#allocation7 + $0xdd]]
    %s1582 = sld [smem:[#allocation7 + $0xde]]
    %s1583 = sld [smem:[#allocation7 + $0xdf]]
    %s1584 = sld [smem:[#allocation7 + $0xe0]]
    %s1585 = sld [smem:[#allocation7 + $0xe1]]
    %s1586 = sld [smem:[#allocation7 + $0xe2]]
    %s1587 = sld [smem:[#allocation7 + $0xe3]]
    %s1588 = sld [smem:[#allocation7 + $0xe4]]
    %s1589 = sld [smem:[#allocation7 + $0xe5]]
    %s1590 = sld [smem:[#allocation7 + $0xe6]]
    %s1591 = sld [smem:[#allocation7 + $0xe7]]
    %s1592 = sld [smem:[#allocation7 + $0xe8]]
    %s1593 = sld [smem:[#allocation7 + $0xe9]]
    %s1594 = sld [smem:[#allocation7 + $0xea]]
    %s1595 = sld [smem:[#allocation7 + $0xeb]]
    %s1596 = sld [smem:[#allocation7 + $0xec]]
    %s1597 = sld [smem:[#allocation7 + $0xed]]
    %s1598 = sld [smem:[#allocation7 + $0xee]]
    %s1599 = sld [smem:[#allocation7 + $0xef]]
    %s1600 = sld [smem:[#allocation7 + $0xf0]]
    %s1601 = sld [smem:[#allocation7 + $0xf1]]
    %s1602 = sld [smem:[#allocation7 + $0xf2]]
    %v1603 = vstv %s1360
    %v1604 = vmul.f32 %v1603, %v1347
    %v1605 = vstv %s1441
    %v1606 = vmul.f32 %v1605, %v1347
    %v1607 = vstv %s1522
    %v1608 = vmul.f32 %v1607, %v1347
    %v1609 = vstv %s1369
    %v1610 = vmul.f32 %v1609, %v1347
    %v1612 = vrot.slane %v1610, 1
    %v1614 = vadd.f32 %v1604, %v1612
    %v1615 = vstv %s1450
    %v1616 = vmul.f32 %v1615, %v1347
    %v1618 = vrot.slane %v1616, 1
    %v1620 = vadd.f32 %v1606, %v1618
    %v1621 = vstv %s1531
    %v1622 = vmul.f32 %v1621, %v1347
    %v1624 = vrot.slane %v1622, 1
    %v1626 = vadd.f32 %v1608, %v1624
    %v1627 = vstv %s1378
    %v1628 = vmul.f32 %v1627, %v1347
    %v1630 = vrot.slane %v1628, 2
    %v1632 = vadd.f32 %v1614, %v1630
    %v1633 = vstv %s1459
    %v1634 = vmul.f32 %v1633, %v1347
    %v1636 = vrot.slane %v1634, 2
    %v1638 = vadd.f32 %v1620, %v1636
    %v1639 = vstv %s1540
    %v1640 = vmul.f32 %v1639, %v1347
    %v1642 = vrot.slane %v1640, 2
    %v1644 = vadd.f32 %v1626, %v1642
    %v1645 = vstv %s1387
    %v1646 = vmul.f32 %v1645, %v1353
    %v1647 = vstv %s1468
    %v1648 = vmul.f32 %v1647, %v1353
    %v1649 = vstv %s1549
    %v1650 = vmul.f32 %v1649, %v1353
    %v1651 = vstv %s1396
    %v1652 = vmul.f32 %v1651, %v1353
    %v1654 = vrot.slane %v1652, 1
    %v1656 = vadd.f32 %v1646, %v1654
    %v1657 = vstv %s1477
    %v1658 = vmul.f32 %v1657, %v1353
    %v1660 = vrot.slane %v1658, 1
    %v1662 = vadd.f32 %v1648, %v1660
    %v1663 = vstv %s1558
    %v1664 = vmul.f32 %v1663, %v1353
    %v1666 = vrot.slane %v1664, 1
    %v1668 = vadd.f32 %v1650, %v1666
    %v1669 = vstv %s1405
    %v1670 = vmul.f32 %v1669, %v1353
    %v1672 = vrot.slane %v1670, 2
    %v1674 = vadd.f32 %v1656, %v1672
    %v1675 = vstv %s1486
    %v1676 = vmul.f32 %v1675, %v1353
    %v1678 = vrot.slane %v1676, 2
    %v1680 = vadd.f32 %v1662, %v1678
    %v1681 = vstv %s1567
    %v1682 = vmul.f32 %v1681, %v1353
    %v1684 = vrot.slane %v1682, 2
    %v1686 = vadd.f32 %v1668, %v1684
    %v1687 = vstv %s1414
    %v1688 = vmul.f32 %v1687, %v1359
    %v1689 = vstv %s1495
    %v1690 = vmul.f32 %v1689, %v1359
    %v1691 = vstv %s1576
    %v1692 = vmul.f32 %v1691, %v1359
    %v1693 = vstv %s1423
    %v1694 = vmul.f32 %v1693, %v1359
    %v1696 = vrot.slane %v1694, 1
    %v1698 = vadd.f32 %v1688, %v1696
    %v1699 = vstv %s1504
    %v1700 = vmul.f32 %v1699, %v1359
    %v1702 = vrot.slane %v1700, 1
    %v1704 = vadd.f32 %v1690, %v1702
    %v1705 = vstv %s1585
    %v1706 = vmul.f32 %v1705, %v1359
    %v1708 = vrot.slane %v1706, 1
    %v1710 = vadd.f32 %v1692, %v1708
    %v1711 = vstv %s1432
    %v1712 = vmul.f32 %v1711, %v1359
    %v1714 = vrot.slane %v1712, 2
    %v1716 = vadd.f32 %v1698, %v1714
    %v1717 = vstv %s1513
    %v1718 = vmul.f32 %v1717, %v1359
    %v1720 = vrot.slane %v1718, 2
    %v1722 = vadd.f32 %v1704, %v1720
    %v1723 = vstv %s1594
    %v1724 = vmul.f32 %v1723, %v1359
    %v1726 = vrot.slane %v1724, 2
    %v1728 = vadd.f32 %v1710, %v1726
    %1729 = vrot.lane.b32.xlu0 %v1347, 127
    %v1730 = vpop.permute.xlu0 %1729
    %v1731 = vstv %s1361
    %v1732 = vmul.f32 %v1731, %v1730
    %v1733 = vadd.f32 %v1632, %v1732
    %v1734 = vstv %s1442
    %v1735 = vmul.f32 %v1734, %v1730
    %v1736 = vadd.f32 %v1638, %v1735
    %v1737 = vstv %s1523
    %v1738 = vmul.f32 %v1737, %v1730
    %v1739 = vadd.f32 %v1644, %v1738
    %v1741 = vrot.slane %v1347, 1
    %1743 = vrot.lane.b32.xlu0 %v1741, 127
    %v1744 = vpop.permute.xlu0 %1743
    %v1745 = vstv %s1370
    %v1746 = vmul.f32 %v1745, %v1744
    %v1747 = vadd.f32 %v1733, %v1746
    %v1748 = vstv %s1451
    %v1749 = vmul.f32 %v1748, %v1744
    %v1750 = vadd.f32 %v1736, %v1749
    %v1751 = vstv %s1532
    %v1752 = vmul.f32 %v1751, %v1744
    %v1753 = vadd.f32 %v1739, %v1752
    %v1754 = vrot.slane %v1347, 2
    %1756 = vrot.lane.b32.xlu0 %v1754, 127
    %v1757 = vpop.permute.xlu0 %1756
    %v1758 = vstv %s1379
    %v1759 = vmul.f32 %v1758, %v1757
    %v1760 = vadd.f32 %v1747, %v1759
    %v1761 = vstv %s1460
    %v1762 = vmul.f32 %v1761, %v1757
    %v1763 = vadd.f32 %v1750, %v1762
    %v1764 = vstv %s1541
    %v1765 = vmul.f32 %v1764, %v1757
    %v1766 = vadd.f32 %v1753, %v1765
    %1767 = vrot.lane.b32.xlu0 %v1353, 127
    %v1768 = vpop.permute.xlu0 %1767
    %v1769 = vstv %s1388
    %v1770 = vmul.f32 %v1769, %v1768
    %v1771 = vadd.f32 %v1674, %v1770
    %v1772 = vstv %s1469
    %v1773 = vmul.f32 %v1772, %v1768
    %v1774 = vadd.f32 %v1680, %v1773
    %v1775 = vstv %s1550
    %v1776 = vmul.f32 %v1775, %v1768
    %v1777 = vadd.f32 %v1686, %v1776
    %v1779 = vrot.slane %v1353, 1
    %1781 = vrot.lane.b32.xlu0 %v1779, 127
    %v1782 = vpop.permute.xlu0 %1781
    %v1783 = vstv %s1397
    %v1784 = vmul.f32 %v1783, %v1782
    %v1785 = vadd.f32 %v1771, %v1784
    %v1786 = vstv %s1478
    %v1787 = vmul.f32 %v1786, %v1782
    %v1788 = vadd.f32 %v1774, %v1787
    %v1789 = vstv %s1559
    %v1790 = vmul.f32 %v1789, %v1782
    %v1791 = vadd.f32 %v1777, %v1790
    %v1792 = vrot.slane %v1353, 2
    %1794 = vrot.lane.b32.xlu0 %v1792, 127
    %v1795 = vpop.permute.xlu0 %1794
    %v1796 = vstv %s1406
    %v1797 = vmul.f32 %v1796, %v1795
    %v1798 = vadd.f32 %v1785, %v1797
    %v1799 = vstv %s1487
    %v1800 = vmul.f32 %v1799, %v1795
    %v1801 = vadd.f32 %v1788, %v1800
    %v1802 = vstv %s1568
    %v1803 = vmul.f32 %v1802, %v1795
    %v1804 = vadd.f32 %v1791, %v1803
    %1805 = vrot.lane.b32.xlu0 %v1359, 127
    %v1806 = vpop.permute.xlu0 %1805
    %v1807 = vstv %s1415
    %v1808 = vmul.f32 %v1807, %v1806
    %v1809 = vadd.f32 %v1716, %v1808
    %v1810 = vstv %s1496
    %v1811 = vmul.f32 %v1810, %v1806
    %v1812 = vadd.f32 %v1722, %v1811
    %v1813 = vstv %s1577
    %v1814 = vmul.f32 %v1813, %v1806
    %v1815 = vadd.f32 %v1728, %v1814
    %v1817 = vrot.slane %v1359, 1
    %1819 = vrot.lane.b32.xlu0 %v1817, 127
    %v1820 = vpop.permute.xlu0 %1819
    %v1821 = vstv %s1424
    %v1822 = vmul.f32 %v1821, %v1820
    %v1823 = vadd.f32 %v1809, %v1822
    %v1824 = vstv %s1505
    %v1825 = vmul.f32 %v1824, %v1820
    %v1826 = vadd.f32 %v1812, %v1825
    %v1827 = vstv %s1586
    %v1828 = vmul.f32 %v1827, %v1820
    %v1829 = vadd.f32 %v1815, %v1828
    %v1830 = vrot.slane %v1359, 2
    %1832 = vrot.lane.b32.xlu0 %v1830, 127
    %v1833 = vpop.permute.xlu0 %1832
    %v1834 = vstv %s1433
    %v1835 = vmul.f32 %v1834, %v1833
    %v1836 = vadd.f32 %v1823, %v1835
    %v1837 = vstv %s1514
    %v1838 = vmul.f32 %v1837, %v1833
    %v1839 = vadd.f32 %v1826, %v1838
    %v1840 = vstv %s1595
    %v1841 = vmul.f32 %v1840, %v1833
    %v1842 = vadd.f32 %v1829, %v1841
    %1843 = vrot.lane.b32.xlu0 %v1347, 126
    %v1844 = vpop.permute.xlu0 %1843
    %v1845 = vstv %s1362
    %v1846 = vmul.f32 %v1845, %v1844
    %v1847 = vadd.f32 %v1760, %v1846
    %v1848 = vstv %s1443
    %v1849 = vmul.f32 %v1848, %v1844
    %v1850 = vadd.f32 %v1763, %v1849
    %v1851 = vstv %s1524
    %v1852 = vmul.f32 %v1851, %v1844
    %v1853 = vadd.f32 %v1766, %v1852
    %1854 = vrot.lane.b32.xlu0 %v1741, 126
    %v1855 = vpop.permute.xlu0 %1854
    %v1856 = vstv %s1371
    %v1857 = vmul.f32 %v1856, %v1855
    %v1858 = vadd.f32 %v1847, %v1857
    %v1859 = vstv %s1452
    %v1860 = vmul.f32 %v1859, %v1855
    %v1861 = vadd.f32 %v1850, %v1860
    %v1862 = vstv %s1533
    %v1863 = vmul.f32 %v1862, %v1855
    %v1864 = vadd.f32 %v1853, %v1863
    %1865 = vrot.lane.b32.xlu0 %v1754, 126
    %v1866 = vpop.permute.xlu0 %1865
    %v1867 = vstv %s1380
    %v1868 = vmul.f32 %v1867, %v1866
    %v1869 = vadd.f32 %v1858, %v1868
    %v1870 = vstv %s1461
    %v1871 = vmul.f32 %v1870, %v1866
    %v1872 = vadd.f32 %v1861, %v1871
    %v1873 = vstv %s1542
    %v1874 = vmul.f32 %v1873, %v1866
    %v1875 = vadd.f32 %v1864, %v1874
    %1876 = vrot.lane.b32.xlu0 %v1353, 126
    %v1877 = vpop.permute.xlu0 %1876
    %v1878 = vstv %s1389
    %v1879 = vmul.f32 %v1878, %v1877
    %v1880 = vadd.f32 %v1798, %v1879
    %v1881 = vstv %s1470
    %v1882 = vmul.f32 %v1881, %v1877
    %v1883 = vadd.f32 %v1801, %v1882
    %v1884 = vstv %s1551
    %v1885 = vmul.f32 %v1884, %v1877
    %v1886 = vadd.f32 %v1804, %v1885
    %1887 = vrot.lane.b32.xlu0 %v1779, 126
    %v1888 = vpop.permute.xlu0 %1887
    %v1889 = vstv %s1398
    %v1890 = vmul.f32 %v1889, %v1888
    %v1891 = vadd.f32 %v1880, %v1890
    %v1892 = vstv %s1479
    %v1893 = vmul.f32 %v1892, %v1888
    %v1894 = vadd.f32 %v1883, %v1893
    %v1895 = vstv %s1560
    %v1896 = vmul.f32 %v1895, %v1888
    %v1897 = vadd.f32 %v1886, %v1896
    %1898 = vrot.lane.b32.xlu0 %v1792, 126
    %v1899 = vpop.permute.xlu0 %1898
    %v1900 = vstv %s1407
    %v1901 = vmul.f32 %v1900, %v1899
    %v1902 = vadd.f32 %v1891, %v1901
    %v1903 = vstv %s1488
    %v1904 = vmul.f32 %v1903, %v1899
    %v1905 = vadd.f32 %v1894, %v1904
    %v1906 = vstv %s1569
    %v1907 = vmul.f32 %v1906, %v1899
    %v1908 = vadd.f32 %v1897, %v1907
    %1909 = vrot.lane.b32.xlu0 %v1359, 126
    %v1910 = vpop.permute.xlu0 %1909
    %v1911 = vstv %s1416
    %v1912 = vmul.f32 %v1911, %v1910
    %v1913 = vadd.f32 %v1836, %v1912
    %v1914 = vstv %s1497
    %v1915 = vmul.f32 %v1914, %v1910
    %v1916 = vadd.f32 %v1839, %v1915
    %v1917 = vstv %s1578
    %v1918 = vmul.f32 %v1917, %v1910
    %v1919 = vadd.f32 %v1842, %v1918
    %1920 = vrot.lane.b32.xlu0 %v1817, 126
    %v1921 = vpop.permute.xlu0 %1920
    %v1922 = vstv %s1425
    %v1923 = vmul.f32 %v1922, %v1921
    %v1924 = vadd.f32 %v1913, %v1923
    %v1925 = vstv %s1506
    %v1926 = vmul.f32 %v1925, %v1921
    %v1927 = vadd.f32 %v1916, %v1926
    %v1928 = vstv %s1587
    %v1929 = vmul.f32 %v1928, %v1921
    %v1930 = vadd.f32 %v1919, %v1929
    %1931 = vrot.lane.b32.xlu0 %v1830, 126
    %v1932 = vpop.permute.xlu0 %1931
    %v1933 = vstv %s1434
    %v1934 = vmul.f32 %v1933, %v1932
    %v1935 = vadd.f32 %v1924, %v1934
    %v1936 = vstv %s1515
    %v1937 = vmul.f32 %v1936, %v1932
    %v1938 = vadd.f32 %v1927, %v1937
    %v1939 = vstv %s1596
    %v1940 = vmul.f32 %v1939, %v1932
    %v1941 = vadd.f32 %v1930, %v1940
    %1942 = vrot.lane.b32.xlu0 %v1347, 118
    %v1943 = vpop.permute.xlu0 %1942
    %v1944 = vstv %s1363
    %v1945 = vmul.f32 %v1944, %v1943
    %v1946 = vadd.f32 %v1869, %v1945
    %v1947 = vstv %s1444
    %v1948 = vmul.f32 %v1947, %v1943
    %v1949 = vadd.f32 %v1872, %v1948
    %v1950 = vstv %s1525
    %v1951 = vmul.f32 %v1950, %v1943
    %v1952 = vadd.f32 %v1875, %v1951
    %1953 = vrot.lane.b32.xlu0 %v1741, 118
    %v1954 = vpop.permute.xlu0 %1953
    %v1955 = vstv %s1372
    %v1956 = vmul.f32 %v1955, %v1954
    %v1957 = vadd.f32 %v1946, %v1956
    %v1958 = vstv %s1453
    %v1959 = vmul.f32 %v1958, %v1954
    %v1960 = vadd.f32 %v1949, %v1959
    %v1961 = vstv %s1534
    %v1962 = vmul.f32 %v1961, %v1954
    %v1963 = vadd.f32 %v1952, %v1962
    %1964 = vrot.lane.b32.xlu0 %v1754, 118
    %v1965 = vpop.permute.xlu0 %1964
    %v1966 = vstv %s1381
    %v1967 = vmul.f32 %v1966, %v1965
    %v1968 = vadd.f32 %v1957, %v1967
    %v1969 = vstv %s1462
    %v1970 = vmul.f32 %v1969, %v1965
    %v1971 = vadd.f32 %v1960, %v1970
    %v1972 = vstv %s1543
    %v1973 = vmul.f32 %v1972, %v1965
    %v1974 = vadd.f32 %v1963, %v1973
    %1975 = vrot.lane.b32.xlu0 %v1353, 118
    %v1976 = vpop.permute.xlu0 %1975
    %v1977 = vstv %s1390
    %v1978 = vmul.f32 %v1977, %v1976
    %v1979 = vadd.f32 %v1902, %v1978
    %v1980 = vstv %s1471
    %v1981 = vmul.f32 %v1980, %v1976
    %v1982 = vadd.f32 %v1905, %v1981
    %v1983 = vstv %s1552
    %v1984 = vmul.f32 %v1983, %v1976
    %v1985 = vadd.f32 %v1908, %v1984
    %1986 = vrot.lane.b32.xlu0 %v1779, 118
    %v1987 = vpop.permute.xlu0 %1986
    %v1988 = vstv %s1399
    %v1989 = vmul.f32 %v1988, %v1987
    %v1990 = vadd.f32 %v1979, %v1989
    %v1991 = vstv %s1480
    %v1992 = vmul.f32 %v1991, %v1987
    %v1993 = vadd.f32 %v1982, %v1992
    %v1994 = vstv %s1561
    %v1995 = vmul.f32 %v1994, %v1987
    %v1996 = vadd.f32 %v1985, %v1995
    %1997 = vrot.lane.b32.xlu0 %v1792, 118
    %v1998 = vpop.permute.xlu0 %1997
    %v1999 = vstv %s1408
    %v2000 = vmul.f32 %v1999, %v1998
    %v2001 = vadd.f32 %v1990, %v2000
    %v2002 = vstv %s1489
    %v2003 = vmul.f32 %v2002, %v1998
    %v2004 = vadd.f32 %v1993, %v2003
    %v2005 = vstv %s1570
    %v2006 = vmul.f32 %v2005, %v1998
    %v2007 = vadd.f32 %v1996, %v2006
    %2008 = vrot.lane.b32.xlu0 %v1359, 118
    %v2009 = vpop.permute.xlu0 %2008
    %v2010 = vstv %s1417
    %v2011 = vmul.f32 %v2010, %v2009
    %v2012 = vadd.f32 %v1935, %v2011
    %v2013 = vstv %s1498
    %v2014 = vmul.f32 %v2013, %v2009
    %v2015 = vadd.f32 %v1938, %v2014
    %v2016 = vstv %s1579
    %v2017 = vmul.f32 %v2016, %v2009
    %v2018 = vadd.f32 %v1941, %v2017
    %2019 = vrot.lane.b32.xlu0 %v1817, 118
    %v2020 = vpop.permute.xlu0 %2019
    %v2021 = vstv %s1426
    %v2022 = vmul.f32 %v2021, %v2020
    %v2023 = vadd.f32 %v2012, %v2022
    %v2024 = vstv %s1507
    %v2025 = vmul.f32 %v2024, %v2020
    %v2026 = vadd.f32 %v2015, %v2025
    %v2027 = vstv %s1588
    %v2028 = vmul.f32 %v2027, %v2020
    %v2029 = vadd.f32 %v2018, %v2028
    %2030 = vrot.lane.b32.xlu0 %v1830, 118
    %v2031 = vpop.permute.xlu0 %2030
    %v2032 = vstv %s1435
    %v2033 = vmul.f32 %v2032, %v2031
    %v2034 = vadd.f32 %v2023, %v2033
    %v2035 = vstv %s1516
    %v2036 = vmul.f32 %v2035, %v2031
    %v2037 = vadd.f32 %v2026, %v2036
    %v2038 = vstv %s1597
    %v2039 = vmul.f32 %v2038, %v2031
    %v2040 = vadd.f32 %v2029, %v2039
    %2041 = vrot.lane.b32.xlu0 %v1347, 117
    %v2042 = vpop.permute.xlu0 %2041
    %v2043 = vstv %s1364
    %v2044 = vmul.f32 %v2043, %v2042
    %v2045 = vadd.f32 %v1968, %v2044
    %v2046 = vstv %s1445
    %v2047 = vmul.f32 %v2046, %v2042
    %v2048 = vadd.f32 %v1971, %v2047
    %v2049 = vstv %s1526
    %v2050 = vmul.f32 %v2049, %v2042
    %v2051 = vadd.f32 %v1974, %v2050
    %2052 = vrot.lane.b32.xlu0 %v1741, 117
    %v2053 = vpop.permute.xlu0 %2052
    %v2054 = vstv %s1373
    %v2055 = vmul.f32 %v2054, %v2053
    %v2056 = vadd.f32 %v2045, %v2055
    %v2057 = vstv %s1454
    %v2058 = vmul.f32 %v2057, %v2053
    %v2059 = vadd.f32 %v2048, %v2058
    %v2060 = vstv %s1535
    %v2061 = vmul.f32 %v2060, %v2053
    %v2062 = vadd.f32 %v2051, %v2061
    %2063 = vrot.lane.b32.xlu0 %v1754, 117
    %v2064 = vpop.permute.xlu0 %2063
    %v2065 = vstv %s1382
    %v2066 = vmul.f32 %v2065, %v2064
    %v2067 = vadd.f32 %v2056, %v2066
    %v2068 = vstv %s1463
    %v2069 = vmul.f32 %v2068, %v2064
    %v2070 = vadd.f32 %v2059, %v2069
    %v2071 = vstv %s1544
    %v2072 = vmul.f32 %v2071, %v2064
    %v2073 = vadd.f32 %v2062, %v2072
    %2074 = vrot.lane.b32.xlu0 %v1353, 117
    %v2075 = vpop.permute.xlu0 %2074
    %v2076 = vstv %s1391
    %v2077 = vmul.f32 %v2076, %v2075
    %v2078 = vadd.f32 %v2001, %v2077
    %v2079 = vstv %s1472
    %v2080 = vmul.f32 %v2079, %v2075
    %v2081 = vadd.f32 %v2004, %v2080
    %v2082 = vstv %s1553
    %v2083 = vmul.f32 %v2082, %v2075
    %v2084 = vadd.f32 %v2007, %v2083
    %2085 = vrot.lane.b32.xlu0 %v1779, 117
    %v2086 = vpop.permute.xlu0 %2085
    %v2087 = vstv %s1400
    %v2088 = vmul.f32 %v2087, %v2086
    %v2089 = vadd.f32 %v2078, %v2088
    %v2090 = vstv %s1481
    %v2091 = vmul.f32 %v2090, %v2086
    %v2092 = vadd.f32 %v2081, %v2091
    %v2093 = vstv %s1562
    %v2094 = vmul.f32 %v2093, %v2086
    %v2095 = vadd.f32 %v2084, %v2094
    %2096 = vrot.lane.b32.xlu0 %v1792, 117
    %v2097 = vpop.permute.xlu0 %2096
    %v2098 = vstv %s1409
    %v2099 = vmul.f32 %v2098, %v2097
    %v2100 = vadd.f32 %v2089, %v2099
    %v2101 = vstv %s1490
    %v2102 = vmul.f32 %v2101, %v2097
    %v2103 = vadd.f32 %v2092, %v2102
    %v2104 = vstv %s1571
    %v2105 = vmul.f32 %v2104, %v2097
    %v2106 = vadd.f32 %v2095, %v2105
    %2107 = vrot.lane.b32.xlu0 %v1359, 117
    %v2108 = vpop.permute.xlu0 %2107
    %v2109 = vstv %s1418
    %v2110 = vmul.f32 %v2109, %v2108
    %v2111 = vadd.f32 %v2034, %v2110
    %v2112 = vstv %s1499
    %v2113 = vmul.f32 %v2112, %v2108
    %v2114 = vadd.f32 %v2037, %v2113
    %v2115 = vstv %s1580
    %v2116 = vmul.f32 %v2115, %v2108
    %v2117 = vadd.f32 %v2040, %v2116
    %2118 = vrot.lane.b32.xlu0 %v1817, 117
    %v2119 = vpop.permute.xlu0 %2118
    %v2120 = vstv %s1427
    %v2121 = vmul.f32 %v2120, %v2119
    %v2122 = vadd.f32 %v2111, %v2121
    %v2123 = vstv %s1508
    %v2124 = vmul.f32 %v2123, %v2119
    %v2125 = vadd.f32 %v2114, %v2124
    %v2126 = vstv %s1589
    %v2127 = vmul.f32 %v2126, %v2119
    %v2128 = vadd.f32 %v2117, %v2127
    %2129 = vrot.lane.b32.xlu0 %v1830, 117
    %v2130 = vpop.permute.xlu0 %2129
    %v2131 = vstv %s1436
    %v2132 = vmul.f32 %v2131, %v2130
    %v2133 = vadd.f32 %v2122, %v2132
    %v2134 = vstv %s1517
    %v2135 = vmul.f32 %v2134, %v2130
    %v2136 = vadd.f32 %v2125, %v2135
    %v2137 = vstv %s1598
    %v2138 = vmul.f32 %v2137, %v2130
    %v2139 = vadd.f32 %v2128, %v2138
    %2140 = vrot.lane.b32.xlu0 %v1347, 116
    %v2141 = vpop.permute.xlu0 %2140
    %v2142 = vstv %s1365
    %v2143 = vmul.f32 %v2142, %v2141
    %v2144 = vadd.f32 %v2067, %v2143
    %v2145 = vstv %s1446
    %v2146 = vmul.f32 %v2145, %v2141
    %v2147 = vadd.f32 %v2070, %v2146
    %v2148 = vstv %s1527
    %v2149 = vmul.f32 %v2148, %v2141
    %v2150 = vadd.f32 %v2073, %v2149
    %2151 = vrot.lane.b32.xlu0 %v1741, 116
    %v2152 = vpop.permute.xlu0 %2151
    %v2153 = vstv %s1374
    %v2154 = vmul.f32 %v2153, %v2152
    %v2155 = vadd.f32 %v2144, %v2154
    %v2156 = vstv %s1455
    %v2157 = vmul.f32 %v2156, %v2152
    %v2158 = vadd.f32 %v2147, %v2157
    %v2159 = vstv %s1536
    %v2160 = vmul.f32 %v2159, %v2152
    %v2161 = vadd.f32 %v2150, %v2160
    %2162 = vrot.lane.b32.xlu0 %v1754, 116
    %v2163 = vpop.permute.xlu0 %2162
    %v2164 = vstv %s1383
    %v2165 = vmul.f32 %v2164, %v2163
    %v2166 = vadd.f32 %v2155, %v2165
    %v2167 = vstv %s1464
    %v2168 = vmul.f32 %v2167, %v2163
    %v2169 = vadd.f32 %v2158, %v2168
    %v2170 = vstv %s1545
    %v2171 = vmul.f32 %v2170, %v2163
    %v2172 = vadd.f32 %v2161, %v2171
    %2173 = vrot.lane.b32.xlu0 %v1353, 116
    %v2174 = vpop.permute.xlu0 %2173
    %v2175 = vstv %s1392
    %v2176 = vmul.f32 %v2175, %v2174
    %v2177 = vadd.f32 %v2100, %v2176
    %v2178 = vstv %s1473
    %v2179 = vmul.f32 %v2178, %v2174
    %v2180 = vadd.f32 %v2103, %v2179
    %v2181 = vstv %s1554
    %v2182 = vmul.f32 %v2181, %v2174
    %v2183 = vadd.f32 %v2106, %v2182
    %2184 = vrot.lane.b32.xlu0 %v1779, 116
    %v2185 = vpop.permute.xlu0 %2184
    %v2186 = vstv %s1401
    %v2187 = vmul.f32 %v2186, %v2185
    %v2188 = vadd.f32 %v2177, %v2187
    %v2189 = vstv %s1482
    %v2190 = vmul.f32 %v2189, %v2185
    %v2191 = vadd.f32 %v2180, %v2190
    %v2192 = vstv %s1563
    %v2193 = vmul.f32 %v2192, %v2185
    %v2194 = vadd.f32 %v2183, %v2193
    %2195 = vrot.lane.b32.xlu0 %v1792, 116
    %v2196 = vpop.permute.xlu0 %2195
    %v2197 = vstv %s1410
    %v2198 = vmul.f32 %v2197, %v2196
    %v2199 = vadd.f32 %v2188, %v2198
    %v2200 = vstv %s1491
    %v2201 = vmul.f32 %v2200, %v2196
    %v2202 = vadd.f32 %v2191, %v2201
    %v2203 = vstv %s1572
    %v2204 = vmul.f32 %v2203, %v2196
    %v2205 = vadd.f32 %v2194, %v2204
    %2206 = vrot.lane.b32.xlu0 %v1359, 116
    %v2207 = vpop.permute.xlu0 %2206
    %v2208 = vstv %s1419
    %v2209 = vmul.f32 %v2208, %v2207
    %v2210 = vadd.f32 %v2133, %v2209
    %v2211 = vstv %s1500
    %v2212 = vmul.f32 %v2211, %v2207
    %v2213 = vadd.f32 %v2136, %v2212
    %v2214 = vstv %s1581
    %v2215 = vmul.f32 %v2214, %v2207
    %v2216 = vadd.f32 %v2139, %v2215
    %2217 = vrot.lane.b32.xlu0 %v1817, 116
    %v2218 = vpop.permute.xlu0 %2217
    %v2219 = vstv %s1428
    %v2220 = vmul.f32 %v2219, %v2218
    %v2221 = vadd.f32 %v2210, %v2220
    %v2222 = vstv %s1509
    %v2223 = vmul.f32 %v2222, %v2218
    %v2224 = vadd.f32 %v2213, %v2223
    %v2225 = vstv %s1590
    %v2226 = vmul.f32 %v2225, %v2218
    %v2227 = vadd.f32 %v2216, %v2226
    %2228 = vrot.lane.b32.xlu0 %v1830, 116
    %v2229 = vpop.permute.xlu0 %2228
    %v2230 = vstv %s1437
    %v2231 = vmul.f32 %v2230, %v2229
    %v2232 = vadd.f32 %v2221, %v2231
    %v2233 = vstv %s1518
    %v2234 = vmul.f32 %v2233, %v2229
    %v2235 = vadd.f32 %v2224, %v2234
    %v2236 = vstv %s1599
    %v2237 = vmul.f32 %v2236, %v2229
    %v2238 = vadd.f32 %v2227, %v2237
    %2239 = vrot.lane.b32.xlu0 %v1347, 108
    %v2240 = vpop.permute.xlu0 %2239
    %v2241 = vstv %s1366
    %v2242 = vmul.f32 %v2241, %v2240
    %v2243 = vadd.f32 %v2166, %v2242
    %v2244 = vstv %s1447
    %v2245 = vmul.f32 %v2244, %v2240
    %v2246 = vadd.f32 %v2169, %v2245
    %v2247 = vstv %s1528
    %v2248 = vmul.f32 %v2247, %v2240
    %v2249 = vadd.f32 %v2172, %v2248
    %2250 = vrot.lane.b32.xlu0 %v1741, 108
    %v2251 = vpop.permute.xlu0 %2250
    %v2252 = vstv %s1375
    %v2253 = vmul.f32 %v2252, %v2251
    %v2254 = vadd.f32 %v2243, %v2253
    %v2255 = vstv %s1456
    %v2256 = vmul.f32 %v2255, %v2251
    %v2257 = vadd.f32 %v2246, %v2256
    %v2258 = vstv %s1537
    %v2259 = vmul.f32 %v2258, %v2251
    %v2260 = vadd.f32 %v2249, %v2259
    %2261 = vrot.lane.b32.xlu0 %v1754, 108
    %v2262 = vpop.permute.xlu0 %2261
    %v2263 = vstv %s1384
    %v2264 = vmul.f32 %v2263, %v2262
    %v2265 = vadd.f32 %v2254, %v2264
    %v2266 = vstv %s1465
    %v2267 = vmul.f32 %v2266, %v2262
    %v2268 = vadd.f32 %v2257, %v2267
    %v2269 = vstv %s1546
    %v2270 = vmul.f32 %v2269, %v2262
    %v2271 = vadd.f32 %v2260, %v2270
    %2272 = vrot.lane.b32.xlu0 %v1353, 108
    %v2273 = vpop.permute.xlu0 %2272
    %v2274 = vstv %s1393
    %v2275 = vmul.f32 %v2274, %v2273
    %v2276 = vadd.f32 %v2199, %v2275
    %v2277 = vstv %s1474
    %v2278 = vmul.f32 %v2277, %v2273
    %v2279 = vadd.f32 %v2202, %v2278
    %v2280 = vstv %s1555
    %v2281 = vmul.f32 %v2280, %v2273
    %v2282 = vadd.f32 %v2205, %v2281
    %2283 = vrot.lane.b32.xlu0 %v1779, 108
    %v2284 = vpop.permute.xlu0 %2283
    %v2285 = vstv %s1402
    %v2286 = vmul.f32 %v2285, %v2284
    %v2287 = vadd.f32 %v2276, %v2286
    %v2288 = vstv %s1483
    %v2289 = vmul.f32 %v2288, %v2284
    %v2290 = vadd.f32 %v2279, %v2289
    %v2291 = vstv %s1564
    %v2292 = vmul.f32 %v2291, %v2284
    %v2293 = vadd.f32 %v2282, %v2292
    %2294 = vrot.lane.b32.xlu0 %v1792, 108
    %v2295 = vpop.permute.xlu0 %2294
    %v2296 = vstv %s1411
    %v2297 = vmul.f32 %v2296, %v2295
    %v2298 = vadd.f32 %v2287, %v2297
    %v2299 = vstv %s1492
    %v2300 = vmul.f32 %v2299, %v2295
    %v2301 = vadd.f32 %v2290, %v2300
    %v2302 = vstv %s1573
    %v2303 = vmul.f32 %v2302, %v2295
    %v2304 = vadd.f32 %v2293, %v2303
    %2305 = vrot.lane.b32.xlu0 %v1359, 108
    %v2306 = vpop.permute.xlu0 %2305
    %v2307 = vstv %s1420
    %v2308 = vmul.f32 %v2307, %v2306
    %v2309 = vadd.f32 %v2232, %v2308
    %v2310 = vstv %s1501
    %v2311 = vmul.f32 %v2310, %v2306
    %v2312 = vadd.f32 %v2235, %v2311
    %v2313 = vstv %s1582
    %v2314 = vmul.f32 %v2313, %v2306
    %v2315 = vadd.f32 %v2238, %v2314
    %2316 = vrot.lane.b32.xlu0 %v1817, 108
    %v2317 = vpop.permute.xlu0 %2316
    %v2318 = vstv %s1429
    %v2319 = vmul.f32 %v2318, %v2317
    %v2320 = vadd.f32 %v2309, %v2319
    %v2321 = vstv %s1510
    %v2322 = vmul.f32 %v2321, %v2317
    %v2323 = vadd.f32 %v2312, %v2322
    %v2324 = vstv %s1591
    %v2325 = vmul.f32 %v2324, %v2317
    %v2326 = vadd.f32 %v2315, %v2325
    %2327 = vrot.lane.b32.xlu0 %v1830, 108
    %v2328 = vpop.permute.xlu0 %2327
    %v2329 = vstv %s1438
    %v2330 = vmul.f32 %v2329, %v2328
    %v2331 = vadd.f32 %v2320, %v2330
    %v2332 = vstv %s1519
    %v2333 = vmul.f32 %v2332, %v2328
    %v2334 = vadd.f32 %v2323, %v2333
    %v2335 = vstv %s1600
    %v2336 = vmul.f32 %v2335, %v2328
    %v2337 = vadd.f32 %v2326, %v2336
    %2338 = vrot.lane.b32.xlu0 %v1347, 107
    %v2339 = vpop.permute.xlu0 %2338
    %v2340 = vstv %s1367
    %v2341 = vmul.f32 %v2340, %v2339
    %v2342 = vadd.f32 %v2265, %v2341
    %v2343 = vstv %s1448
    %v2344 = vmul.f32 %v2343, %v2339
    %v2345 = vadd.f32 %v2268, %v2344
    %v2346 = vstv %s1529
    %v2347 = vmul.f32 %v2346, %v2339
    %v2348 = vadd.f32 %v2271, %v2347
    %2349 = vrot.lane.b32.xlu0 %v1741, 107
    %v2350 = vpop.permute.xlu0 %2349
    %v2351 = vstv %s1376
    %v2352 = vmul.f32 %v2351, %v2350
    %v2353 = vadd.f32 %v2342, %v2352
    %v2354 = vstv %s1457
    %v2355 = vmul.f32 %v2354, %v2350
    %v2356 = vadd.f32 %v2345, %v2355
    %v2357 = vstv %s1538
    %v2358 = vmul.f32 %v2357, %v2350
    %v2359 = vadd.f32 %v2348, %v2358
    %2360 = vrot.lane.b32.xlu0 %v1754, 107
    %v2361 = vpop.permute.xlu0 %2360
    %v2362 = vstv %s1385
    %v2363 = vmul.f32 %v2362, %v2361
    %v2364 = vadd.f32 %v2353, %v2363
    %v2365 = vstv %s1466
    %v2366 = vmul.f32 %v2365, %v2361
    %v2367 = vadd.f32 %v2356, %v2366
    %v2368 = vstv %s1547
    %v2369 = vmul.f32 %v2368, %v2361
    %v2370 = vadd.f32 %v2359, %v2369
    %2371 = vrot.lane.b32.xlu0 %v1353, 107
    %v2372 = vpop.permute.xlu0 %2371
    %v2373 = vstv %s1394
    %v2374 = vmul.f32 %v2373, %v2372
    %v2375 = vadd.f32 %v2298, %v2374
    %v2376 = vstv %s1475
    %v2377 = vmul.f32 %v2376, %v2372
    %v2378 = vadd.f32 %v2301, %v2377
    %v2379 = vstv %s1556
    %v2380 = vmul.f32 %v2379, %v2372
    %v2381 = vadd.f32 %v2304, %v2380
    %2382 = vrot.lane.b32.xlu0 %v1779, 107
    %v2383 = vpop.permute.xlu0 %2382
    %v2384 = vstv %s1403
    %v2385 = vmul.f32 %v2384, %v2383
    %v2386 = vadd.f32 %v2375, %v2385
    %v2387 = vstv %s1484
    %v2388 = vmul.f32 %v2387, %v2383
    %v2389 = vadd.f32 %v2378, %v2388
    %v2390 = vstv %s1565
    %v2391 = vmul.f32 %v2390, %v2383
    %v2392 = vadd.f32 %v2381, %v2391
    %2393 = vrot.lane.b32.xlu0 %v1792, 107
    %v2394 = vpop.permute.xlu0 %2393
    %v2395 = vstv %s1412
    %v2396 = vmul.f32 %v2395, %v2394
    %v2397 = vadd.f32 %v2386, %v2396
    %v2398 = vstv %s1493
    %v2399 = vmul.f32 %v2398, %v2394
    %v2400 = vadd.f32 %v2389, %v2399
    %v2401 = vstv %s1574
    %v2402 = vmul.f32 %v2401, %v2394
    %v2403 = vadd.f32 %v2392, %v2402
    %2404 = vrot.lane.b32.xlu0 %v1359, 107
    %v2405 = vpop.permute.xlu0 %2404
    %v2406 = vstv %s1421
    %v2407 = vmul.f32 %v2406, %v2405
    %v2408 = vadd.f32 %v2331, %v2407
    %v2409 = vstv %s1502
    %v2410 = vmul.f32 %v2409, %v2405
    %v2411 = vadd.f32 %v2334, %v2410
    %v2412 = vstv %s1583
    %v2413 = vmul.f32 %v2412, %v2405
    %v2414 = vadd.f32 %v2337, %v2413
    %2415 = vrot.lane.b32.xlu0 %v1817, 107
    %v2416 = vpop.permute.xlu0 %2415
    %v2417 = vstv %s1430
    %v2418 = vmul.f32 %v2417, %v2416
    %v2419 = vadd.f32 %v2408, %v2418
    %v2420 = vstv %s1511
    %v2421 = vmul.f32 %v2420, %v2416
    %v2422 = vadd.f32 %v2411, %v2421
    %v2423 = vstv %s1592
    %v2424 = vmul.f32 %v2423, %v2416
    %v2425 = vadd.f32 %v2414, %v2424
    %2426 = vrot.lane.b32.xlu0 %v1830, 107
    %v2427 = vpop.permute.xlu0 %2426
    %v2428 = vstv %s1439
    %v2429 = vmul.f32 %v2428, %v2427
    %v2430 = vadd.f32 %v2419, %v2429
    %v2431 = vstv %s1520
    %v2432 = vmul.f32 %v2431, %v2427
    %v2433 = vadd.f32 %v2422, %v2432
    %v2434 = vstv %s1601
    %v2435 = vmul.f32 %v2434, %v2427
    %v2436 = vadd.f32 %v2425, %v2435
    %2437 = vrot.lane.b32.xlu0 %v1347, 106
    %v2438 = vpop.permute.xlu0 %2437
    %v2439 = vstv %s1368
    %v2440 = vmul.f32 %v2439, %v2438
    %v2441 = vadd.f32 %v2364, %v2440
    %v2442 = vstv %s1449
    %v2443 = vmul.f32 %v2442, %v2438
    %v2444 = vadd.f32 %v2367, %v2443
    %v2445 = vstv %s1530
    %v2446 = vmul.f32 %v2445, %v2438
    %v2447 = vadd.f32 %v2370, %v2446
    %2448 = vrot.lane.b32.xlu0 %v1741, 106
    %v2449 = vpop.permute.xlu0 %2448
    %v2450 = vstv %s1377
    %v2451 = vmul.f32 %v2450, %v2449
    %v2452 = vadd.f32 %v2441, %v2451
    %v2453 = vstv %s1458
    %v2454 = vmul.f32 %v2453, %v2449
    %v2455 = vadd.f32 %v2444, %v2454
    %v2456 = vstv %s1539
    %v2457 = vmul.f32 %v2456, %v2449
    %v2458 = vadd.f32 %v2447, %v2457
    %2459 = vrot.lane.b32.xlu0 %v1754, 106
    %v2460 = vpop.permute.xlu0 %2459
    %v2461 = vstv %s1386
    %v2462 = vmul.f32 %v2461, %v2460
    %v2463 = vadd.f32 %v2452, %v2462
    %v2464 = vstv %s1467
    %v2465 = vmul.f32 %v2464, %v2460
    %v2466 = vadd.f32 %v2455, %v2465
    %v2467 = vstv %s1548
    %v2468 = vmul.f32 %v2467, %v2460
    %v2469 = vadd.f32 %v2458, %v2468
    %2470 = vrot.lane.b32.xlu0 %v1353, 106
    %v2471 = vpop.permute.xlu0 %2470
    %v2472 = vstv %s1395
    %v2473 = vmul.f32 %v2472, %v2471
    %v2474 = vadd.f32 %v2397, %v2473
    %v2475 = vstv %s1476
    %v2476 = vmul.f32 %v2475, %v2471
    %v2477 = vadd.f32 %v2400, %v2476
    %v2478 = vstv %s1557
    %v2479 = vmul.f32 %v2478, %v2471
    %v2480 = vadd.f32 %v2403, %v2479
    %2481 = vrot.lane.b32.xlu0 %v1779, 106
    %v2482 = vpop.permute.xlu0 %2481
    %v2483 = vstv %s1404
    %v2484 = vmul.f32 %v2483, %v2482
    %v2485 = vadd.f32 %v2474, %v2484
    %v2486 = vstv %s1485
    %v2487 = vmul.f32 %v2486, %v2482
    %v2488 = vadd.f32 %v2477, %v2487
    %v2489 = vstv %s1566
    %v2490 = vmul.f32 %v2489, %v2482
    %v2491 = vadd.f32 %v2480, %v2490
    %2492 = vrot.lane.b32.xlu0 %v1792, 106
    %v2493 = vpop.permute.xlu0 %2492
    %v2494 = vstv %s1413
    %v2495 = vmul.f32 %v2494, %v2493
    %v2496 = vadd.f32 %v2485, %v2495
    %v2497 = vstv %s1494
    %v2498 = vmul.f32 %v2497, %v2493
    %v2499 = vadd.f32 %v2488, %v2498
    %v2500 = vstv %s1575
    %v2501 = vmul.f32 %v2500, %v2493
    %v2502 = vadd.f32 %v2491, %v2501
    %2503 = vrot.lane.b32.xlu0 %v1359, 106
    %v2504 = vpop.permute.xlu0 %2503
    %v2505 = vstv %s1422
    %v2506 = vmul.f32 %v2505, %v2504
    %v2507 = vadd.f32 %v2430, %v2506
    %v2508 = vstv %s1503
    %v2509 = vmul.f32 %v2508, %v2504
    %v2510 = vadd.f32 %v2433, %v2509
    %v2511 = vstv %s1584
    %v2512 = vmul.f32 %v2511, %v2504
    %v2513 = vadd.f32 %v2436, %v2512
    %2514 = vrot.lane.b32.xlu0 %v1817, 106
    %v2515 = vpop.permute.xlu0 %2514
    %v2516 = vstv %s1431
    %v2517 = vmul.f32 %v2516, %v2515
    %v2518 = vadd.f32 %v2507, %v2517
    %v2519 = vstv %s1512
    %v2520 = vmul.f32 %v2519, %v2515
    %v2521 = vadd.f32 %v2510, %v2520
    %v2522 = vstv %s1593
    %v2523 = vmul.f32 %v2522, %v2515
    %v2524 = vadd.f32 %v2513, %v2523
    %2525 = vrot.lane.b32.xlu0 %v1830, 106
    %v2526 = vpop.permute.xlu0 %2525
    %v2527 = vstv %s1440
    %v2528 = vmul.f32 %v2527, %v2526
    %v2529 = vadd.f32 %v2518, %v2528
    %v2530 = vstv %s1521
    %v2531 = vmul.f32 %v2530, %v2526
    %v2532 = vadd.f32 %v2521, %v2531
    %v2533 = vstv %s1602
    %v2534 = vmul.f32 %v2533, %v2526
    %v2535 = vadd.f32 %v2524, %v2534
    %v2536 = vadd.f32 %v2463, %v2496
    %v2537 = vadd.f32 %v2536, %v2529
    %s2538 = sld [smem:[#allocation8]]
    %v2539 = vstv %s2538
    %v2540 = vadd.f32 %v2537, %v2539
    %v2541 = vadd.f32 %v2466, %v2499
    %v2542 = vadd.f32 %v2541, %v2532
    %s2543 = sld [smem:[#allocation8 + $0x1]]
    %v2544 = vstv %s2543
    %v2545 = vadd.f32 %v2542, %v2544
    %v2546 = vadd.f32 %v2469, %v2502
    %v2547 = vadd.f32 %v2546, %v2535
    %s2548 = sld [smem:[#allocation8 + $0x2]]
    %v2549 = vstv %s2548
    %v2550 = vadd.f32 %v2547, %v2549
    %2551 = vst [vmem:[#allocation10] sm:$0x3f] %v2540
    %s2552 = scalar_lea.vmem [#allocation10], 8
    %2553 = vst [vmem:[%s2552] sm:$0x3f] %v2545
    %s2554 = scalar_lea.vmem [#allocation10], 16
    %2555 = vst [vmem:[%s2554] sm:$0x3f] %v2550
    // Predicated region
    $region38: #{tpu_custom_call.1} parent=1 // pred_check
      _
    $region39: #{tpu_custom_call.1} parent=1 // pred_check_branch
      %2557 = sbr.rel (0) target = $region41
    $region40: #{tpu_custom_call.1} parent=1 // pred_region
      %s2559 = ssub.s32 384, 384
      %2560 = vsyncadd [#allocation3], %s2559
      %s2561 = sshll.u32 [#allocation10], 4
      %s2562 = int_to_ptr.vmem [resolvable:$true] %s2561
      %2567 = dma.vmem_to_hbm [thread:$0]  %s2562, 384, %s5, [#allocation3], 128, 128, 8
    $region41: #{tpu_custom_call.1} parent=1 // pred_fallthru
      _
    // Predicated region
    $region42: #{tpu_custom_call.1} parent=1 // pred_check
      _
    $region43: #{tpu_custom_call.1} parent=1 // pred_check_branch
      %2569 = sbr.rel (0) target = $region45
    $region44: #{tpu_custom_call.1} parent=1 // pred_region
      %2570 = dma.done [#allocation3], 384
    $region45: #{tpu_custom_call.1} parent=1 // pred_fallthru
      _
    %2571 = vsyncpa [#allocation3], 1
    %2572 = vsyncpa [#allocation4], 1
    %2573 = vsyncpa [#allocation6], 1
    %2574 = vsyncpa [#allocation9], 1

</llo_original>
